<compile_context>
chip_gen: v7x
topology: tpu7x:2x2x1
jax: 0.10.0
libtpu: 0.0.40
codegen_flags: <defaults>
</compile_context>

<pallas_src>
import functools

import jax
import jax.numpy as jnp
from jax.experimental import pallas as pl
from jax.experimental.pallas import tpu as pltpu

HIDDEN_SIZE = 15
INPUT_SIZE = 1
NUM_LAYERS = 3
SIZE_OUT = INPUT_SIZE

# Max timesteps resident / fully unrolled per kernel invocation.  Keeps VMEM
# bounded on v7x (64 MiB) and compile time reasonable while amortizing the
# ~0.35 us/grid-step overhead over many steps.
_TIME_CHUNK = 64


def _pick_chunk(seq_len, batch, max_chunk):
    """Largest chunk length <= max_chunk that divides seq_len and keeps the
    x/out BlockSpec blocks sublane-aligned ((chunk*batch) % 8 == 0)."""
    if seq_len <= max_chunk:
        return seq_len
    for c in range(max_chunk, 0, -1):
        if seq_len % c == 0 and (c * batch) % 8 == 0:
            return c
    return seq_len  # no aligned divisor: fall back to a single resident chunk


def _rnn_kernel(x_ref, h0_ref, wih0_t_ref, whh0_t_ref, wih_t_ref, whh_t_ref,
                bias_ref, linw_t_ref, linb_ref,          # inputs
                out_ref, hout_ref,                        # outputs
                h_carry, y_scr,                           # scratch
                *, num_layers, input_size, chunk_len, batch):
    f32 = jnp.float32
    c = pl.program_id(0)

    # ---- seed the carried hidden state from h0 on the first chunk ----------
    @pl.when(c == 0)
    def _():
        h_carry[...] = h0_ref[...]

    # ---- hoist ALL weight / bias loads out of the time loop (vreg-resident) -
    wih0_t = wih0_t_ref[...]                              # (input_size, H)
    whh0_t = whh0_t_ref[...]                              # (H, H)
    wih_t = [wih_t_ref[l] for l in range(num_layers - 1)]  # each (H, H)
    whh_t = [whh_t_ref[l] for l in range(num_layers - 1)]  # each (H, H)
    bias = [bias_ref[l] for l in range(num_layers)]         # each (1, H)
    linw_t = linw_t_ref[...]                                 # (H, size_out)
    linb = linb_ref[...]                                     # (1, size_out)

    # ---- layer-0 input projection for the whole chunk (value, no scratch) ---
    if input_size == 1:
        # (chunk*B, 1) * (1, H) + (1, H) -> (chunk*B, H)
        xproj = x_ref[...] * wih0_t + bias[0]
    else:
        xproj = jnp.dot(x_ref[...], wih0_t,
                        preferred_element_type=f32) + bias[0]

    hs = [h_carry[l] for l in range(num_layers)]            # each (B, H)

    # ---- time recurrence: fully unrolled, static indices --------------------
    for t in range(chunk_len):
        xp = xproj[t * batch:(t + 1) * batch, :]
        # layer 0: x-projection precomputed; only the recurrent dot remains on
        # the chain.
        hs[0] = jnp.tanh(xp + jnp.dot(hs[0], whh0_t,
                                      preferred_element_type=f32))
        layer_in = hs[0]
        # layers 1..L-1: two SEPARATE dots (no concat -> no XLU lane shift on
        # the serial chain; dot_hh depends only on t-1 state so the scheduler
        # can issue it a layer early; on v7x dot_ih + dot_hh accumulate in the
        # MRB and pop a single result).
        for l in range(1, num_layers):
            pre = (jnp.dot(layer_in, wih_t[l - 1], preferred_element_type=f32)
                   + jnp.dot(hs[l], whh_t[l - 1], preferred_element_type=f32)
                   + bias[l])
            hs[l] = jnp.tanh(pre)
            layer_in = hs[l]
        # record the top-layer state; the output Linear is deferred (off-chain)
        y_scr[t * batch:(t + 1) * batch, :] = layer_in

    # ---- carry the final hidden state of this chunk to the next one ---------
    for l in range(num_layers):
        h_carry[l] = hs[l]

    @pl.when(c == pl.num_programs(0) - 1)
    def _():
        hout_ref[...] = h_carry[...]

    # ---- output Linear for the whole chunk: one dense MXU dot, one store ----
    # TODO(synk): for very long sequences, a lane-dense (1, seq*batch) output
    # layout would avoid masked vst of the last-dim=1 slab; negligible here.
    out_ref[...] = (jnp.dot(y_scr[...], linw_t, preferred_element_type=f32)
                    + linb).astype(out_ref.dtype)


def prepare_params(params):
    """One-time weight packing/transposition (hoisted out of the hot path)."""
    num_layers, _, hidden = params["whh"].shape
    wih0_t = params["wih0"].T                                # (input_size, H)
    whh0_t = params["whh"][0].T                              # (H, H)
    if num_layers > 1:
        wih_t = jnp.transpose(params["wih_rest"], (0, 2, 1))   # (L-1, H, H)
        whh_t = jnp.transpose(params["whh"][1:], (0, 2, 1))    # (L-1, H, H)
    else:
        wih_t = jnp.zeros((1, hidden, hidden), jnp.float32)    # unused
        whh_t = jnp.zeros((1, hidden, hidden), jnp.float32)    # unused
    bias = (params["bih"] + params["bhh"])[:, None, :]        # (L, 1, H)
    linw_t = params["lin_w"].T                                 # (H, size_out)
    linb = params["lin_b"].reshape(1, -1)                      # (1, size_out)
    return dict(wih0_t=wih0_t, whh0_t=whh0_t, wih_t=wih_t, whh_t=whh_t,
                bias=bias, linw_t=linw_t, linb=linb)


def _full_spec(a):
    n = a.ndim
    return pl.BlockSpec(a.shape, lambda c: (0,) * n)


@jax.jit
def rnn_forward(x, h0, prepped):
    """x: (seq, batch, input_size) f32; h0: (num_layers, batch, hidden) f32."""
    seq_len, batch, input_size = x.shape
    num_layers, _, hidden = h0.shape
    size_out = prepped["linw_t"].shape[1]

    chunk = _pick_chunk(seq_len, batch, _TIME_CHUNK)
    num_chunks = seq_len // chunk

    # Flatten the time/batch axes so slabs don't pad to one (8,128) tile per
    # timestep; reshapes here are free (row-major contiguous).
    x_flat = x.reshape(seq_len * batch, input_size)

    kernel = functools.partial(_rnn_kernel,
                               num_layers=num_layers,
                               input_size=input_size,
                               chunk_len=chunk,
                               batch=batch)

    out_flat, h_final = pl.pallas_call(
        kernel,
        grid=(num_chunks,),
        in_specs=[
            pl.BlockSpec((chunk * batch, input_size), lambda c: (c, 0)),  # x
            _full_spec(h0),
            _full_spec(prepped["wih0_t"]),
            _full_spec(prepped["whh0_t"]),
            _full_spec(prepped["wih_t"]),
            _full_spec(prepped["whh_t"]),
            _full_spec(prepped["bias"]),
            _full_spec(prepped["linw_t"]),
            _full_spec(prepped["linb"]),
        ],
        out_specs=(
            pl.BlockSpec((chunk * batch, size_out), lambda c: (c, 0)),    # out
            pl.BlockSpec((num_layers, batch, hidden), lambda c: (0, 0, 0)),
        ),
        out_shape=(
            jax.ShapeDtypeStruct((seq_len * batch, size_out), jnp.float32),
            jax.ShapeDtypeStruct((num_layers, batch, hidden), jnp.float32),
        ),
        scratch_shapes=[
            pltpu.VMEM((num_layers, batch, hidden), jnp.float32),  # h carry
            pltpu.VMEM((chunk * batch, hidden), jnp.float32),      # top-layer y
        ],
        compiler_params=pltpu.CompilerParams(
            dimension_semantics=("arbitrary",)),
    )(x_flat, h0, prepped["wih0_t"], prepped["whh0_t"], prepped["wih_t"],
      prepped["whh_t"], prepped["bias"], prepped["linw_t"], prepped["linb"])

    return out_flat.reshape(seq_len, batch, size_out), h_final


def rnn_reference(x, h0, params):
    """Pure-JAX reference matching torch.nn.RNN (tanh) + Linear semantics."""
    seq_len = x.shape[0]
    num_layers = h0.shape[0]
    h = [h0[l] for l in range(num_layers)]
    outs = []
    for t in range(seq_len):
        layer_in = x[t]
        for l in range(num_layers):
            w_ih = params["wih0"] if l == 0 else params["wih_rest"][l - 1]
            pre = (layer_in @ w_ih.T + params["bih"][l]
                   + h[l] @ params["whh"][l].T + params["bhh"][l])
            h[l] = jnp.tanh(pre)
            layer_in = h[l]
        outs.append(layer_in)
    out = jnp.stack(outs, axis=0) @ params["lin_w"].T + params["lin_b"]
    return out, jnp.stack(h, axis=0)


def init_params(key, input_size, hidden, num_layers, size_out):
    k = 1.0 / jnp.sqrt(hidden)
    keys = jax.random.split(key, 7)
    u = lambda kk, shape: jax.random.uniform(kk, shape, jnp.float32, -k, k)
    return {
        "wih0": u(keys[0], (hidden, input_size)),
        "wih_rest": u(keys[1], (num_layers - 1, hidden, hidden)),
        "whh": u(keys[2], (num_layers, hidden, hidden)),
        "bih": u(keys[3], (num_layers, hidden)),
        "bhh": u(keys[4], (num_layers, hidden)),
        "lin_w": u(keys[5], (size_out, hidden)),
        "lin_b": u(keys[6], (size_out,)),
    }


if __name__ == "__main__":
    key = jax.random.PRNGKey(0)
    kx, kh, kp, kx2, kh2 = jax.random.split(key, 5)

    params = init_params(kp, INPUT_SIZE, HIDDEN_SIZE, NUM_LAYERS, SIZE_OUT)
    prepped = prepare_params(params)

    # --- small primary test (seq=8, batch=2): single chunk -------------------
    seq_len, batch = 8, 2
    x = jax.random.normal(kx, (seq_len, batch, INPUT_SIZE), jnp.float32)
    h0 = jax.random.normal(kh, (NUM_LAYERS, batch, HIDDEN_SIZE), jnp.float32)

    out, h_final = rnn_forward(x, h0, prepped)
    jax.block_until_ready((out, h_final))

    out_ref, h_ref = rnn_reference(x, h0, params)
    assert out.shape == (seq_len, batch, SIZE_OUT)
    assert h_final.shape == (NUM_LAYERS, batch, HIDDEN_SIZE)
    assert jnp.allclose(out, out_ref, atol=1e-5, rtol=1e-5)
    assert jnp.allclose(h_final, h_ref, atol=1e-5, rtol=1e-5)

    # --- longer test (seq=80): exercises the multi-chunk hidden-state carry --
    seq_len2 = 80
    x2 = jax.random.normal(kx2, (seq_len2, batch, INPUT_SIZE), jnp.float32)
    h02 = jax.random.normal(kh2, (NUM_LAYERS, batch, HIDDEN_SIZE), jnp.float32)

    out2, h_final2 = rnn_forward(x2, h02, prepped)
    jax.block_until_ready((out2, h_final2))

    out_ref2, h_ref2 = rnn_reference(x2, h02, params)
    assert jnp.allclose(out2, out_ref2, atol=1e-5, rtol=1e-5)
    assert jnp.allclose(h_final2, h_ref2, atol=1e-5, rtol=1e-5)

    print("KERNEL_OK")
</pallas_src>

<mosaic_0001>
module attributes {stable_mosaic.version = 11 : i64} {
  func.func @_rnn_kernel(%arg0: i32, %arg1: memref<16x1xf32, #tpu.memory_space<vmem>>, %arg2: memref<3x2x15xf32, #tpu.memory_space<vmem>>, %arg3: memref<1x15xf32, #tpu.memory_space<vmem>>, %arg4: memref<15x15xf32, #tpu.memory_space<vmem>>, %arg5: memref<2x15x15xf32, #tpu.memory_space<vmem>>, %arg6: memref<2x15x15xf32, #tpu.memory_space<vmem>>, %arg7: memref<3x1x15xf32, #tpu.memory_space<vmem>>, %arg8: memref<15x1xf32, #tpu.memory_space<vmem>>, %arg9: memref<1x1xf32, #tpu.memory_space<vmem>>, %arg10: memref<16x1xf32, #tpu.memory_space<vmem>>, %arg11: memref<3x2x15xf32, #tpu.memory_space<vmem>>, %arg12: memref<3x2x15xf32, #tpu.memory_space<vmem>>, %arg13: memref<16x15xf32, #tpu.memory_space<vmem>>) attributes {dimension_semantics = [#tpu.dimension_semantics<arbitrary>], iteration_bounds = array<i64: 1>, scalar_prefetch = 0 : i64, scratch_operands = 2 : i64, tpu.core_type = #tpu.core_type<tc>, window_params = [{transform_indices = @transform_0, window_bounds = array<i64: 16, 1>}, {pipeline_mode = #tpu.pipeline_mode<synchronous>, transform_indices = @transform_1, window_bounds = array<i64: 3, 2, 15>}, {pipeline_mode = #tpu.pipeline_mode<synchronous>, transform_indices = @transform_2, window_bounds = array<i64: 1, 15>}, {pipeline_mode = #tpu.pipeline_mode<synchronous>, transform_indices = @transform_3, window_bounds = array<i64: 15, 15>}, {pipeline_mode = #tpu.pipeline_mode<synchronous>, transform_indices = @transform_4, window_bounds = array<i64: 2, 15, 15>}, {pipeline_mode = #tpu.pipeline_mode<synchronous>, transform_indices = @transform_5, window_bounds = array<i64: 2, 15, 15>}, {pipeline_mode = #tpu.pipeline_mode<synchronous>, transform_indices = @transform_6, window_bounds = array<i64: 3, 1, 15>}, {pipeline_mode = #tpu.pipeline_mode<synchronous>, transform_indices = @transform_7, window_bounds = array<i64: 15, 1>}, {pipeline_mode = #tpu.pipeline_mode<synchronous>, transform_indices = @transform_8, window_bounds = array<i64: 1, 1>}, {transform_indices = @transform_9, window_bounds = array<i64: 16, 1>}, {pipeline_mode = #tpu.pipeline_mode<synchronous>, transform_indices = @transform_10, window_bounds = array<i64: 3, 2, 15>}]} {
    %c0_i32 = arith.constant 0 : i32
    %0 = arith.cmpi eq, %arg0, %c0_i32 : i32
    %1 = arith.extui %0 : i1 to i32
    %c0_i32_0 = arith.constant 0 : i32
    %2 = arith.cmpi ne, %1, %c0_i32_0 : i32
    scf.if %2 {
      %c0_103 = arith.constant 0 : index
      %c0_104 = arith.constant 0 : index
      %c0_105 = arith.constant 0 : index
      %186 = vector.load %arg2[%c0_103, %c0_104, %c0_105] : memref<3x2x15xf32, #tpu.memory_space<vmem>>, vector<3x2x15xf32>
      %c0_106 = arith.constant 0 : index
      %c0_107 = arith.constant 0 : index
      %c0_108 = arith.constant 0 : index
      %187 = vector.load %arg12[%c0_106, %c0_107, %c0_108] : memref<3x2x15xf32, #tpu.memory_space<vmem>>, vector<3x2x15xf32>
      tpu.vector_store %arg12[%c0_106, %c0_107, %c0_108], %186 {strides = array<i32>} : memref<3x2x15xf32, #tpu.memory_space<vmem>>, vector<3x2x15xf32>,
    } else {
    }
    %c0 = arith.constant 0 : index
    %c0_1 = arith.constant 0 : index
    %3 = vector.load %arg3[%c0, %c0_1] : memref<1x15xf32, #tpu.memory_space<vmem>>, vector<1x15xf32>
    %c0_2 = arith.constant 0 : index
    %c0_3 = arith.constant 0 : index
    %4 = vector.load %arg4[%c0_2, %c0_3] : memref<15x15xf32, #tpu.memory_space<vmem>>, vector<15x15xf32>
    %c0_4 = arith.constant 0 : index
    %c0_5 = arith.constant 0 : index
    %c0_6 = arith.constant 0 : index
    %5 = vector.load %arg5[%c0_4, %c0_5, %c0_6] : memref<2x15x15xf32, #tpu.memory_space<vmem>>, vector<1x15x15xf32>
    %6 = vector.shape_cast %5 : vector<1x15x15xf32> to vector<15x15xf32>
    %c1 = arith.constant 1 : index
    %c0_7 = arith.constant 0 : index
    %c0_8 = arith.constant 0 : index
    %7 = vector.load %arg5[%c1, %c0_7, %c0_8] : memref<2x15x15xf32, #tpu.memory_space<vmem>>, vector<1x15x15xf32>
    %8 = vector.shape_cast %7 : vector<1x15x15xf32> to vector<15x15xf32>
    %c0_9 = arith.constant 0 : index
    %c0_10 = arith.constant 0 : index
    %c0_11 = arith.constant 0 : index
    %9 = vector.load %arg6[%c0_9, %c0_10, %c0_11] : memref<2x15x15xf32, #tpu.memory_space<vmem>>, vector<1x15x15xf32>
    %10 = vector.shape_cast %9 : vector<1x15x15xf32> to vector<15x15xf32>
    %c1_12 = arith.constant 1 : index
    %c0_13 = arith.constant 0 : index
    %c0_14 = arith.constant 0 : index
    %11 = vector.load %arg6[%c1_12, %c0_13, %c0_14] : memref<2x15x15xf32, #tpu.memory_space<vmem>>, vector<1x15x15xf32>
    %12 = vector.shape_cast %11 : vector<1x15x15xf32> to vector<15x15xf32>
    %c0_15 = arith.constant 0 : index
    %c0_16 = arith.constant 0 : index
    %c0_17 = arith.constant 0 : index
    %13 = vector.load %arg7[%c0_15, %c0_16, %c0_17] : memref<3x1x15xf32, #tpu.memory_space<vmem>>, vector<1x1x15xf32>
    %14 = vector.shape_cast %13 : vector<1x1x15xf32> to vector<1x15xf32>
    %c1_18 = arith.constant 1 : index
    %c0_19 = arith.constant 0 : index
    %c0_20 = arith.constant 0 : index
    %15 = vector.load %arg7[%c1_18, %c0_19, %c0_20] : memref<3x1x15xf32, #tpu.memory_space<vmem>>, vector<1x1x15xf32>
    %16 = vector.shape_cast %15 : vector<1x1x15xf32> to vector<1x15xf32>
    %c2 = arith.constant 2 : index
    %c0_21 = arith.constant 0 : index
    %c0_22 = arith.constant 0 : index
    %17 = vector.load %arg7[%c2, %c0_21, %c0_22] : memref<3x1x15xf32, #tpu.memory_space<vmem>>, vector<1x1x15xf32>
    %18 = vector.shape_cast %17 : vector<1x1x15xf32> to vector<1x15xf32>
    %c0_23 = arith.constant 0 : index
    %c0_24 = arith.constant 0 : index
    %19 = vector.load %arg8[%c0_23, %c0_24] : memref<15x1xf32, #tpu.memory_space<vmem>>, vector<15x1xf32>
    %c0_25 = arith.constant 0 : index
    %c0_26 = arith.constant 0 : index
    %20 = vector.load %arg9[%c0_25, %c0_26] : memref<1x1xf32, #tpu.memory_space<vmem>>, vector<1x1xf32>
    %c0_27 = arith.constant 0 : index
    %c0_28 = arith.constant 0 : index
    %21 = vector.load %arg1[%c0_27, %c0_28] : memref<16x1xf32, #tpu.memory_space<vmem>>, vector<16x1xf32>
    %22 = vector.broadcast %21 : vector<16x1xf32> to vector<16x15xf32>
    %23 = vector.broadcast %3 : vector<1x15xf32> to vector<16x15xf32>
    %24 = arith.mulf %22, %23 : vector<16x15xf32>
    %25 = vector.broadcast %14 : vector<1x15xf32> to vector<16x15xf32>
    %26 = arith.addf %24, %25 : vector<16x15xf32>
    %c0_29 = arith.constant 0 : index
    %c0_30 = arith.constant 0 : index
    %c0_31 = arith.constant 0 : index
    %27 = vector.load %arg12[%c0_29, %c0_30, %c0_31] : memref<3x2x15xf32, #tpu.memory_space<vmem>>, vector<1x2x15xf32>
    %28 = vector.shape_cast %27 : vector<1x2x15xf32> to vector<2x15xf32>
    %c1_32 = arith.constant 1 : index
    %c0_33 = arith.constant 0 : index
    %c0_34 = arith.constant 0 : index
    %29 = vector.load %arg12[%c1_32, %c0_33, %c0_34] : memref<3x2x15xf32, #tpu.memory_space<vmem>>, vector<1x2x15xf32>
    %30 = vector.shape_cast %29 : vector<1x2x15xf32> to vector<2x15xf32>
    %c2_35 = arith.constant 2 : index
    %c0_36 = arith.constant 0 : index
    %c0_37 = arith.constant 0 : index
    %31 = vector.load %arg12[%c2_35, %c0_36, %c0_37] : memref<3x2x15xf32, #tpu.memory_space<vmem>>, vector<1x2x15xf32>
    %32 = vector.shape_cast %31 : vector<1x2x15xf32> to vector<2x15xf32>
    %33 = vector.extract_strided_slice %26 {offsets = [0, 0], sizes = [2, 15], strides = [1, 1]} : vector<16x15xf32> to vector<2x15xf32>
    %cst = arith.constant dense<0.000000e+00> : vector<2x15xf32>
    %34 = tpu.matmul %28, %4, %cst {dimension_numbers = #tpu.dot_dimension_numbers<[1], [0], [0], [1], [0, 0, 1, 1], [], []>} : vector<2x15xf32>, vector<15x15xf32>, vector<2x15xf32> -> vector<2x15xf32>
    %35 = arith.addf %33, %34 : vector<2x15xf32>
    %36 = math.tanh %35 : vector<2x15xf32>
    %cst_38 = arith.constant dense<0.000000e+00> : vector<2x15xf32>
    %37 = tpu.matmul %36, %6, %cst_38 {dimension_numbers = #tpu.dot_dimension_numbers<[1], [0], [0], [1], [0, 0, 1, 1], [], []>} : vector<2x15xf32>, vector<15x15xf32>, vector<2x15xf32> -> vector<2x15xf32>
    %cst_39 = arith.constant dense<0.000000e+00> : vector<2x15xf32>
    %38 = tpu.matmul %30, %10, %cst_39 {dimension_numbers = #tpu.dot_dimension_numbers<[1], [0], [0], [1], [0, 0, 1, 1], [], []>} : vector<2x15xf32>, vector<15x15xf32>, vector<2x15xf32> -> vector<2x15xf32>
    %39 = arith.addf %37, %38 : vector<2x15xf32>
    %40 = vector.broadcast %16 : vector<1x15xf32> to vector<2x15xf32>
    %41 = arith.addf %39, %40 : vector<2x15xf32>
    %42 = math.tanh %41 : vector<2x15xf32>
    %cst_40 = arith.constant dense<0.000000e+00> : vector<2x15xf32>
    %43 = tpu.matmul %42, %8, %cst_40 {dimension_numbers = #tpu.dot_dimension_numbers<[1], [0], [0], [1], [0, 0, 1, 1], [], []>} : vector<2x15xf32>, vector<15x15xf32>, vector<2x15xf32> -> vector<2x15xf32>
    %cst_41 = arith.constant dense<0.000000e+00> : vector<2x15xf32>
    %44 = tpu.matmul %32, %12, %cst_41 {dimension_numbers = #tpu.dot_dimension_numbers<[1], [0], [0], [1], [0, 0, 1, 1], [], []>} : vector<2x15xf32>, vector<15x15xf32>, vector<2x15xf32> -> vector<2x15xf32>
    %45 = arith.addf %43, %44 : vector<2x15xf32>
    %46 = vector.broadcast %18 : vector<1x15xf32> to vector<2x15xf32>
    %47 = arith.addf %45, %46 : vector<2x15xf32>
    %48 = math.tanh %47 : vector<2x15xf32>
    %c0_42 = arith.constant 0 : index
    %c0_43 = arith.constant 0 : index
    %49 = vector.load %arg13[%c0_42, %c0_43] : memref<16x15xf32, #tpu.memory_space<vmem>>, vector<2x15xf32>
    tpu.vector_store %arg13[%c0_42, %c0_43], %48 {strides = array<i32>} : memref<16x15xf32, #tpu.memory_space<vmem>>, vector<2x15xf32>,
    %50 = vector.extract_strided_slice %26 {offsets = [2, 0], sizes = [2, 15], strides = [1, 1]} : vector<16x15xf32> to vector<2x15xf32>
    %cst_44 = arith.constant dense<0.000000e+00> : vector<2x15xf32>
    %51 = tpu.matmul %36, %4, %cst_44 {dimension_numbers = #tpu.dot_dimension_numbers<[1], [0], [0], [1], [0, 0, 1, 1], [], []>} : vector<2x15xf32>, vector<15x15xf32>, vector<2x15xf32> -> vector<2x15xf32>
    %52 = arith.addf %50, %51 : vector<2x15xf32>
    %53 = math.tanh %52 : vector<2x15xf32>
    %cst_45 = arith.constant dense<0.000000e+00> : vector<2x15xf32>
    %54 = tpu.matmul %53, %6, %cst_45 {dimension_numbers = #tpu.dot_dimension_numbers<[1], [0], [0], [1], [0, 0, 1, 1], [], []>} : vector<2x15xf32>, vector<15x15xf32>, vector<2x15xf32> -> vector<2x15xf32>
    %cst_46 = arith.constant dense<0.000000e+00> : vector<2x15xf32>
    %55 = tpu.matmul %42, %10, %cst_46 {dimension_numbers = #tpu.dot_dimension_numbers<[1], [0], [0], [1], [0, 0, 1, 1], [], []>} : vector<2x15xf32>, vector<15x15xf32>, vector<2x15xf32> -> vector<2x15xf32>
    %56 = arith.addf %54, %55 : vector<2x15xf32>
    %57 = vector.broadcast %16 : vector<1x15xf32> to vector<2x15xf32>
    %58 = arith.addf %56, %57 : vector<2x15xf32>
    %59 = math.tanh %58 : vector<2x15xf32>
    %cst_47 = arith.constant dense<0.000000e+00> : vector<2x15xf32>
    %60 = tpu.matmul %59, %8, %cst_47 {dimension_numbers = #tpu.dot_dimension_numbers<[1], [0], [0], [1], [0, 0, 1, 1], [], []>} : vector<2x15xf32>, vector<15x15xf32>, vector<2x15xf32> -> vector<2x15xf32>
    %cst_48 = arith.constant dense<0.000000e+00> : vector<2x15xf32>
    %61 = tpu.matmul %48, %12, %cst_48 {dimension_numbers = #tpu.dot_dimension_numbers<[1], [0], [0], [1], [0, 0, 1, 1], [], []>} : vector<2x15xf32>, vector<15x15xf32>, vector<2x15xf32> -> vector<2x15xf32>
    %62 = arith.addf %60, %61 : vector<2x15xf32>
    %63 = vector.broadcast %18 : vector<1x15xf32> to vector<2x15xf32>
    %64 = arith.addf %62, %63 : vector<2x15xf32>
    %65 = math.tanh %64 : vector<2x15xf32>
    %c2_49 = arith.constant 2 : index
    %c0_50 = arith.constant 0 : index
    %66 = vector.load %arg13[%c2_49, %c0_50] : memref<16x15xf32, #tpu.memory_space<vmem>>, vector<2x15xf32>
    tpu.vector_store %arg13[%c2_49, %c0_50], %65 {strides = array<i32>} : memref<16x15xf32, #tpu.memory_space<vmem>>, vector<2x15xf32>,
    %67 = vector.extract_strided_slice %26 {offsets = [4, 0], sizes = [2, 15], strides = [1, 1]} : vector<16x15xf32> to vector<2x15xf32>
    %cst_51 = arith.constant dense<0.000000e+00> : vector<2x15xf32>
    %68 = tpu.matmul %53, %4, %cst_51 {dimension_numbers = #tpu.dot_dimension_numbers<[1], [0], [0], [1], [0, 0, 1, 1], [], []>} : vector<2x15xf32>, vector<15x15xf32>, vector<2x15xf32> -> vector<2x15xf32>
    %69 = arith.addf %67, %68 : vector<2x15xf32>
    %70 = math.tanh %69 : vector<2x15xf32>
    %cst_52 = arith.constant dense<0.000000e+00> : vector<2x15xf32>
    %71 = tpu.matmul %70, %6, %cst_52 {dimension_numbers = #tpu.dot_dimension_numbers<[1], [0], [0], [1], [0, 0, 1, 1], [], []>} : vector<2x15xf32>, vector<15x15xf32>, vector<2x15xf32> -> vector<2x15xf32>
    %cst_53 = arith.constant dense<0.000000e+00> : vector<2x15xf32>
    %72 = tpu.matmul %59, %10, %cst_53 {dimension_numbers = #tpu.dot_dimension_numbers<[1], [0], [0], [1], [0, 0, 1, 1], [], []>} : vector<2x15xf32>, vector<15x15xf32>, vector<2x15xf32> -> vector<2x15xf32>
    %73 = arith.addf %71, %72 : vector<2x15xf32>
    %74 = vector.broadcast %16 : vector<1x15xf32> to vector<2x15xf32>
    %75 = arith.addf %73, %74 : vector<2x15xf32>
    %76 = math.tanh %75 : vector<2x15xf32>
    %cst_54 = arith.constant dense<0.000000e+00> : vector<2x15xf32>
    %77 = tpu.matmul %76, %8, %cst_54 {dimension_numbers = #tpu.dot_dimension_numbers<[1], [0], [0], [1], [0, 0, 1, 1], [], []>} : vector<2x15xf32>, vector<15x15xf32>, vector<2x15xf32> -> vector<2x15xf32>
    %cst_55 = arith.constant dense<0.000000e+00> : vector<2x15xf32>
    %78 = tpu.matmul %65, %12, %cst_55 {dimension_numbers = #tpu.dot_dimension_numbers<[1], [0], [0], [1], [0, 0, 1, 1], [], []>} : vector<2x15xf32>, vector<15x15xf32>, vector<2x15xf32> -> vector<2x15xf32>
    %79 = arith.addf %77, %78 : vector<2x15xf32>
    %80 = vector.broadcast %18 : vector<1x15xf32> to vector<2x15xf32>
    %81 = arith.addf %79, %80 : vector<2x15xf32>
    %82 = math.tanh %81 : vector<2x15xf32>
    %c4 = arith.constant 4 : index
    %c0_56 = arith.constant 0 : index
    %83 = vector.load %arg13[%c4, %c0_56] : memref<16x15xf32, #tpu.memory_space<vmem>>, vector<2x15xf32>
    tpu.vector_store %arg13[%c4, %c0_56], %82 {strides = array<i32>} : memref<16x15xf32, #tpu.memory_space<vmem>>, vector<2x15xf32>,
    %84 = vector.extract_strided_slice %26 {offsets = [6, 0], sizes = [2, 15], strides = [1, 1]} : vector<16x15xf32> to vector<2x15xf32>
    %cst_57 = arith.constant dense<0.000000e+00> : vector<2x15xf32>
    %85 = tpu.matmul %70, %4, %cst_57 {dimension_numbers = #tpu.dot_dimension_numbers<[1], [0], [0], [1], [0, 0, 1, 1], [], []>} : vector<2x15xf32>, vector<15x15xf32>, vector<2x15xf32> -> vector<2x15xf32>
    %86 = arith.addf %84, %85 : vector<2x15xf32>
    %87 = math.tanh %86 : vector<2x15xf32>
    %cst_58 = arith.constant dense<0.000000e+00> : vector<2x15xf32>
    %88 = tpu.matmul %87, %6, %cst_58 {dimension_numbers = #tpu.dot_dimension_numbers<[1], [0], [0], [1], [0, 0, 1, 1], [], []>} : vector<2x15xf32>, vector<15x15xf32>, vector<2x15xf32> -> vector<2x15xf32>
    %cst_59 = arith.constant dense<0.000000e+00> : vector<2x15xf32>
    %89 = tpu.matmul %76, %10, %cst_59 {dimension_numbers = #tpu.dot_dimension_numbers<[1], [0], [0], [1], [0, 0, 1, 1], [], []>} : vector<2x15xf32>, vector<15x15xf32>, vector<2x15xf32> -> vector<2x15xf32>
    %90 = arith.addf %88, %89 : vector<2x15xf32>
    %91 = vector.broadcast %16 : vector<1x15xf32> to vector<2x15xf32>
    %92 = arith.addf %90, %91 : vector<2x15xf32>
    %93 = math.tanh %92 : vector<2x15xf32>
    %cst_60 = arith.constant dense<0.000000e+00> : vector<2x15xf32>
    %94 = tpu.matmul %93, %8, %cst_60 {dimension_numbers = #tpu.dot_dimension_numbers<[1], [0], [0], [1], [0, 0, 1, 1], [], []>} : vector<2x15xf32>, vector<15x15xf32>, vector<2x15xf32> -> vector<2x15xf32>
    %cst_61 = arith.constant dense<0.000000e+00> : vector<2x15xf32>
    %95 = tpu.matmul %82, %12, %cst_61 {dimension_numbers = #tpu.dot_dimension_numbers<[1], [0], [0], [1], [0, 0, 1, 1], [], []>} : vector<2x15xf32>, vector<15x15xf32>, vector<2x15xf32> -> vector<2x15xf32>
    %96 = arith.addf %94, %95 : vector<2x15xf32>
    %97 = vector.broadcast %18 : vector<1x15xf32> to vector<2x15xf32>
    %98 = arith.addf %96, %97 : vector<2x15xf32>
    %99 = math.tanh %98 : vector<2x15xf32>
    %c6 = arith.constant 6 : index
    %c0_62 = arith.constant 0 : index
    %100 = vector.load %arg13[%c6, %c0_62] : memref<16x15xf32, #tpu.memory_space<vmem>>, vector<2x15xf32>
    tpu.vector_store %arg13[%c6, %c0_62], %99 {strides = array<i32>} : memref<16x15xf32, #tpu.memory_space<vmem>>, vector<2x15xf32>,
    %101 = vector.extract_strided_slice %26 {offsets = [8, 0], sizes = [2, 15], strides = [1, 1]} : vector<16x15xf32> to vector<2x15xf32>
    %cst_63 = arith.constant dense<0.000000e+00> : vector<2x15xf32>
    %102 = tpu.matmul %87, %4, %cst_63 {dimension_numbers = #tpu.dot_dimension_numbers<[1], [0], [0], [1], [0, 0, 1, 1], [], []>} : vector<2x15xf32>, vector<15x15xf32>, vector<2x15xf32> -> vector<2x15xf32>
    %103 = arith.addf %101, %102 : vector<2x15xf32>
    %104 = math.tanh %103 : vector<2x15xf32>
    %cst_64 = arith.constant dense<0.000000e+00> : vector<2x15xf32>
    %105 = tpu.matmul %104, %6, %cst_64 {dimension_numbers = #tpu.dot_dimension_numbers<[1], [0], [0], [1], [0, 0, 1, 1], [], []>} : vector<2x15xf32>, vector<15x15xf32>, vector<2x15xf32> -> vector<2x15xf32>
    %cst_65 = arith.constant dense<0.000000e+00> : vector<2x15xf32>
    %106 = tpu.matmul %93, %10, %cst_65 {dimension_numbers = #tpu.dot_dimension_numbers<[1], [0], [0], [1], [0, 0, 1, 1], [], []>} : vector<2x15xf32>, vector<15x15xf32>, vector<2x15xf32> -> vector<2x15xf32>
    %107 = arith.addf %105, %106 : vector<2x15xf32>
    %108 = vector.broadcast %16 : vector<1x15xf32> to vector<2x15xf32>
    %109 = arith.addf %107, %108 : vector<2x15xf32>
    %110 = math.tanh %109 : vector<2x15xf32>
    %cst_66 = arith.constant dense<0.000000e+00> : vector<2x15xf32>
    %111 = tpu.matmul %110, %8, %cst_66 {dimension_numbers = #tpu.dot_dimension_numbers<[1], [0], [0], [1], [0, 0, 1, 1], [], []>} : vector<2x15xf32>, vector<15x15xf32>, vector<2x15xf32> -> vector<2x15xf32>
    %cst_67 = arith.constant dense<0.000000e+00> : vector<2x15xf32>
    %112 = tpu.matmul %99, %12, %cst_67 {dimension_numbers = #tpu.dot_dimension_numbers<[1], [0], [0], [1], [0, 0, 1, 1], [], []>} : vector<2x15xf32>, vector<15x15xf32>, vector<2x15xf32> -> vector<2x15xf32>
    %113 = arith.addf %111, %112 : vector<2x15xf32>
    %114 = vector.broadcast %18 : vector<1x15xf32> to vector<2x15xf32>
    %115 = arith.addf %113, %114 : vector<2x15xf32>
    %116 = math.tanh %115 : vector<2x15xf32>
    %c8 = arith.constant 8 : index
    %c0_68 = arith.constant 0 : index
    %117 = vector.load %arg13[%c8, %c0_68] : memref<16x15xf32, #tpu.memory_space<vmem>>, vector<2x15xf32>
    tpu.vector_store %arg13[%c8, %c0_68], %116 {strides = array<i32>} : memref<16x15xf32, #tpu.memory_space<vmem>>, vector<2x15xf32>,
    %118 = vector.extract_strided_slice %26 {offsets = [10, 0], sizes = [2, 15], strides = [1, 1]} : vector<16x15xf32> to vector<2x15xf32>
    %cst_69 = arith.constant dense<0.000000e+00> : vector<2x15xf32>
    %119 = tpu.matmul %104, %4, %cst_69 {dimension_numbers = #tpu.dot_dimension_numbers<[1], [0], [0], [1], [0, 0, 1, 1], [], []>} : vector<2x15xf32>, vector<15x15xf32>, vector<2x15xf32> -> vector<2x15xf32>
    %120 = arith.addf %118, %119 : vector<2x15xf32>
    %121 = math.tanh %120 : vector<2x15xf32>
    %cst_70 = arith.constant dense<0.000000e+00> : vector<2x15xf32>
    %122 = tpu.matmul %121, %6, %cst_70 {dimension_numbers = #tpu.dot_dimension_numbers<[1], [0], [0], [1], [0, 0, 1, 1], [], []>} : vector<2x15xf32>, vector<15x15xf32>, vector<2x15xf32> -> vector<2x15xf32>
    %cst_71 = arith.constant dense<0.000000e+00> : vector<2x15xf32>
    %123 = tpu.matmul %110, %10, %cst_71 {dimension_numbers = #tpu.dot_dimension_numbers<[1], [0], [0], [1], [0, 0, 1, 1], [], []>} : vector<2x15xf32>, vector<15x15xf32>, vector<2x15xf32> -> vector<2x15xf32>
    %124 = arith.addf %122, %123 : vector<2x15xf32>
    %125 = vector.broadcast %16 : vector<1x15xf32> to vector<2x15xf32>
    %126 = arith.addf %124, %125 : vector<2x15xf32>
    %127 = math.tanh %126 : vector<2x15xf32>
    %cst_72 = arith.constant dense<0.000000e+00> : vector<2x15xf32>
    %128 = tpu.matmul %127, %8, %cst_72 {dimension_numbers = #tpu.dot_dimension_numbers<[1], [0], [0], [1], [0, 0, 1, 1], [], []>} : vector<2x15xf32>, vector<15x15xf32>, vector<2x15xf32> -> vector<2x15xf32>
    %cst_73 = arith.constant dense<0.000000e+00> : vector<2x15xf32>
    %129 = tpu.matmul %116, %12, %cst_73 {dimension_numbers = #tpu.dot_dimension_numbers<[1], [0], [0], [1], [0, 0, 1, 1], [], []>} : vector<2x15xf32>, vector<15x15xf32>, vector<2x15xf32> -> vector<2x15xf32>
    %130 = arith.addf %128, %129 : vector<2x15xf32>
    %131 = vector.broadcast %18 : vector<1x15xf32> to vector<2x15xf32>
    %132 = arith.addf %130, %131 : vector<2x15xf32>
    %133 = math.tanh %132 : vector<2x15xf32>
    %c10 = arith.constant 10 : index
    %c0_74 = arith.constant 0 : index
    %134 = vector.load %arg13[%c10, %c0_74] : memref<16x15xf32, #tpu.memory_space<vmem>>, vector<2x15xf32>
    tpu.vector_store %arg13[%c10, %c0_74], %133 {strides = array<i32>} : memref<16x15xf32, #tpu.memory_space<vmem>>, vector<2x15xf32>,
    %135 = vector.extract_strided_slice %26 {offsets = [12, 0], sizes = [2, 15], strides = [1, 1]} : vector<16x15xf32> to vector<2x15xf32>
    %cst_75 = arith.constant dense<0.000000e+00> : vector<2x15xf32>
    %136 = tpu.matmul %121, %4, %cst_75 {dimension_numbers = #tpu.dot_dimension_numbers<[1], [0], [0], [1], [0, 0, 1, 1], [], []>} : vector<2x15xf32>, vector<15x15xf32>, vector<2x15xf32> -> vector<2x15xf32>
    %137 = arith.addf %135, %136 : vector<2x15xf32>
    %138 = math.tanh %137 : vector<2x15xf32>
    %cst_76 = arith.constant dense<0.000000e+00> : vector<2x15xf32>
    %139 = tpu.matmul %138, %6, %cst_76 {dimension_numbers = #tpu.dot_dimension_numbers<[1], [0], [0], [1], [0, 0, 1, 1], [], []>} : vector<2x15xf32>, vector<15x15xf32>, vector<2x15xf32> -> vector<2x15xf32>
    %cst_77 = arith.constant dense<0.000000e+00> : vector<2x15xf32>
    %140 = tpu.matmul %127, %10, %cst_77 {dimension_numbers = #tpu.dot_dimension_numbers<[1], [0], [0], [1], [0, 0, 1, 1], [], []>} : vector<2x15xf32>, vector<15x15xf32>, vector<2x15xf32> -> vector<2x15xf32>
    %141 = arith.addf %139, %140 : vector<2x15xf32>
    %142 = vector.broadcast %16 : vector<1x15xf32> to vector<2x15xf32>
    %143 = arith.addf %141, %142 : vector<2x15xf32>
    %144 = math.tanh %143 : vector<2x15xf32>
    %cst_78 = arith.constant dense<0.000000e+00> : vector<2x15xf32>
    %145 = tpu.matmul %144, %8, %cst_78 {dimension_numbers = #tpu.dot_dimension_numbers<[1], [0], [0], [1], [0, 0, 1, 1], [], []>} : vector<2x15xf32>, vector<15x15xf32>, vector<2x15xf32> -> vector<2x15xf32>
    %cst_79 = arith.constant dense<0.000000e+00> : vector<2x15xf32>
    %146 = tpu.matmul %133, %12, %cst_79 {dimension_numbers = #tpu.dot_dimension_numbers<[1], [0], [0], [1], [0, 0, 1, 1], [], []>} : vector<2x15xf32>, vector<15x15xf32>, vector<2x15xf32> -> vector<2x15xf32>
    %147 = arith.addf %145, %146 : vector<2x15xf32>
    %148 = vector.broadcast %18 : vector<1x15xf32> to vector<2x15xf32>
    %149 = arith.addf %147, %148 : vector<2x15xf32>
    %150 = math.tanh %149 : vector<2x15xf32>
    %c12 = arith.constant 12 : index
    %c0_80 = arith.constant 0 : index
    %151 = vector.load %arg13[%c12, %c0_80] : memref<16x15xf32, #tpu.memory_space<vmem>>, vector<2x15xf32>
    tpu.vector_store %arg13[%c12, %c0_80], %150 {strides = array<i32>} : memref<16x15xf32, #tpu.memory_space<vmem>>, vector<2x15xf32>,
    %152 = vector.extract_strided_slice %26 {offsets = [14, 0], sizes = [2, 15], strides = [1, 1]} : vector<16x15xf32> to vector<2x15xf32>
    %cst_81 = arith.constant dense<0.000000e+00> : vector<2x15xf32>
    %153 = tpu.matmul %138, %4, %cst_81 {dimension_numbers = #tpu.dot_dimension_numbers<[1], [0], [0], [1], [0, 0, 1, 1], [], []>} : vector<2x15xf32>, vector<15x15xf32>, vector<2x15xf32> -> vector<2x15xf32>
    %154 = arith.addf %152, %153 : vector<2x15xf32>
    %155 = math.tanh %154 : vector<2x15xf32>
    %cst_82 = arith.constant dense<0.000000e+00> : vector<2x15xf32>
    %156 = tpu.matmul %155, %6, %cst_82 {dimension_numbers = #tpu.dot_dimension_numbers<[1], [0], [0], [1], [0, 0, 1, 1], [], []>} : vector<2x15xf32>, vector<15x15xf32>, vector<2x15xf32> -> vector<2x15xf32>
    %cst_83 = arith.constant dense<0.000000e+00> : vector<2x15xf32>
    %157 = tpu.matmul %144, %10, %cst_83 {dimension_numbers = #tpu.dot_dimension_numbers<[1], [0], [0], [1], [0, 0, 1, 1], [], []>} : vector<2x15xf32>, vector<15x15xf32>, vector<2x15xf32> -> vector<2x15xf32>
    %158 = arith.addf %156, %157 : vector<2x15xf32>
    %159 = vector.broadcast %16 : vector<1x15xf32> to vector<2x15xf32>
    %160 = arith.addf %158, %159 : vector<2x15xf32>
    %161 = math.tanh %160 : vector<2x15xf32>
    %cst_84 = arith.constant dense<0.000000e+00> : vector<2x15xf32>
    %162 = tpu.matmul %161, %8, %cst_84 {dimension_numbers = #tpu.dot_dimension_numbers<[1], [0], [0], [1], [0, 0, 1, 1], [], []>} : vector<2x15xf32>, vector<15x15xf32>, vector<2x15xf32> -> vector<2x15xf32>
    %cst_85 = arith.constant dense<0.000000e+00> : vector<2x15xf32>
    %163 = tpu.matmul %150, %12, %cst_85 {dimension_numbers = #tpu.dot_dimension_numbers<[1], [0], [0], [1], [0, 0, 1, 1], [], []>} : vector<2x15xf32>, vector<15x15xf32>, vector<2x15xf32> -> vector<2x15xf32>
    %164 = arith.addf %162, %163 : vector<2x15xf32>
    %165 = vector.broadcast %18 : vector<1x15xf32> to vector<2x15xf32>
    %166 = arith.addf %164, %165 : vector<2x15xf32>
    %167 = math.tanh %166 : vector<2x15xf32>
    %c14 = arith.constant 14 : index
    %c0_86 = arith.constant 0 : index
    %168 = vector.load %arg13[%c14, %c0_86] : memref<16x15xf32, #tpu.memory_space<vmem>>, vector<2x15xf32>
    tpu.vector_store %arg13[%c14, %c0_86], %167 {strides = array<i32>} : memref<16x15xf32, #tpu.memory_space<vmem>>, vector<2x15xf32>,
    %c0_87 = arith.constant 0 : index
    %c0_88 = arith.constant 0 : index
    %c0_89 = arith.constant 0 : index
    %169 = vector.load %arg12[%c0_87, %c0_88, %c0_89] : memref<3x2x15xf32, #tpu.memory_space<vmem>>, vector<1x2x15xf32>
    %170 = vector.shape_cast %169 : vector<1x2x15xf32> to vector<2x15xf32>
    %171 = vector.shape_cast %155 : vector<2x15xf32> to vector<1x2x15xf32>
    tpu.vector_store %arg12[%c0_87, %c0_88, %c0_89], %171 {strides = array<i32>} : memref<3x2x15xf32, #tpu.memory_space<vmem>>, vector<1x2x15xf32>,
    %c1_90 = arith.constant 1 : index
    %c0_91 = arith.constant 0 : index
    %c0_92 = arith.constant 0 : index
    %172 = vector.load %arg12[%c1_90, %c0_91, %c0_92] : memref<3x2x15xf32, #tpu.memory_space<vmem>>, vector<1x2x15xf32>
    %173 = vector.shape_cast %172 : vector<1x2x15xf32> to vector<2x15xf32>
    %174 = vector.shape_cast %161 : vector<2x15xf32> to vector<1x2x15xf32>
    tpu.vector_store %arg12[%c1_90, %c0_91, %c0_92], %174 {strides = array<i32>} : memref<3x2x15xf32, #tpu.memory_space<vmem>>, vector<1x2x15xf32>,
    %c2_93 = arith.constant 2 : index
    %c0_94 = arith.constant 0 : index
    %c0_95 = arith.constant 0 : index
    %175 = vector.load %arg12[%c2_93, %c0_94, %c0_95] : memref<3x2x15xf32, #tpu.memory_space<vmem>>, vector<1x2x15xf32>
    %176 = vector.shape_cast %175 : vector<1x2x15xf32> to vector<2x15xf32>
    %177 = vector.shape_cast %167 : vector<2x15xf32> to vector<1x2x15xf32>
    tpu.vector_store %arg12[%c2_93, %c0_94, %c0_95], %177 {strides = array<i32>} : memref<3x2x15xf32, #tpu.memory_space<vmem>>, vector<1x2x15xf32>,
    %c0_i32_96 = arith.constant 0 : i32
    %178 = arith.cmpi eq, %arg0, %c0_i32_96 : i32
    %179 = arith.extui %178 : i1 to i32
    %c0_i32_97 = arith.constant 0 : i32
    %180 = arith.cmpi ne, %179, %c0_i32_97 : i32
    scf.if %180 {
      %c0_103 = arith.constant 0 : index
      %c0_104 = arith.constant 0 : index
      %c0_105 = arith.constant 0 : index
      %186 = vector.load %arg12[%c0_103, %c0_104, %c0_105] : memref<3x2x15xf32, #tpu.memory_space<vmem>>, vector<3x2x15xf32>
      %c0_106 = arith.constant 0 : index
      %c0_107 = arith.constant 0 : index
      %c0_108 = arith.constant 0 : index
      %187 = vector.load %arg11[%c0_106, %c0_107, %c0_108] : memref<3x2x15xf32, #tpu.memory_space<vmem>>, vector<3x2x15xf32>
      tpu.vector_store %arg11[%c0_106, %c0_107, %c0_108], %186 {strides = array<i32>} : memref<3x2x15xf32, #tpu.memory_space<vmem>>, vector<3x2x15xf32>,
    } else {
    }
    %c0_98 = arith.constant 0 : index
    %c0_99 = arith.constant 0 : index
    %181 = vector.load %arg13[%c0_98, %c0_99] : memref<16x15xf32, #tpu.memory_space<vmem>>, vector<16x15xf32>
    %cst_100 = arith.constant dense<0.000000e+00> : vector<16x1xf32>
    %182 = tpu.matmul %181, %19, %cst_100 {dimension_numbers = #tpu.dot_dimension_numbers<[1], [0], [0], [1], [0, 0, 1, 1], [], []>} : vector<16x15xf32>, vector<15x1xf32>, vector<16x1xf32> -> vector<16x1xf32>
    %183 = vector.broadcast %20 : vector<1x1xf32> to vector<16x1xf32>
    %184 = arith.addf %182, %183 : vector<16x1xf32>
    %c0_101 = arith.constant 0 : index
    %c0_102 = arith.constant 0 : index
    %185 = vector.load %arg10[%c0_101, %c0_102] : memref<16x1xf32, #tpu.memory_space<vmem>>, vector<16x1xf32>
    tpu.vector_store %arg10[%c0_101, %c0_102], %184 {strides = array<i32>} : memref<16x1xf32, #tpu.memory_space<vmem>>, vector<16x1xf32>,
    return
  }
  func.func @transform_0(%arg0: i32) -> (i32, i32) {
    %c0_i32 = arith.constant 0 : i32
    %c0_i32_0 = arith.constant 0 : i32
    return %arg0, %c0_i32 : i32, i32
  }
  func.func @transform_1(%arg0: i32) -> (i32, i32, i32) {
    %c0_i32 = arith.constant 0 : i32
    %c0_i32_0 = arith.constant 0 : i32
    %c0_i32_1 = arith.constant 0 : i32
    %c0_i32_2 = arith.constant 0 : i32
    return %c0_i32, %c0_i32_0, %c0_i32_1 : i32, i32, i32
  }
  func.func @transform_2(%arg0: i32) -> (i32, i32) {
    %c0_i32 = arith.constant 0 : i32
    %c0_i32_0 = arith.constant 0 : i32
    %c0_i32_1 = arith.constant 0 : i32
    return %c0_i32, %c0_i32_0 : i32, i32
  }
  func.func @transform_3(%arg0: i32) -> (i32, i32) {
    %c0_i32 = arith.constant 0 : i32
    %c0_i32_0 = arith.constant 0 : i32
    %c0_i32_1 = arith.constant 0 : i32
    return %c0_i32, %c0_i32_0 : i32, i32
  }
  func.func @transform_4(%arg0: i32) -> (i32, i32, i32) {
    %c0_i32 = arith.constant 0 : i32
    %c0_i32_0 = arith.constant 0 : i32
    %c0_i32_1 = arith.constant 0 : i32
    %c0_i32_2 = arith.constant 0 : i32
    return %c0_i32, %c0_i32_0, %c0_i32_1 : i32, i32, i32
  }
  func.func @transform_5(%arg0: i32) -> (i32, i32, i32) {
    %c0_i32 = arith.constant 0 : i32
    %c0_i32_0 = arith.constant 0 : i32
    %c0_i32_1 = arith.constant 0 : i32
    %c0_i32_2 = arith.constant 0 : i32
    return %c0_i32, %c0_i32_0, %c0_i32_1 : i32, i32, i32
  }
  func.func @transform_6(%arg0: i32) -> (i32, i32, i32) {
    %c0_i32 = arith.constant 0 : i32
    %c0_i32_0 = arith.constant 0 : i32
    %c0_i32_1 = arith.constant 0 : i32
    %c0_i32_2 = arith.constant 0 : i32
    return %c0_i32, %c0_i32_0, %c0_i32_1 : i32, i32, i32
  }
  func.func @transform_7(%arg0: i32) -> (i32, i32) {
    %c0_i32 = arith.constant 0 : i32
    %c0_i32_0 = arith.constant 0 : i32
    %c0_i32_1 = arith.constant 0 : i32
    return %c0_i32, %c0_i32_0 : i32, i32
  }
  func.func @transform_8(%arg0: i32) -> (i32, i32) {
    %c0_i32 = arith.constant 0 : i32
    %c0_i32_0 = arith.constant 0 : i32
    %c0_i32_1 = arith.constant 0 : i32
    return %c0_i32, %c0_i32_0 : i32, i32
  }
  func.func @transform_9(%arg0: i32) -> (i32, i32) {
    %c0_i32 = arith.constant 0 : i32
    %c0_i32_0 = arith.constant 0 : i32
    return %arg0, %c0_i32 : i32, i32
  }
  func.func @transform_10(%arg0: i32) -> (i32, i32, i32) {
    %c0_i32 = arith.constant 0 : i32
    %c0_i32_0 = arith.constant 0 : i32
    %c0_i32_1 = arith.constant 0 : i32
    %c0_i32_2 = arith.constant 0 : i32
    return %c0_i32, %c0_i32_0, %c0_i32_1 : i32, i32, i32
  }
}

</mosaic_0001>

<llo_original>
// kernel: rnn_forward.1
$region0: #{rnn_forward.1}
  #allocation0 [shape = 'u32[]', space=smem, size = 0x4, offset = 0x4, fixed_abs, tag = 'smem constant byte address 0x4 - core index']
  #allocation1 [shape = 'u32[144,128]{1,0:T(1,128)}', space=vmem, size = 0x12000, scoped, tag = 'internal scratch']
  #allocation2 [shape = 'f32[3,2,15]{2,1,0:T(2,128)}', space=vmem, size = 0xc00, scoped, tag = 'scratch operand']
  #allocation3 [shape = 'f32[16,15]{1,0:T(8,128)}', space=vmem, size = 0x2000, scoped, tag = 'scratch operand']
  #allocation4 [shape = 'f32[1,1]{1,0:T(1,128)S(1)}', space=vmem, size = 0x200, scoped, tag = 'scoped memory for rnn_forward.1']
  %s0 = inlined_call_operand.vmem [shape: f32[16,1], index: 0, kind: input, shape index: {}]
  %s1 = inlined_call_operand.vmem [shape: f32[3,2,15], index: 1, kind: input, shape index: {}]
  %s2 = inlined_call_operand.vmem [shape: f32[1,15], index: 2, kind: input, shape index: {}]
  %s3 = inlined_call_operand.vmem [shape: f32[15,15], index: 3, kind: input, shape index: {}]
  %s4 = inlined_call_operand.vmem [shape: f32[2,15,15], index: 4, kind: input, shape index: {}]
  %s5 = inlined_call_operand.vmem [shape: f32[2,15,15], index: 5, kind: input, shape index: {}]
  %s6 = inlined_call_operand.vmem [shape: f32[3,1,15], index: 6, kind: input, shape index: {}]
  %s7 = inlined_call_operand.vmem [shape: f32[15,1], index: 7, kind: input, shape index: {}]
  %s8 = inlined_call_operand.<no memory space> [shape: f32[1,1], index: 8, kind: input, shape index: {}]
  %s9 = inlined_call_operand.vmem [shape: f32[16,1], index: 9, kind: output, shape index: {0}]
  %s10 = inlined_call_operand.hbm [shape: f32[3,2,15], index: 10, kind: output, shape index: {1}]
  %11 = xla_tuple %s9, %s10
  %s12 = sld [smem:[#allocation0]]
  $region62: #{rnn_forward.1} parent=0
    _
  %s14 = ssub.s32 1, %s12
  %s15 = scalar_select 0, %s14, %s12
  %v16 = vstv %s8
  %17 = vst [vmem:[#allocation4] sm:$0x1] %v16
  $region1: #{rnn_forward.1} parent=0
    #allocation5 [shape = 'u8[3072]{0}', space=vmem, size = 0xc00, scoped, tag = 'output window, operand 1, single buffered']
    #allocation6 [shape = 's32[1]{0}', space=sflag, size = 0x4, scoped, tag = 'scoped memory for rnn_forward.1']
    %18 = vsyncpa [#allocation6], 0
    // Predicated region
    $region2: #{rnn_forward.1} parent=1 // pred_check
      _
    $region3: #{rnn_forward.1} parent=1 // pred_check_branch
      %20 = sbr.rel (0) target = $region5
    $region4: #{rnn_forward.1} parent=1 // pred_region
      _
    $region5: #{rnn_forward.1} parent=1 // pred_fallthru
      _
    // Predicated region
    $region6: #{rnn_forward.1} parent=1 // pred_check
      _
    $region7: #{rnn_forward.1} parent=1 // pred_check_branch
      %22 = sbr.rel (0) target = $region9
    $region8: #{rnn_forward.1} parent=1 // pred_region
      _
    $region9: #{rnn_forward.1} parent=1 // pred_fallthru
      _
    // Predicated region
    $region10: #{rnn_forward.1} parent=1 // pred_check
      _
    $region11: #{rnn_forward.1} parent=1 // pred_check_branch
      %24 = sbr.rel (0) target = $region13
    $region12: #{rnn_forward.1} parent=1 // pred_region
      _
    $region13: #{rnn_forward.1} parent=1 // pred_fallthru
      _
    // Predicated region
    $region14: #{rnn_forward.1} parent=1 // pred_check
      _
    $region15: #{rnn_forward.1} parent=1 // pred_check_branch
      %26 = sbr.rel (0) target = $region17
    $region16: #{rnn_forward.1} parent=1 // pred_region
      _
    $region17: #{rnn_forward.1} parent=1 // pred_fallthru
      _
    // Predicated region
    $region18: #{rnn_forward.1} parent=1 // pred_check
      _
    $region19: #{rnn_forward.1} parent=1 // pred_check_branch
      %28 = sbr.rel (0) target = $region21
    $region20: #{rnn_forward.1} parent=1 // pred_region
      _
    $region21: #{rnn_forward.1} parent=1 // pred_fallthru
      _
    // Predicated region
    $region22: #{rnn_forward.1} parent=1 // pred_check
      _
    $region23: #{rnn_forward.1} parent=1 // pred_check_branch
      %30 = sbr.rel (0) target = $region25
    $region24: #{rnn_forward.1} parent=1 // pred_region
      _
    $region25: #{rnn_forward.1} parent=1 // pred_fallthru
      _
    // Predicated region
    $region26: #{rnn_forward.1} parent=1 // pred_check
      _
    $region27: #{rnn_forward.1} parent=1 // pred_check_branch
      %32 = sbr.rel (0) target = $region29
    $region28: #{rnn_forward.1} parent=1 // pred_region
      _
    $region29: #{rnn_forward.1} parent=1 // pred_fallthru
      _
    // Predicated region
    $region30: #{rnn_forward.1} parent=1 // pred_check
      _
    $region31: #{rnn_forward.1} parent=1 // pred_check_branch
      %34 = sbr.rel (0) target = $region33
    $region32: #{rnn_forward.1} parent=1 // pred_region
      _
    $region33: #{rnn_forward.1} parent=1 // pred_fallthru
      _
    // Predicated region
    $region34: #{rnn_forward.1} parent=1 // pred_check
      _
    $region35: #{rnn_forward.1} parent=1 // pred_check_branch
      %36 = sbr.rel (0) target = $region37
    $region36: #{rnn_forward.1} parent=1 // pred_region
      _
    $region37: #{rnn_forward.1} parent=1 // pred_fallthru
      _
    %p37 = scmp.eq.s32.totalorder 0, 0
    // Predicated region
    $region38: #{rnn_forward.1} parent=1 // pred_check
      %p38 = pneg %p37
    $region39: #{rnn_forward.1} parent=1 // pred_check_branch
      %40 = sbr.rel (%p38) target = $region41
    $region40: #{rnn_forward.1} parent=1 // pred_region
      %v41 = vld [vmem:[%s1] sm:$0x3]
      %v42 = vld [vmem:[%s1 + $0x2] sm:$0x3]
      %v43 = vld [vmem:[%s1 + $0x4] sm:$0x3]
      %vm44 = vcmask 115712
      %45 = vst.msk [vmem:[#allocation2] sm:$0x3] %vm44, %v41
      %46 = vst.msk [vmem:[#allocation2 + $0x2] sm:$0x3] %vm44, %v42
      %47 = vst.msk [vmem:[#allocation2 + $0x4] sm:$0x3] %vm44, %v43
    $region41: #{rnn_forward.1} parent=1 // pred_fallthru
      _
    %v48 = vld [vmem:[%s2] sm:$0x1]
    %v49 = vld [vmem:[%s3] sm:$0xff]
    %v50 = vld [vmem:[%s3 + $0x8] sm:$0x7f]
    %v51 = vld [vmem:[%s4] sm:$0xff]
    %v52 = vld [vmem:[%s4 + $0x8] sm:$0x7f]
    %s53 = scalar_lea.vmem %s4, 16
    %v54 = vld [vmem:[%s53] sm:$0xff]
    %v55 = vld [vmem:[%s53 + $0x8] sm:$0x7f]
    %v56 = vld [vmem:[%s5] sm:$0xff]
    %v57 = vld [vmem:[%s5 + $0x8] sm:$0x7f]
    %s58 = scalar_lea.vmem %s5, 16
    %v59 = vld [vmem:[%s58] sm:$0xff]
    %v60 = vld [vmem:[%s58 + $0x8] sm:$0x7f]
    %v61 = vld [vmem:[%s6] sm:$0x1]
    %s62 = scalar_lea.vmem %s6, 1
    %v63 = vld [vmem:[%s62] sm:$0x1]
    %s64 = scalar_lea.vmem %s6, 2
    %v65 = vld [vmem:[%s64] sm:$0x1]
    %v66 = vld [vmem:[%s7] sm:$0xff]
    %v67 = vld [vmem:[%s7 + $0x8] sm:$0x7f]
    %v68 = vld [vmem:[#allocation4] sm:$0x1]
    %v69 = vld [vmem:[%s0] sm:$0xff]
    %v70 = vld [vmem:[%s0 + $0x8] sm:$0xff]
    %72 = vset.pattern.permute.xlu0 0
    %73 = vperm.xlu0 %72, %v69
    %v74 = vpop.permute.xlu0 %73
    %77 = vset.pattern.permute.xlu0 0
    %78 = vperm.xlu0 %77, %v70
    %v79 = vpop.permute.xlu0 %78
    %v82 = vlaneseq
    %v83 = vshrl.u32 %v82, 7
    %v84 = vsub.s32 0, %v83
    %v85 = vrot.slane %v48, %v84
    %v87 = vmul.f32 %v74, %v85
    %v88 = vmul.f32 %v79, %v85
    %v90 = vlaneseq
    %v91 = vshrl.u32 %v90, 7
    %v92 = vsub.s32 0, %v91
    %v93 = vrot.slane %v61, %v92
    %v95 = vadd.f32 %v87, %v93
    %v96 = vadd.f32 %v88, %v93
    %v97 = vld [vmem:[#allocation2] sm:$0x3]
    %s98 = scalar_lea.vmem [#allocation2], 2
    %v99 = vld [vmem:[%s98] sm:$0x3]
    %s100 = scalar_lea.vmem [#allocation2], 4
    %v101 = vld [vmem:[%s100] sm:$0x3]
    %vm102 = vcmask 121856
    %v104 = vsel %vm102, %v97, 0
    %vm106 = vcmask 1046528
    %v108 = vsel %vm106, %v50, 0
    %110 = vmatprep.subr.mxu0 0.0
    %111 = vmatpush1.msra.mxu0 %v49
    %112 = vmatprep.subr.mxu0 0.0
    %113 = vmatpush1.msra.mxu0 %v108
    %114 = vmatprep.subr.mxu0 0.0
    %115 = vmatpush1.msra.mxu0 0.0
    %116 = vmatprep.subr.mxu0 0.0
    %117 = vmatpush1.msra.mxu0 0.0
    %118 = vmatprep.subr.mxu0 0.0
    %119 = vmatpush1.msra.mxu0 0.0
    %120 = vmatprep.subr.mxu0 0.0
    %121 = vmatpush1.msra.mxu0 0.0
    %122 = vmatprep.subr.mxu0 0.0
    %123 = vmatpush1.msra.mxu0 0.0
    %124 = vmatprep.subr.mxu0 0.0
    %125 = vmatpush1.msra.mxu0 0.0
    %126 = vmatprep.subr.mxu0 0.0
    %127 = vmatpush1.msra.mxu0 0.0
    %128 = vmatprep.subr.mxu0 0.0
    %129 = vmatpush1.msra.mxu0 0.0
    %130 = vmatprep.subr.mxu0 0.0
    %131 = vmatpush1.msra.mxu0 0.0
    %132 = vmatprep.subr.mxu0 0.0
    %133 = vmatpush1.msra.mxu0 0.0
    %134 = vmatprep.subr.mxu0 0.0
    %135 = vmatpush1.msra.mxu0 0.0
    %136 = vmatprep.subr.mxu0 0.0
    %137 = vmatpush1.msra.mxu0 0.0
    %138 = vmatprep.subr.mxu0 0.0
    %139 = vmatpush1.msra.mxu0 0.0
    %140 = vmatprep.subr.mxu0 0.0
    %141 = vmatpush1.msra.mxu0 0.0
    %142 = vmatprep.subr.mxu0 0.0
    %143 = vmatpush1.msra.mxu0 0.0
    %144 = vmatprep.subr.mxu0 0.0
    %145 = vmatpush1.msra.mxu0 0.0
    %146 = vmatprep.subr.mxu0 0.0
    %147 = vmatpush1.msra.mxu0 0.0
    %148 = vmatprep.subr.mxu0 0.0
    %149 = vmatpush1.msra.mxu0 0.0
    %150 = vmatprep.subr.mxu0 0.0
    %151 = vmatpush1.msra.mxu0 0.0
    %152 = vmatprep.subr.mxu0 0.0
    %153 = vmatpush1.msra.mxu0 0.0
    %154 = vmatprep.subr.mxu0 0.0
    %155 = vmatpush1.msra.mxu0 0.0
    %156 = vmatprep.subr.mxu0 0.0
    %157 = vmatpush1.msra.mxu0 0.0
    %158 = vmatprep.subr.mxu0 0.0
    %159 = vmatpush1.msra.mxu0 0.0
    %160 = vmatprep.subr.mxu0 0.0
    %161 = vmatpush1.msra.mxu0 0.0
    %162 = vmatprep.subr.mxu0 0.0
    %163 = vmatpush1.msra.mxu0 0.0
    %164 = vmatprep.subr.mxu0 0.0
    %165 = vmatpush1.msra.mxu0 0.0
    %166 = vmatprep.subr.mxu0 0.0
    %167 = vmatpush1.msra.mxu0 0.0
    %168 = vmatprep.subr.mxu0 0.0
    %169 = vmatpush1.msra.mxu0 0.0
    %170 = vmatprep.subr.mxu0 0.0
    %171 = vmatpush1.msra.mxu0 0.0
    %172 = vmatprep.subr.mxu0 0.0
    %173 = vmatpush1.msra.mxu0 0.0
    %174 = vmatprep.mubr.f32.mxu0 0.0
    %175 = vmatmul.mubr.f32.gmra.mrb[0].mxu0 %v104
    %v176 = vpop.f32.mrb[0].mxu0
    %v177 = vadd.f32 0.0, %v176
    %v178 = vpop.f32.mrb[0].mxu0
    %179 = vdwg.mxu0
    %v180 = vadd.f32 %v95, %v177
    %v181 = vtanh.pop %v180
    %v183 = vsel %vm102, %v99, 0
    %v186 = vsel %vm106, %v57, 0
    %188 = vmatprep.subr.mxu0 0.0
    %189 = vmatpush1.msra.mxu0 %v56
    %190 = vmatprep.subr.mxu0 0.0
    %191 = vmatpush1.msra.mxu0 %v186
    %192 = vmatprep.subr.mxu0 0.0
    %193 = vmatpush1.msra.mxu0 0.0
    %194 = vmatprep.subr.mxu0 0.0
    %195 = vmatpush1.msra.mxu0 0.0
    %196 = vmatprep.subr.mxu0 0.0
    %197 = vmatpush1.msra.mxu0 0.0
    %198 = vmatprep.subr.mxu0 0.0
    %199 = vmatpush1.msra.mxu0 0.0
    %200 = vmatprep.subr.mxu0 0.0
    %201 = vmatpush1.msra.mxu0 0.0
    %202 = vmatprep.subr.mxu0 0.0
    %203 = vmatpush1.msra.mxu0 0.0
    %204 = vmatprep.subr.mxu0 0.0
    %205 = vmatpush1.msra.mxu0 0.0
    %206 = vmatprep.subr.mxu0 0.0
    %207 = vmatpush1.msra.mxu0 0.0
    %208 = vmatprep.subr.mxu0 0.0
    %209 = vmatpush1.msra.mxu0 0.0
    %210 = vmatprep.subr.mxu0 0.0
    %211 = vmatpush1.msra.mxu0 0.0
    %212 = vmatprep.subr.mxu0 0.0
    %213 = vmatpush1.msra.mxu0 0.0
    %214 = vmatprep.subr.mxu0 0.0
    %215 = vmatpush1.msra.mxu0 0.0
    %216 = vmatprep.subr.mxu0 0.0
    %217 = vmatpush1.msra.mxu0 0.0
    %218 = vmatprep.subr.mxu0 0.0
    %219 = vmatpush1.msra.mxu0 0.0
    %220 = vmatprep.subr.mxu0 0.0
    %221 = vmatpush1.msra.mxu0 0.0
    %222 = vmatprep.subr.mxu0 0.0
    %223 = vmatpush1.msra.mxu0 0.0
    %224 = vmatprep.subr.mxu0 0.0
    %225 = vmatpush1.msra.mxu0 0.0
    %226 = vmatprep.subr.mxu0 0.0
    %227 = vmatpush1.msra.mxu0 0.0
    %228 = vmatprep.subr.mxu0 0.0
    %229 = vmatpush1.msra.mxu0 0.0
    %230 = vmatprep.subr.mxu0 0.0
    %231 = vmatpush1.msra.mxu0 0.0
    %232 = vmatprep.subr.mxu0 0.0
    %233 = vmatpush1.msra.mxu0 0.0
    %234 = vmatprep.subr.mxu0 0.0
    %235 = vmatpush1.msra.mxu0 0.0
    %236 = vmatprep.subr.mxu0 0.0
    %237 = vmatpush1.msra.mxu0 0.0
    %238 = vmatprep.subr.mxu0 0.0
    %239 = vmatpush1.msra.mxu0 0.0
    %240 = vmatprep.subr.mxu0 0.0
    %241 = vmatpush1.msra.mxu0 0.0
    %242 = vmatprep.subr.mxu0 0.0
    %243 = vmatpush1.msra.mxu0 0.0
    %244 = vmatprep.subr.mxu0 0.0
    %245 = vmatpush1.msra.mxu0 0.0
    %246 = vmatprep.subr.mxu0 0.0
    %247 = vmatpush1.msra.mxu0 0.0
    %248 = vmatprep.subr.mxu0 0.0
    %249 = vmatpush1.msra.mxu0 0.0
    %250 = vmatprep.subr.mxu0 0.0
    %251 = vmatpush1.msra.mxu0 0.0
    %252 = vmatprep.mubr.f32.mxu0 0.0
    %253 = vmatmul.mubr.f32.gmra.mrb[0].mxu0 %v183
    %v254 = vpop.f32.mrb[0].mxu0
    %v255 = vadd.f32 0.0, %v254
    %v256 = vpop.f32.mrb[0].mxu0
    %257 = vdwg.mxu0
    %v259 = vsel %vm102, %v181, 0
    %v262 = vsel %vm106, %v52, 0
    %264 = vmatprep.subr.mxu0 0.0
    %265 = vmatpush1.msra.mxu0 %v51
    %266 = vmatprep.subr.mxu0 0.0
    %267 = vmatpush1.msra.mxu0 %v262
    %268 = vmatprep.subr.mxu0 0.0
    %269 = vmatpush1.msra.mxu0 0.0
    %270 = vmatprep.subr.mxu0 0.0
    %271 = vmatpush1.msra.mxu0 0.0
    %272 = vmatprep.subr.mxu0 0.0
    %273 = vmatpush1.msra.mxu0 0.0
    %274 = vmatprep.subr.mxu0 0.0
    %275 = vmatpush1.msra.mxu0 0.0
    %276 = vmatprep.subr.mxu0 0.0
    %277 = vmatpush1.msra.mxu0 0.0
    %278 = vmatprep.subr.mxu0 0.0
    %279 = vmatpush1.msra.mxu0 0.0
    %280 = vmatprep.subr.mxu0 0.0
    %281 = vmatpush1.msra.mxu0 0.0
    %282 = vmatprep.subr.mxu0 0.0
    %283 = vmatpush1.msra.mxu0 0.0
    %284 = vmatprep.subr.mxu0 0.0
    %285 = vmatpush1.msra.mxu0 0.0
    %286 = vmatprep.subr.mxu0 0.0
    %287 = vmatpush1.msra.mxu0 0.0
    %288 = vmatprep.subr.mxu0 0.0
    %289 = vmatpush1.msra.mxu0 0.0
    %290 = vmatprep.subr.mxu0 0.0
    %291 = vmatpush1.msra.mxu0 0.0
    %292 = vmatprep.subr.mxu0 0.0
    %293 = vmatpush1.msra.mxu0 0.0
    %294 = vmatprep.subr.mxu0 0.0
    %295 = vmatpush1.msra.mxu0 0.0
    %296 = vmatprep.subr.mxu0 0.0
    %297 = vmatpush1.msra.mxu0 0.0
    %298 = vmatprep.subr.mxu0 0.0
    %299 = vmatpush1.msra.mxu0 0.0
    %300 = vmatprep.subr.mxu0 0.0
    %301 = vmatpush1.msra.mxu0 0.0
    %302 = vmatprep.subr.mxu0 0.0
    %303 = vmatpush1.msra.mxu0 0.0
    %304 = vmatprep.subr.mxu0 0.0
    %305 = vmatpush1.msra.mxu0 0.0
    %306 = vmatprep.subr.mxu0 0.0
    %307 = vmatpush1.msra.mxu0 0.0
    %308 = vmatprep.subr.mxu0 0.0
    %309 = vmatpush1.msra.mxu0 0.0
    %310 = vmatprep.subr.mxu0 0.0
    %311 = vmatpush1.msra.mxu0 0.0
    %312 = vmatprep.subr.mxu0 0.0
    %313 = vmatpush1.msra.mxu0 0.0
    %314 = vmatprep.subr.mxu0 0.0
    %315 = vmatpush1.msra.mxu0 0.0
    %316 = vmatprep.subr.mxu0 0.0
    %317 = vmatpush1.msra.mxu0 0.0
    %318 = vmatprep.subr.mxu0 0.0
    %319 = vmatpush1.msra.mxu0 0.0
    %320 = vmatprep.subr.mxu0 0.0
    %321 = vmatpush1.msra.mxu0 0.0
    %322 = vmatprep.subr.mxu0 0.0
    %323 = vmatpush1.msra.mxu0 0.0
    %324 = vmatprep.subr.mxu0 0.0
    %325 = vmatpush1.msra.mxu0 0.0
    %326 = vmatprep.subr.mxu0 0.0
    %327 = vmatpush1.msra.mxu0 0.0
    %328 = vmatprep.mubr.f32.mxu0 0.0
    %329 = vmatmul.mubr.f32.gmra.mrb[0].mxu0 %v259
    %v330 = vpop.f32.mrb[0].mxu0
    %v331 = vadd.f32 %v255, %v330
    %v332 = vpop.f32.mrb[0].mxu0
    %333 = vdwg.mxu0
    %v335 = vlaneseq
    %v336 = vshrl.u32 %v335, 7
    %v337 = vsub.s32 0, %v336
    %v338 = vrot.slane %v63, %v337
    %v340 = vadd.f32 %v331, %v338
    %v341 = vtanh.pop %v340
    %v343 = vsel %vm102, %v101, 0
    %v346 = vsel %vm106, %v60, 0
    %348 = vmatprep.subr.mxu0 0.0
    %349 = vmatpush1.msra.mxu0 %v59
    %350 = vmatprep.subr.mxu0 0.0
    %351 = vmatpush1.msra.mxu0 %v346
    %352 = vmatprep.subr.mxu0 0.0
    %353 = vmatpush1.msra.mxu0 0.0
    %354 = vmatprep.subr.mxu0 0.0
    %355 = vmatpush1.msra.mxu0 0.0
    %356 = vmatprep.subr.mxu0 0.0
    %357 = vmatpush1.msra.mxu0 0.0
    %358 = vmatprep.subr.mxu0 0.0
    %359 = vmatpush1.msra.mxu0 0.0
    %360 = vmatprep.subr.mxu0 0.0
    %361 = vmatpush1.msra.mxu0 0.0
    %362 = vmatprep.subr.mxu0 0.0
    %363 = vmatpush1.msra.mxu0 0.0
    %364 = vmatprep.subr.mxu0 0.0
    %365 = vmatpush1.msra.mxu0 0.0
    %366 = vmatprep.subr.mxu0 0.0
    %367 = vmatpush1.msra.mxu0 0.0
    %368 = vmatprep.subr.mxu0 0.0
    %369 = vmatpush1.msra.mxu0 0.0
    %370 = vmatprep.subr.mxu0 0.0
    %371 = vmatpush1.msra.mxu0 0.0
    %372 = vmatprep.subr.mxu0 0.0
    %373 = vmatpush1.msra.mxu0 0.0
    %374 = vmatprep.subr.mxu0 0.0
    %375 = vmatpush1.msra.mxu0 0.0
    %376 = vmatprep.subr.mxu0 0.0
    %377 = vmatpush1.msra.mxu0 0.0
    %378 = vmatprep.subr.mxu0 0.0
    %379 = vmatpush1.msra.mxu0 0.0
    %380 = vmatprep.subr.mxu0 0.0
    %381 = vmatpush1.msra.mxu0 0.0
    %382 = vmatprep.subr.mxu0 0.0
    %383 = vmatpush1.msra.mxu0 0.0
    %384 = vmatprep.subr.mxu0 0.0
    %385 = vmatpush1.msra.mxu0 0.0
    %386 = vmatprep.subr.mxu0 0.0
    %387 = vmatpush1.msra.mxu0 0.0
    %388 = vmatprep.subr.mxu0 0.0
    %389 = vmatpush1.msra.mxu0 0.0
    %390 = vmatprep.subr.mxu0 0.0
    %391 = vmatpush1.msra.mxu0 0.0
    %392 = vmatprep.subr.mxu0 0.0
    %393 = vmatpush1.msra.mxu0 0.0
    %394 = vmatprep.subr.mxu0 0.0
    %395 = vmatpush1.msra.mxu0 0.0
    %396 = vmatprep.subr.mxu0 0.0
    %397 = vmatpush1.msra.mxu0 0.0
    %398 = vmatprep.subr.mxu0 0.0
    %399 = vmatpush1.msra.mxu0 0.0
    %400 = vmatprep.subr.mxu0 0.0
    %401 = vmatpush1.msra.mxu0 0.0
    %402 = vmatprep.subr.mxu0 0.0
    %403 = vmatpush1.msra.mxu0 0.0
    %404 = vmatprep.subr.mxu0 0.0
    %405 = vmatpush1.msra.mxu0 0.0
    %406 = vmatprep.subr.mxu0 0.0
    %407 = vmatpush1.msra.mxu0 0.0
    %408 = vmatprep.subr.mxu0 0.0
    %409 = vmatpush1.msra.mxu0 0.0
    %410 = vmatprep.subr.mxu0 0.0
    %411 = vmatpush1.msra.mxu0 0.0
    %412 = vmatprep.mubr.f32.mxu0 0.0
    %413 = vmatmul.mubr.f32.gmra.mrb[0].mxu0 %v343
    %v414 = vpop.f32.mrb[0].mxu0
    %v415 = vadd.f32 0.0, %v414
    %v416 = vpop.f32.mrb[0].mxu0
    %417 = vdwg.mxu0
    %v419 = vsel %vm102, %v341, 0
    %v422 = vsel %vm106, %v55, 0
    %424 = vmatprep.subr.mxu0 0.0
    %425 = vmatpush1.msra.mxu0 %v54
    %426 = vmatprep.subr.mxu0 0.0
    %427 = vmatpush1.msra.mxu0 %v422
    %428 = vmatprep.subr.mxu0 0.0
    %429 = vmatpush1.msra.mxu0 0.0
    %430 = vmatprep.subr.mxu0 0.0
    %431 = vmatpush1.msra.mxu0 0.0
    %432 = vmatprep.subr.mxu0 0.0
    %433 = vmatpush1.msra.mxu0 0.0
    %434 = vmatprep.subr.mxu0 0.0
    %435 = vmatpush1.msra.mxu0 0.0
    %436 = vmatprep.subr.mxu0 0.0
    %437 = vmatpush1.msra.mxu0 0.0
    %438 = vmatprep.subr.mxu0 0.0
    %439 = vmatpush1.msra.mxu0 0.0
    %440 = vmatprep.subr.mxu0 0.0
    %441 = vmatpush1.msra.mxu0 0.0
    %442 = vmatprep.subr.mxu0 0.0
    %443 = vmatpush1.msra.mxu0 0.0
    %444 = vmatprep.subr.mxu0 0.0
    %445 = vmatpush1.msra.mxu0 0.0
    %446 = vmatprep.subr.mxu0 0.0
    %447 = vmatpush1.msra.mxu0 0.0
    %448 = vmatprep.subr.mxu0 0.0
    %449 = vmatpush1.msra.mxu0 0.0
    %450 = vmatprep.subr.mxu0 0.0
    %451 = vmatpush1.msra.mxu0 0.0
    %452 = vmatprep.subr.mxu0 0.0
    %453 = vmatpush1.msra.mxu0 0.0
    %454 = vmatprep.subr.mxu0 0.0
    %455 = vmatpush1.msra.mxu0 0.0
    %456 = vmatprep.subr.mxu0 0.0
    %457 = vmatpush1.msra.mxu0 0.0
    %458 = vmatprep.subr.mxu0 0.0
    %459 = vmatpush1.msra.mxu0 0.0
    %460 = vmatprep.subr.mxu0 0.0
    %461 = vmatpush1.msra.mxu0 0.0
    %462 = vmatprep.subr.mxu0 0.0
    %463 = vmatpush1.msra.mxu0 0.0
    %464 = vmatprep.subr.mxu0 0.0
    %465 = vmatpush1.msra.mxu0 0.0
    %466 = vmatprep.subr.mxu0 0.0
    %467 = vmatpush1.msra.mxu0 0.0
    %468 = vmatprep.subr.mxu0 0.0
    %469 = vmatpush1.msra.mxu0 0.0
    %470 = vmatprep.subr.mxu0 0.0
    %471 = vmatpush1.msra.mxu0 0.0
    %472 = vmatprep.subr.mxu0 0.0
    %473 = vmatpush1.msra.mxu0 0.0
    %474 = vmatprep.subr.mxu0 0.0
    %475 = vmatpush1.msra.mxu0 0.0
    %476 = vmatprep.subr.mxu0 0.0
    %477 = vmatpush1.msra.mxu0 0.0
    %478 = vmatprep.subr.mxu0 0.0
    %479 = vmatpush1.msra.mxu0 0.0
    %480 = vmatprep.subr.mxu0 0.0
    %481 = vmatpush1.msra.mxu0 0.0
    %482 = vmatprep.subr.mxu0 0.0
    %483 = vmatpush1.msra.mxu0 0.0
    %484 = vmatprep.subr.mxu0 0.0
    %485 = vmatpush1.msra.mxu0 0.0
    %486 = vmatprep.subr.mxu0 0.0
    %487 = vmatpush1.msra.mxu0 0.0
    %488 = vmatprep.mubr.f32.mxu0 0.0
    %489 = vmatmul.mubr.f32.gmra.mrb[0].mxu0 %v419
    %v490 = vpop.f32.mrb[0].mxu0
    %v491 = vadd.f32 %v415, %v490
    %v492 = vpop.f32.mrb[0].mxu0
    %493 = vdwg.mxu0
    %v495 = vlaneseq
    %v496 = vshrl.u32 %v495, 7
    %v497 = vsub.s32 0, %v496
    %v498 = vrot.slane %v65, %v497
    %v500 = vadd.f32 %v491, %v498
    %v501 = vtanh.pop %v500
    %vm502 = vcmask 115712
    %503 = vst.msk [vmem:[#allocation3] sm:$0x3] %vm502, %v501
    %504 = vmatprep.subr.mxu0 0.0
    %505 = vmatpush1.msra.mxu0 %v49
    %506 = vmatprep.subr.mxu0 0.0
    %507 = vmatpush1.msra.mxu0 %v108
    %508 = vmatprep.subr.mxu0 0.0
    %509 = vmatpush1.msra.mxu0 0.0
    %510 = vmatprep.subr.mxu0 0.0
    %511 = vmatpush1.msra.mxu0 0.0
    %512 = vmatprep.subr.mxu0 0.0
    %513 = vmatpush1.msra.mxu0 0.0
    %514 = vmatprep.subr.mxu0 0.0
    %515 = vmatpush1.msra.mxu0 0.0
    %516 = vmatprep.subr.mxu0 0.0
    %517 = vmatpush1.msra.mxu0 0.0
    %518 = vmatprep.subr.mxu0 0.0
    %519 = vmatpush1.msra.mxu0 0.0
    %520 = vmatprep.subr.mxu0 0.0
    %521 = vmatpush1.msra.mxu0 0.0
    %522 = vmatprep.subr.mxu0 0.0
    %523 = vmatpush1.msra.mxu0 0.0
    %524 = vmatprep.subr.mxu0 0.0
    %525 = vmatpush1.msra.mxu0 0.0
    %526 = vmatprep.subr.mxu0 0.0
    %527 = vmatpush1.msra.mxu0 0.0
    %528 = vmatprep.subr.mxu0 0.0
    %529 = vmatpush1.msra.mxu0 0.0
    %530 = vmatprep.subr.mxu0 0.0
    %531 = vmatpush1.msra.mxu0 0.0
    %532 = vmatprep.subr.mxu0 0.0
    %533 = vmatpush1.msra.mxu0 0.0
    %534 = vmatprep.subr.mxu0 0.0
    %535 = vmatpush1.msra.mxu0 0.0
    %536 = vmatprep.subr.mxu0 0.0
    %537 = vmatpush1.msra.mxu0 0.0
    %538 = vmatprep.subr.mxu0 0.0
    %539 = vmatpush1.msra.mxu0 0.0
    %540 = vmatprep.subr.mxu0 0.0
    %541 = vmatpush1.msra.mxu0 0.0
    %542 = vmatprep.subr.mxu0 0.0
    %543 = vmatpush1.msra.mxu0 0.0
    %544 = vmatprep.subr.mxu0 0.0
    %545 = vmatpush1.msra.mxu0 0.0
    %546 = vmatprep.subr.mxu0 0.0
    %547 = vmatpush1.msra.mxu0 0.0
    %548 = vmatprep.subr.mxu0 0.0
    %549 = vmatpush1.msra.mxu0 0.0
    %550 = vmatprep.subr.mxu0 0.0
    %551 = vmatpush1.msra.mxu0 0.0
    %552 = vmatprep.subr.mxu0 0.0
    %553 = vmatpush1.msra.mxu0 0.0
    %554 = vmatprep.subr.mxu0 0.0
    %555 = vmatpush1.msra.mxu0 0.0
    %556 = vmatprep.subr.mxu0 0.0
    %557 = vmatpush1.msra.mxu0 0.0
    %558 = vmatprep.subr.mxu0 0.0
    %559 = vmatpush1.msra.mxu0 0.0
    %560 = vmatprep.subr.mxu0 0.0
    %561 = vmatpush1.msra.mxu0 0.0
    %562 = vmatprep.subr.mxu0 0.0
    %563 = vmatpush1.msra.mxu0 0.0
    %564 = vmatprep.subr.mxu0 0.0
    %565 = vmatpush1.msra.mxu0 0.0
    %566 = vmatprep.subr.mxu0 0.0
    %567 = vmatpush1.msra.mxu0 0.0
    %568 = vmatprep.mubr.f32.mxu0 0.0
    %569 = vmatmul.mubr.f32.gmra.mrb[0].mxu0 %v259
    %v570 = vpop.f32.mrb[0].mxu0
    %v571 = vadd.f32 0.0, %v570
    %v572 = vpop.f32.mrb[0].mxu0
    %573 = vdwg.mxu0
    %v575 = vrot.slane %v571, 6
    %v577 = vadd.f32 %v95, %v575
    %v578 = vtanh.pop %v577
    %579 = vmatprep.subr.mxu0 0.0
    %580 = vmatpush1.msra.mxu0 %v56
    %581 = vmatprep.subr.mxu0 0.0
    %582 = vmatpush1.msra.mxu0 %v186
    %583 = vmatprep.subr.mxu0 0.0
    %584 = vmatpush1.msra.mxu0 0.0
    %585 = vmatprep.subr.mxu0 0.0
    %586 = vmatpush1.msra.mxu0 0.0
    %587 = vmatprep.subr.mxu0 0.0
    %588 = vmatpush1.msra.mxu0 0.0
    %589 = vmatprep.subr.mxu0 0.0
    %590 = vmatpush1.msra.mxu0 0.0
    %591 = vmatprep.subr.mxu0 0.0
    %592 = vmatpush1.msra.mxu0 0.0
    %593 = vmatprep.subr.mxu0 0.0
    %594 = vmatpush1.msra.mxu0 0.0
    %595 = vmatprep.subr.mxu0 0.0
    %596 = vmatpush1.msra.mxu0 0.0
    %597 = vmatprep.subr.mxu0 0.0
    %598 = vmatpush1.msra.mxu0 0.0
    %599 = vmatprep.subr.mxu0 0.0
    %600 = vmatpush1.msra.mxu0 0.0
    %601 = vmatprep.subr.mxu0 0.0
    %602 = vmatpush1.msra.mxu0 0.0
    %603 = vmatprep.subr.mxu0 0.0
    %604 = vmatpush1.msra.mxu0 0.0
    %605 = vmatprep.subr.mxu0 0.0
    %606 = vmatpush1.msra.mxu0 0.0
    %607 = vmatprep.subr.mxu0 0.0
    %608 = vmatpush1.msra.mxu0 0.0
    %609 = vmatprep.subr.mxu0 0.0
    %610 = vmatpush1.msra.mxu0 0.0
    %611 = vmatprep.subr.mxu0 0.0
    %612 = vmatpush1.msra.mxu0 0.0
    %613 = vmatprep.subr.mxu0 0.0
    %614 = vmatpush1.msra.mxu0 0.0
    %615 = vmatprep.subr.mxu0 0.0
    %616 = vmatpush1.msra.mxu0 0.0
    %617 = vmatprep.subr.mxu0 0.0
    %618 = vmatpush1.msra.mxu0 0.0
    %619 = vmatprep.subr.mxu0 0.0
    %620 = vmatpush1.msra.mxu0 0.0
    %621 = vmatprep.subr.mxu0 0.0
    %622 = vmatpush1.msra.mxu0 0.0
    %623 = vmatprep.subr.mxu0 0.0
    %624 = vmatpush1.msra.mxu0 0.0
    %625 = vmatprep.subr.mxu0 0.0
    %626 = vmatpush1.msra.mxu0 0.0
    %627 = vmatprep.subr.mxu0 0.0
    %628 = vmatpush1.msra.mxu0 0.0
    %629 = vmatprep.subr.mxu0 0.0
    %630 = vmatpush1.msra.mxu0 0.0
    %631 = vmatprep.subr.mxu0 0.0
    %632 = vmatpush1.msra.mxu0 0.0
    %633 = vmatprep.subr.mxu0 0.0
    %634 = vmatpush1.msra.mxu0 0.0
    %635 = vmatprep.subr.mxu0 0.0
    %636 = vmatpush1.msra.mxu0 0.0
    %637 = vmatprep.subr.mxu0 0.0
    %638 = vmatpush1.msra.mxu0 0.0
    %639 = vmatprep.subr.mxu0 0.0
    %640 = vmatpush1.msra.mxu0 0.0
    %641 = vmatprep.subr.mxu0 0.0
    %642 = vmatpush1.msra.mxu0 0.0
    %643 = vmatprep.mubr.f32.mxu0 0.0
    %644 = vmatmul.mubr.f32.gmra.mrb[0].mxu0 %v419
    %v645 = vpop.f32.mrb[0].mxu0
    %v646 = vadd.f32 0.0, %v645
    %v647 = vpop.f32.mrb[0].mxu0
    %648 = vdwg.mxu0
    %v650 = vrot.slane %v578, 2
    %v651 = vsel %vm102, %v650, 0
    %653 = vmatprep.subr.mxu0 0.0
    %654 = vmatpush1.msra.mxu0 %v51
    %655 = vmatprep.subr.mxu0 0.0
    %656 = vmatpush1.msra.mxu0 %v262
    %657 = vmatprep.subr.mxu0 0.0
    %658 = vmatpush1.msra.mxu0 0.0
    %659 = vmatprep.subr.mxu0 0.0
    %660 = vmatpush1.msra.mxu0 0.0
    %661 = vmatprep.subr.mxu0 0.0
    %662 = vmatpush1.msra.mxu0 0.0
    %663 = vmatprep.subr.mxu0 0.0
    %664 = vmatpush1.msra.mxu0 0.0
    %665 = vmatprep.subr.mxu0 0.0
    %666 = vmatpush1.msra.mxu0 0.0
    %667 = vmatprep.subr.mxu0 0.0
    %668 = vmatpush1.msra.mxu0 0.0
    %669 = vmatprep.subr.mxu0 0.0
    %670 = vmatpush1.msra.mxu0 0.0
    %671 = vmatprep.subr.mxu0 0.0
    %672 = vmatpush1.msra.mxu0 0.0
    %673 = vmatprep.subr.mxu0 0.0
    %674 = vmatpush1.msra.mxu0 0.0
    %675 = vmatprep.subr.mxu0 0.0
    %676 = vmatpush1.msra.mxu0 0.0
    %677 = vmatprep.subr.mxu0 0.0
    %678 = vmatpush1.msra.mxu0 0.0
    %679 = vmatprep.subr.mxu0 0.0
    %680 = vmatpush1.msra.mxu0 0.0
    %681 = vmatprep.subr.mxu0 0.0
    %682 = vmatpush1.msra.mxu0 0.0
    %683 = vmatprep.subr.mxu0 0.0
    %684 = vmatpush1.msra.mxu0 0.0
    %685 = vmatprep.subr.mxu0 0.0
    %686 = vmatpush1.msra.mxu0 0.0
    %687 = vmatprep.subr.mxu0 0.0
    %688 = vmatpush1.msra.mxu0 0.0
    %689 = vmatprep.subr.mxu0 0.0
    %690 = vmatpush1.msra.mxu0 0.0
    %691 = vmatprep.subr.mxu0 0.0
    %692 = vmatpush1.msra.mxu0 0.0
    %693 = vmatprep.subr.mxu0 0.0
    %694 = vmatpush1.msra.mxu0 0.0
    %695 = vmatprep.subr.mxu0 0.0
    %696 = vmatpush1.msra.mxu0 0.0
    %697 = vmatprep.subr.mxu0 0.0
    %698 = vmatpush1.msra.mxu0 0.0
    %699 = vmatprep.subr.mxu0 0.0
    %700 = vmatpush1.msra.mxu0 0.0
    %701 = vmatprep.subr.mxu0 0.0
    %702 = vmatpush1.msra.mxu0 0.0
    %703 = vmatprep.subr.mxu0 0.0
    %704 = vmatpush1.msra.mxu0 0.0
    %705 = vmatprep.subr.mxu0 0.0
    %706 = vmatpush1.msra.mxu0 0.0
    %707 = vmatprep.subr.mxu0 0.0
    %708 = vmatpush1.msra.mxu0 0.0
    %709 = vmatprep.subr.mxu0 0.0
    %710 = vmatpush1.msra.mxu0 0.0
    %711 = vmatprep.subr.mxu0 0.0
    %712 = vmatpush1.msra.mxu0 0.0
    %713 = vmatprep.subr.mxu0 0.0
    %714 = vmatpush1.msra.mxu0 0.0
    %715 = vmatprep.subr.mxu0 0.0
    %716 = vmatpush1.msra.mxu0 0.0
    %717 = vmatprep.mubr.f32.mxu0 0.0
    %718 = vmatmul.mubr.f32.gmra.mrb[0].mxu0 %v651
    %v719 = vpop.f32.mrb[0].mxu0
    %v720 = vadd.f32 %v646, %v719
    %v721 = vpop.f32.mrb[0].mxu0
    %722 = vdwg.mxu0
    %v723 = vadd.f32 %v720, %v338
    %v724 = vtanh.pop %v723
    %v726 = vsel %vm102, %v501, 0
    %728 = vmatprep.subr.mxu0 0.0
    %729 = vmatpush1.msra.mxu0 %v59
    %730 = vmatprep.subr.mxu0 0.0
    %731 = vmatpush1.msra.mxu0 %v346
    %732 = vmatprep.subr.mxu0 0.0
    %733 = vmatpush1.msra.mxu0 0.0
    %734 = vmatprep.subr.mxu0 0.0
    %735 = vmatpush1.msra.mxu0 0.0
    %736 = vmatprep.subr.mxu0 0.0
    %737 = vmatpush1.msra.mxu0 0.0
    %738 = vmatprep.subr.mxu0 0.0
    %739 = vmatpush1.msra.mxu0 0.0
    %740 = vmatprep.subr.mxu0 0.0
    %741 = vmatpush1.msra.mxu0 0.0
    %742 = vmatprep.subr.mxu0 0.0
    %743 = vmatpush1.msra.mxu0 0.0
    %744 = vmatprep.subr.mxu0 0.0
    %745 = vmatpush1.msra.mxu0 0.0
    %746 = vmatprep.subr.mxu0 0.0
    %747 = vmatpush1.msra.mxu0 0.0
    %748 = vmatprep.subr.mxu0 0.0
    %749 = vmatpush1.msra.mxu0 0.0
    %750 = vmatprep.subr.mxu0 0.0
    %751 = vmatpush1.msra.mxu0 0.0
    %752 = vmatprep.subr.mxu0 0.0
    %753 = vmatpush1.msra.mxu0 0.0
    %754 = vmatprep.subr.mxu0 0.0
    %755 = vmatpush1.msra.mxu0 0.0
    %756 = vmatprep.subr.mxu0 0.0
    %757 = vmatpush1.msra.mxu0 0.0
    %758 = vmatprep.subr.mxu0 0.0
    %759 = vmatpush1.msra.mxu0 0.0
    %760 = vmatprep.subr.mxu0 0.0
    %761 = vmatpush1.msra.mxu0 0.0
    %762 = vmatprep.subr.mxu0 0.0
    %763 = vmatpush1.msra.mxu0 0.0
    %764 = vmatprep.subr.mxu0 0.0
    %765 = vmatpush1.msra.mxu0 0.0
    %766 = vmatprep.subr.mxu0 0.0
    %767 = vmatpush1.msra.mxu0 0.0
    %768 = vmatprep.subr.mxu0 0.0
    %769 = vmatpush1.msra.mxu0 0.0
    %770 = vmatprep.subr.mxu0 0.0
    %771 = vmatpush1.msra.mxu0 0.0
    %772 = vmatprep.subr.mxu0 0.0
    %773 = vmatpush1.msra.mxu0 0.0
    %774 = vmatprep.subr.mxu0 0.0
    %775 = vmatpush1.msra.mxu0 0.0
    %776 = vmatprep.subr.mxu0 0.0
    %777 = vmatpush1.msra.mxu0 0.0
    %778 = vmatprep.subr.mxu0 0.0
    %779 = vmatpush1.msra.mxu0 0.0
    %780 = vmatprep.subr.mxu0 0.0
    %781 = vmatpush1.msra.mxu0 0.0
    %782 = vmatprep.subr.mxu0 0.0
    %783 = vmatpush1.msra.mxu0 0.0
    %784 = vmatprep.subr.mxu0 0.0
    %785 = vmatpush1.msra.mxu0 0.0
    %786 = vmatprep.subr.mxu0 0.0
    %787 = vmatpush1.msra.mxu0 0.0
    %788 = vmatprep.subr.mxu0 0.0
    %789 = vmatpush1.msra.mxu0 0.0
    %790 = vmatprep.subr.mxu0 0.0
    %791 = vmatpush1.msra.mxu0 0.0
    %792 = vmatprep.mubr.f32.mxu0 0.0
    %793 = vmatmul.mubr.f32.gmra.mrb[0].mxu0 %v726
    %v794 = vpop.f32.mrb[0].mxu0
    %v795 = vadd.f32 0.0, %v794
    %v796 = vpop.f32.mrb[0].mxu0
    %797 = vdwg.mxu0
    %v799 = vsel %vm102, %v724, 0
    %801 = vmatprep.subr.mxu0 0.0
    %802 = vmatpush1.msra.mxu0 %v54
    %803 = vmatprep.subr.mxu0 0.0
    %804 = vmatpush1.msra.mxu0 %v422
    %805 = vmatprep.subr.mxu0 0.0
    %806 = vmatpush1.msra.mxu0 0.0
    %807 = vmatprep.subr.mxu0 0.0
    %808 = vmatpush1.msra.mxu0 0.0
    %809 = vmatprep.subr.mxu0 0.0
    %810 = vmatpush1.msra.mxu0 0.0
    %811 = vmatprep.subr.mxu0 0.0
    %812 = vmatpush1.msra.mxu0 0.0
    %813 = vmatprep.subr.mxu0 0.0
    %814 = vmatpush1.msra.mxu0 0.0
    %815 = vmatprep.subr.mxu0 0.0
    %816 = vmatpush1.msra.mxu0 0.0
    %817 = vmatprep.subr.mxu0 0.0
    %818 = vmatpush1.msra.mxu0 0.0
    %819 = vmatprep.subr.mxu0 0.0
    %820 = vmatpush1.msra.mxu0 0.0
    %821 = vmatprep.subr.mxu0 0.0
    %822 = vmatpush1.msra.mxu0 0.0
    %823 = vmatprep.subr.mxu0 0.0
    %824 = vmatpush1.msra.mxu0 0.0
    %825 = vmatprep.subr.mxu0 0.0
    %826 = vmatpush1.msra.mxu0 0.0
    %827 = vmatprep.subr.mxu0 0.0
    %828 = vmatpush1.msra.mxu0 0.0
    %829 = vmatprep.subr.mxu0 0.0
    %830 = vmatpush1.msra.mxu0 0.0
    %831 = vmatprep.subr.mxu0 0.0
    %832 = vmatpush1.msra.mxu0 0.0
    %833 = vmatprep.subr.mxu0 0.0
    %834 = vmatpush1.msra.mxu0 0.0
    %835 = vmatprep.subr.mxu0 0.0
    %836 = vmatpush1.msra.mxu0 0.0
    %837 = vmatprep.subr.mxu0 0.0
    %838 = vmatpush1.msra.mxu0 0.0
    %839 = vmatprep.subr.mxu0 0.0
    %840 = vmatpush1.msra.mxu0 0.0
    %841 = vmatprep.subr.mxu0 0.0
    %842 = vmatpush1.msra.mxu0 0.0
    %843 = vmatprep.subr.mxu0 0.0
    %844 = vmatpush1.msra.mxu0 0.0
    %845 = vmatprep.subr.mxu0 0.0
    %846 = vmatpush1.msra.mxu0 0.0
    %847 = vmatprep.subr.mxu0 0.0
    %848 = vmatpush1.msra.mxu0 0.0
    %849 = vmatprep.subr.mxu0 0.0
    %850 = vmatpush1.msra.mxu0 0.0
    %851 = vmatprep.subr.mxu0 0.0
    %852 = vmatpush1.msra.mxu0 0.0
    %853 = vmatprep.subr.mxu0 0.0
    %854 = vmatpush1.msra.mxu0 0.0
    %855 = vmatprep.subr.mxu0 0.0
    %856 = vmatpush1.msra.mxu0 0.0
    %857 = vmatprep.subr.mxu0 0.0
    %858 = vmatpush1.msra.mxu0 0.0
    %859 = vmatprep.subr.mxu0 0.0
    %860 = vmatpush1.msra.mxu0 0.0
    %861 = vmatprep.subr.mxu0 0.0
    %862 = vmatpush1.msra.mxu0 0.0
    %863 = vmatprep.subr.mxu0 0.0
    %864 = vmatpush1.msra.mxu0 0.0
    %865 = vmatprep.mubr.f32.mxu0 0.0
    %866 = vmatmul.mubr.f32.gmra.mrb[0].mxu0 %v799
    %v867 = vpop.f32.mrb[0].mxu0
    %v868 = vadd.f32 %v795, %v867
    %v869 = vpop.f32.mrb[0].mxu0
    %870 = vdwg.mxu0
    %v871 = vadd.f32 %v868, %v498
    %v872 = vtanh.pop %v871
    %873 = vst.msk [vmem:[#allocation3 + $0x2] sm:$0x3] %vm502, %v872
    %874 = vmatprep.subr.mxu0 0.0
    %875 = vmatpush1.msra.mxu0 %v49
    %876 = vmatprep.subr.mxu0 0.0
    %877 = vmatpush1.msra.mxu0 %v108
    %878 = vmatprep.subr.mxu0 0.0
    %879 = vmatpush1.msra.mxu0 0.0
    %880 = vmatprep.subr.mxu0 0.0
    %881 = vmatpush1.msra.mxu0 0.0
    %882 = vmatprep.subr.mxu0 0.0
    %883 = vmatpush1.msra.mxu0 0.0
    %884 = vmatprep.subr.mxu0 0.0
    %885 = vmatpush1.msra.mxu0 0.0
    %886 = vmatprep.subr.mxu0 0.0
    %887 = vmatpush1.msra.mxu0 0.0
    %888 = vmatprep.subr.mxu0 0.0
    %889 = vmatpush1.msra.mxu0 0.0
    %890 = vmatprep.subr.mxu0 0.0
    %891 = vmatpush1.msra.mxu0 0.0
    %892 = vmatprep.subr.mxu0 0.0
    %893 = vmatpush1.msra.mxu0 0.0
    %894 = vmatprep.subr.mxu0 0.0
    %895 = vmatpush1.msra.mxu0 0.0
    %896 = vmatprep.subr.mxu0 0.0
    %897 = vmatpush1.msra.mxu0 0.0
    %898 = vmatprep.subr.mxu0 0.0
    %899 = vmatpush1.msra.mxu0 0.0
    %900 = vmatprep.subr.mxu0 0.0
    %901 = vmatpush1.msra.mxu0 0.0
    %902 = vmatprep.subr.mxu0 0.0
    %903 = vmatpush1.msra.mxu0 0.0
    %904 = vmatprep.subr.mxu0 0.0
    %905 = vmatpush1.msra.mxu0 0.0
    %906 = vmatprep.subr.mxu0 0.0
    %907 = vmatpush1.msra.mxu0 0.0
    %908 = vmatprep.subr.mxu0 0.0
    %909 = vmatpush1.msra.mxu0 0.0
    %910 = vmatprep.subr.mxu0 0.0
    %911 = vmatpush1.msra.mxu0 0.0
    %912 = vmatprep.subr.mxu0 0.0
    %913 = vmatpush1.msra.mxu0 0.0
    %914 = vmatprep.subr.mxu0 0.0
    %915 = vmatpush1.msra.mxu0 0.0
    %916 = vmatprep.subr.mxu0 0.0
    %917 = vmatpush1.msra.mxu0 0.0
    %918 = vmatprep.subr.mxu0 0.0
    %919 = vmatpush1.msra.mxu0 0.0
    %920 = vmatprep.subr.mxu0 0.0
    %921 = vmatpush1.msra.mxu0 0.0
    %922 = vmatprep.subr.mxu0 0.0
    %923 = vmatpush1.msra.mxu0 0.0
    %924 = vmatprep.subr.mxu0 0.0
    %925 = vmatpush1.msra.mxu0 0.0
    %926 = vmatprep.subr.mxu0 0.0
    %927 = vmatpush1.msra.mxu0 0.0
    %928 = vmatprep.subr.mxu0 0.0
    %929 = vmatpush1.msra.mxu0 0.0
    %930 = vmatprep.subr.mxu0 0.0
    %931 = vmatpush1.msra.mxu0 0.0
    %932 = vmatprep.subr.mxu0 0.0
    %933 = vmatpush1.msra.mxu0 0.0
    %934 = vmatprep.subr.mxu0 0.0
    %935 = vmatpush1.msra.mxu0 0.0
    %936 = vmatprep.subr.mxu0 0.0
    %937 = vmatpush1.msra.mxu0 0.0
    %938 = vmatprep.mubr.f32.mxu0 0.0
    %939 = vmatmul.mubr.f32.gmra.mrb[0].mxu0 %v651
    %v940 = vpop.f32.mrb[0].mxu0
    %v941 = vadd.f32 0.0, %v940
    %v942 = vpop.f32.mrb[0].mxu0
    %943 = vdwg.mxu0
    %v945 = vrot.slane %v941, 4
    %v947 = vadd.f32 %v95, %v945
    %v948 = vtanh.pop %v947
    %949 = vmatprep.subr.mxu0 0.0
    %950 = vmatpush1.msra.mxu0 %v56
    %951 = vmatprep.subr.mxu0 0.0
    %952 = vmatpush1.msra.mxu0 %v186
    %953 = vmatprep.subr.mxu0 0.0
    %954 = vmatpush1.msra.mxu0 0.0
    %955 = vmatprep.subr.mxu0 0.0
    %956 = vmatpush1.msra.mxu0 0.0
    %957 = vmatprep.subr.mxu0 0.0
    %958 = vmatpush1.msra.mxu0 0.0
    %959 = vmatprep.subr.mxu0 0.0
    %960 = vmatpush1.msra.mxu0 0.0
    %961 = vmatprep.subr.mxu0 0.0
    %962 = vmatpush1.msra.mxu0 0.0
    %963 = vmatprep.subr.mxu0 0.0
    %964 = vmatpush1.msra.mxu0 0.0
    %965 = vmatprep.subr.mxu0 0.0
    %966 = vmatpush1.msra.mxu0 0.0
    %967 = vmatprep.subr.mxu0 0.0
    %968 = vmatpush1.msra.mxu0 0.0
    %969 = vmatprep.subr.mxu0 0.0
    %970 = vmatpush1.msra.mxu0 0.0
    %971 = vmatprep.subr.mxu0 0.0
    %972 = vmatpush1.msra.mxu0 0.0
    %973 = vmatprep.subr.mxu0 0.0
    %974 = vmatpush1.msra.mxu0 0.0
    %975 = vmatprep.subr.mxu0 0.0
    %976 = vmatpush1.msra.mxu0 0.0
    %977 = vmatprep.subr.mxu0 0.0
    %978 = vmatpush1.msra.mxu0 0.0
    %979 = vmatprep.subr.mxu0 0.0
    %980 = vmatpush1.msra.mxu0 0.0
    %981 = vmatprep.subr.mxu0 0.0
    %982 = vmatpush1.msra.mxu0 0.0
    %983 = vmatprep.subr.mxu0 0.0
    %984 = vmatpush1.msra.mxu0 0.0
    %985 = vmatprep.subr.mxu0 0.0
    %986 = vmatpush1.msra.mxu0 0.0
    %987 = vmatprep.subr.mxu0 0.0
    %988 = vmatpush1.msra.mxu0 0.0
    %989 = vmatprep.subr.mxu0 0.0
    %990 = vmatpush1.msra.mxu0 0.0
    %991 = vmatprep.subr.mxu0 0.0
    %992 = vmatpush1.msra.mxu0 0.0
    %993 = vmatprep.subr.mxu0 0.0
    %994 = vmatpush1.msra.mxu0 0.0
    %995 = vmatprep.subr.mxu0 0.0
    %996 = vmatpush1.msra.mxu0 0.0
    %997 = vmatprep.subr.mxu0 0.0
    %998 = vmatpush1.msra.mxu0 0.0
    %999 = vmatprep.subr.mxu0 0.0
    %1000 = vmatpush1.msra.mxu0 0.0
    %1001 = vmatprep.subr.mxu0 0.0
    %1002 = vmatpush1.msra.mxu0 0.0
    %1003 = vmatprep.subr.mxu0 0.0
    %1004 = vmatpush1.msra.mxu0 0.0
    %1005 = vmatprep.subr.mxu0 0.0
    %1006 = vmatpush1.msra.mxu0 0.0
    %1007 = vmatprep.subr.mxu0 0.0
    %1008 = vmatpush1.msra.mxu0 0.0
    %1009 = vmatprep.subr.mxu0 0.0
    %1010 = vmatpush1.msra.mxu0 0.0
    %1011 = vmatprep.subr.mxu0 0.0
    %1012 = vmatpush1.msra.mxu0 0.0
    %1013 = vmatprep.mubr.f32.mxu0 0.0
    %1014 = vmatmul.mubr.f32.gmra.mrb[0].mxu0 %v799
    %v1015 = vpop.f32.mrb[0].mxu0
    %v1016 = vadd.f32 0.0, %v1015
    %v1017 = vpop.f32.mrb[0].mxu0
    %1018 = vdwg.mxu0
    %v1020 = vrot.slane %v948, 4
    %v1021 = vsel %vm102, %v1020, 0
    %1023 = vmatprep.subr.mxu0 0.0
    %1024 = vmatpush1.msra.mxu0 %v51
    %1025 = vmatprep.subr.mxu0 0.0
    %1026 = vmatpush1.msra.mxu0 %v262
    %1027 = vmatprep.subr.mxu0 0.0
    %1028 = vmatpush1.msra.mxu0 0.0
    %1029 = vmatprep.subr.mxu0 0.0
    %1030 = vmatpush1.msra.mxu0 0.0
    %1031 = vmatprep.subr.mxu0 0.0
    %1032 = vmatpush1.msra.mxu0 0.0
    %1033 = vmatprep.subr.mxu0 0.0
    %1034 = vmatpush1.msra.mxu0 0.0
    %1035 = vmatprep.subr.mxu0 0.0
    %1036 = vmatpush1.msra.mxu0 0.0
    %1037 = vmatprep.subr.mxu0 0.0
    %1038 = vmatpush1.msra.mxu0 0.0
    %1039 = vmatprep.subr.mxu0 0.0
    %1040 = vmatpush1.msra.mxu0 0.0
    %1041 = vmatprep.subr.mxu0 0.0
    %1042 = vmatpush1.msra.mxu0 0.0
    %1043 = vmatprep.subr.mxu0 0.0
    %1044 = vmatpush1.msra.mxu0 0.0
    %1045 = vmatprep.subr.mxu0 0.0
    %1046 = vmatpush1.msra.mxu0 0.0
    %1047 = vmatprep.subr.mxu0 0.0
    %1048 = vmatpush1.msra.mxu0 0.0
    %1049 = vmatprep.subr.mxu0 0.0
    %1050 = vmatpush1.msra.mxu0 0.0
    %1051 = vmatprep.subr.mxu0 0.0
    %1052 = vmatpush1.msra.mxu0 0.0
    %1053 = vmatprep.subr.mxu0 0.0
    %1054 = vmatpush1.msra.mxu0 0.0
    %1055 = vmatprep.subr.mxu0 0.0
    %1056 = vmatpush1.msra.mxu0 0.0
    %1057 = vmatprep.subr.mxu0 0.0
    %1058 = vmatpush1.msra.mxu0 0.0
    %1059 = vmatprep.subr.mxu0 0.0
    %1060 = vmatpush1.msra.mxu0 0.0
    %1061 = vmatprep.subr.mxu0 0.0
    %1062 = vmatpush1.msra.mxu0 0.0
    %1063 = vmatprep.subr.mxu0 0.0
    %1064 = vmatpush1.msra.mxu0 0.0
    %1065 = vmatprep.subr.mxu0 0.0
    %1066 = vmatpush1.msra.mxu0 0.0
    %1067 = vmatprep.subr.mxu0 0.0
    %1068 = vmatpush1.msra.mxu0 0.0
    %1069 = vmatprep.subr.mxu0 0.0
    %1070 = vmatpush1.msra.mxu0 0.0
    %1071 = vmatprep.subr.mxu0 0.0
    %1072 = vmatpush1.msra.mxu0 0.0
    %1073 = vmatprep.subr.mxu0 0.0
    %1074 = vmatpush1.msra.mxu0 0.0
    %1075 = vmatprep.subr.mxu0 0.0
    %1076 = vmatpush1.msra.mxu0 0.0
    %1077 = vmatprep.subr.mxu0 0.0
    %1078 = vmatpush1.msra.mxu0 0.0
    %1079 = vmatprep.subr.mxu0 0.0
    %1080 = vmatpush1.msra.mxu0 0.0
    %1081 = vmatprep.subr.mxu0 0.0
    %1082 = vmatpush1.msra.mxu0 0.0
    %1083 = vmatprep.subr.mxu0 0.0
    %1084 = vmatpush1.msra.mxu0 0.0
    %1085 = vmatprep.subr.mxu0 0.0
    %1086 = vmatpush1.msra.mxu0 0.0
    %1087 = vmatprep.mubr.f32.mxu0 0.0
    %1088 = vmatmul.mubr.f32.gmra.mrb[0].mxu0 %v1021
    %v1089 = vpop.f32.mrb[0].mxu0
    %v1090 = vadd.f32 %v1016, %v1089
    %v1091 = vpop.f32.mrb[0].mxu0
    %1092 = vdwg.mxu0
    %v1093 = vadd.f32 %v1090, %v338
    %v1094 = vtanh.pop %v1093
    %v1096 = vsel %vm102, %v872, 0
    %1098 = vmatprep.subr.mxu0 0.0
    %1099 = vmatpush1.msra.mxu0 %v59
    %1100 = vmatprep.subr.mxu0 0.0
    %1101 = vmatpush1.msra.mxu0 %v346
    %1102 = vmatprep.subr.mxu0 0.0
    %1103 = vmatpush1.msra.mxu0 0.0
    %1104 = vmatprep.subr.mxu0 0.0
    %1105 = vmatpush1.msra.mxu0 0.0
    %1106 = vmatprep.subr.mxu0 0.0
    %1107 = vmatpush1.msra.mxu0 0.0
    %1108 = vmatprep.subr.mxu0 0.0
    %1109 = vmatpush1.msra.mxu0 0.0
    %1110 = vmatprep.subr.mxu0 0.0
    %1111 = vmatpush1.msra.mxu0 0.0
    %1112 = vmatprep.subr.mxu0 0.0
    %1113 = vmatpush1.msra.mxu0 0.0
    %1114 = vmatprep.subr.mxu0 0.0
    %1115 = vmatpush1.msra.mxu0 0.0
    %1116 = vmatprep.subr.mxu0 0.0
    %1117 = vmatpush1.msra.mxu0 0.0
    %1118 = vmatprep.subr.mxu0 0.0
    %1119 = vmatpush1.msra.mxu0 0.0
    %1120 = vmatprep.subr.mxu0 0.0
    %1121 = vmatpush1.msra.mxu0 0.0
    %1122 = vmatprep.subr.mxu0 0.0
    %1123 = vmatpush1.msra.mxu0 0.0
    %1124 = vmatprep.subr.mxu0 0.0
    %1125 = vmatpush1.msra.mxu0 0.0
    %1126 = vmatprep.subr.mxu0 0.0
    %1127 = vmatpush1.msra.mxu0 0.0
    %1128 = vmatprep.subr.mxu0 0.0
    %1129 = vmatpush1.msra.mxu0 0.0
    %1130 = vmatprep.subr.mxu0 0.0
    %1131 = vmatpush1.msra.mxu0 0.0
    %1132 = vmatprep.subr.mxu0 0.0
    %1133 = vmatpush1.msra.mxu0 0.0
    %1134 = vmatprep.subr.mxu0 0.0
    %1135 = vmatpush1.msra.mxu0 0.0
    %1136 = vmatprep.subr.mxu0 0.0
    %1137 = vmatpush1.msra.mxu0 0.0
    %1138 = vmatprep.subr.mxu0 0.0
    %1139 = vmatpush1.msra.mxu0 0.0
    %1140 = vmatprep.subr.mxu0 0.0
    %1141 = vmatpush1.msra.mxu0 0.0
    %1142 = vmatprep.subr.mxu0 0.0
    %1143 = vmatpush1.msra.mxu0 0.0
    %1144 = vmatprep.subr.mxu0 0.0
    %1145 = vmatpush1.msra.mxu0 0.0
    %1146 = vmatprep.subr.mxu0 0.0
    %1147 = vmatpush1.msra.mxu0 0.0
    %1148 = vmatprep.subr.mxu0 0.0
    %1149 = vmatpush1.msra.mxu0 0.0
    %1150 = vmatprep.subr.mxu0 0.0
    %1151 = vmatpush1.msra.mxu0 0.0
    %1152 = vmatprep.subr.mxu0 0.0
    %1153 = vmatpush1.msra.mxu0 0.0
    %1154 = vmatprep.subr.mxu0 0.0
    %1155 = vmatpush1.msra.mxu0 0.0
    %1156 = vmatprep.subr.mxu0 0.0
    %1157 = vmatpush1.msra.mxu0 0.0
    %1158 = vmatprep.subr.mxu0 0.0
    %1159 = vmatpush1.msra.mxu0 0.0
    %1160 = vmatprep.subr.mxu0 0.0
    %1161 = vmatpush1.msra.mxu0 0.0
    %1162 = vmatprep.mubr.f32.mxu0 0.0
    %1163 = vmatmul.mubr.f32.gmra.mrb[0].mxu0 %v1096
    %v1164 = vpop.f32.mrb[0].mxu0
    %v1165 = vadd.f32 0.0, %v1164
    %v1166 = vpop.f32.mrb[0].mxu0
    %1167 = vdwg.mxu0
    %v1169 = vsel %vm102, %v1094, 0
    %1171 = vmatprep.subr.mxu0 0.0
    %1172 = vmatpush1.msra.mxu0 %v54
    %1173 = vmatprep.subr.mxu0 0.0
    %1174 = vmatpush1.msra.mxu0 %v422
    %1175 = vmatprep.subr.mxu0 0.0
    %1176 = vmatpush1.msra.mxu0 0.0
    %1177 = vmatprep.subr.mxu0 0.0
    %1178 = vmatpush1.msra.mxu0 0.0
    %1179 = vmatprep.subr.mxu0 0.0
    %1180 = vmatpush1.msra.mxu0 0.0
    %1181 = vmatprep.subr.mxu0 0.0
    %1182 = vmatpush1.msra.mxu0 0.0
    %1183 = vmatprep.subr.mxu0 0.0
    %1184 = vmatpush1.msra.mxu0 0.0
    %1185 = vmatprep.subr.mxu0 0.0
    %1186 = vmatpush1.msra.mxu0 0.0
    %1187 = vmatprep.subr.mxu0 0.0
    %1188 = vmatpush1.msra.mxu0 0.0
    %1189 = vmatprep.subr.mxu0 0.0
    %1190 = vmatpush1.msra.mxu0 0.0
    %1191 = vmatprep.subr.mxu0 0.0
    %1192 = vmatpush1.msra.mxu0 0.0
    %1193 = vmatprep.subr.mxu0 0.0
    %1194 = vmatpush1.msra.mxu0 0.0
    %1195 = vmatprep.subr.mxu0 0.0
    %1196 = vmatpush1.msra.mxu0 0.0
    %1197 = vmatprep.subr.mxu0 0.0
    %1198 = vmatpush1.msra.mxu0 0.0
    %1199 = vmatprep.subr.mxu0 0.0
    %1200 = vmatpush1.msra.mxu0 0.0
    %1201 = vmatprep.subr.mxu0 0.0
    %1202 = vmatpush1.msra.mxu0 0.0
    %1203 = vmatprep.subr.mxu0 0.0
    %1204 = vmatpush1.msra.mxu0 0.0
    %1205 = vmatprep.subr.mxu0 0.0
    %1206 = vmatpush1.msra.mxu0 0.0
    %1207 = vmatprep.subr.mxu0 0.0
    %1208 = vmatpush1.msra.mxu0 0.0
    %1209 = vmatprep.subr.mxu0 0.0
    %1210 = vmatpush1.msra.mxu0 0.0
    %1211 = vmatprep.subr.mxu0 0.0
    %1212 = vmatpush1.msra.mxu0 0.0
    %1213 = vmatprep.subr.mxu0 0.0
    %1214 = vmatpush1.msra.mxu0 0.0
    %1215 = vmatprep.subr.mxu0 0.0
    %1216 = vmatpush1.msra.mxu0 0.0
    %1217 = vmatprep.subr.mxu0 0.0
    %1218 = vmatpush1.msra.mxu0 0.0
    %1219 = vmatprep.subr.mxu0 0.0
    %1220 = vmatpush1.msra.mxu0 0.0
    %1221 = vmatprep.subr.mxu0 0.0
    %1222 = vmatpush1.msra.mxu0 0.0
    %1223 = vmatprep.subr.mxu0 0.0
    %1224 = vmatpush1.msra.mxu0 0.0
    %1225 = vmatprep.subr.mxu0 0.0
    %1226 = vmatpush1.msra.mxu0 0.0
    %1227 = vmatprep.subr.mxu0 0.0
    %1228 = vmatpush1.msra.mxu0 0.0
    %1229 = vmatprep.subr.mxu0 0.0
    %1230 = vmatpush1.msra.mxu0 0.0
    %1231 = vmatprep.subr.mxu0 0.0
    %1232 = vmatpush1.msra.mxu0 0.0
    %1233 = vmatprep.subr.mxu0 0.0
    %1234 = vmatpush1.msra.mxu0 0.0
    %1235 = vmatprep.mubr.f32.mxu0 0.0
    %1236 = vmatmul.mubr.f32.gmra.mrb[0].mxu0 %v1169
    %v1237 = vpop.f32.mrb[0].mxu0
    %v1238 = vadd.f32 %v1165, %v1237
    %v1239 = vpop.f32.mrb[0].mxu0
    %1240 = vdwg.mxu0
    %v1241 = vadd.f32 %v1238, %v498
    %v1242 = vtanh.pop %v1241
    %1243 = vst.msk [vmem:[#allocation3 + $0x4] sm:$0x3] %vm502, %v1242
    %1244 = vmatprep.subr.mxu0 0.0
    %1245 = vmatpush1.msra.mxu0 %v49
    %1246 = vmatprep.subr.mxu0 0.0
    %1247 = vmatpush1.msra.mxu0 %v108
    %1248 = vmatprep.subr.mxu0 0.0
    %1249 = vmatpush1.msra.mxu0 0.0
    %1250 = vmatprep.subr.mxu0 0.0
    %1251 = vmatpush1.msra.mxu0 0.0
    %1252 = vmatprep.subr.mxu0 0.0
    %1253 = vmatpush1.msra.mxu0 0.0
    %1254 = vmatprep.subr.mxu0 0.0
    %1255 = vmatpush1.msra.mxu0 0.0
    %1256 = vmatprep.subr.mxu0 0.0
    %1257 = vmatpush1.msra.mxu0 0.0
    %1258 = vmatprep.subr.mxu0 0.0
    %1259 = vmatpush1.msra.mxu0 0.0
    %1260 = vmatprep.subr.mxu0 0.0
    %1261 = vmatpush1.msra.mxu0 0.0
    %1262 = vmatprep.subr.mxu0 0.0
    %1263 = vmatpush1.msra.mxu0 0.0
    %1264 = vmatprep.subr.mxu0 0.0
    %1265 = vmatpush1.msra.mxu0 0.0
    %1266 = vmatprep.subr.mxu0 0.0
    %1267 = vmatpush1.msra.mxu0 0.0
    %1268 = vmatprep.subr.mxu0 0.0
    %1269 = vmatpush1.msra.mxu0 0.0
    %1270 = vmatprep.subr.mxu0 0.0
    %1271 = vmatpush1.msra.mxu0 0.0
    %1272 = vmatprep.subr.mxu0 0.0
    %1273 = vmatpush1.msra.mxu0 0.0
    %1274 = vmatprep.subr.mxu0 0.0
    %1275 = vmatpush1.msra.mxu0 0.0
    %1276 = vmatprep.subr.mxu0 0.0
    %1277 = vmatpush1.msra.mxu0 0.0
    %1278 = vmatprep.subr.mxu0 0.0
    %1279 = vmatpush1.msra.mxu0 0.0
    %1280 = vmatprep.subr.mxu0 0.0
    %1281 = vmatpush1.msra.mxu0 0.0
    %1282 = vmatprep.subr.mxu0 0.0
    %1283 = vmatpush1.msra.mxu0 0.0
    %1284 = vmatprep.subr.mxu0 0.0
    %1285 = vmatpush1.msra.mxu0 0.0
    %1286 = vmatprep.subr.mxu0 0.0
    %1287 = vmatpush1.msra.mxu0 0.0
    %1288 = vmatprep.subr.mxu0 0.0
    %1289 = vmatpush1.msra.mxu0 0.0
    %1290 = vmatprep.subr.mxu0 0.0
    %1291 = vmatpush1.msra.mxu0 0.0
    %1292 = vmatprep.subr.mxu0 0.0
    %1293 = vmatpush1.msra.mxu0 0.0
    %1294 = vmatprep.subr.mxu0 0.0
    %1295 = vmatpush1.msra.mxu0 0.0
    %1296 = vmatprep.subr.mxu0 0.0
    %1297 = vmatpush1.msra.mxu0 0.0
    %1298 = vmatprep.subr.mxu0 0.0
    %1299 = vmatpush1.msra.mxu0 0.0
    %1300 = vmatprep.subr.mxu0 0.0
    %1301 = vmatpush1.msra.mxu0 0.0
    %1302 = vmatprep.subr.mxu0 0.0
    %1303 = vmatpush1.msra.mxu0 0.0
    %1304 = vmatprep.subr.mxu0 0.0
    %1305 = vmatpush1.msra.mxu0 0.0
    %1306 = vmatprep.subr.mxu0 0.0
    %1307 = vmatpush1.msra.mxu0 0.0
    %1308 = vmatprep.mubr.f32.mxu0 0.0
    %1309 = vmatmul.mubr.f32.gmra.mrb[0].mxu0 %v1021
    %v1310 = vpop.f32.mrb[0].mxu0
    %v1311 = vadd.f32 0.0, %v1310
    %v1312 = vpop.f32.mrb[0].mxu0
    %1313 = vdwg.mxu0
    %v1315 = vrot.slane %v1311, 2
    %v1317 = vadd.f32 %v95, %v1315
    %v1318 = vtanh.pop %v1317
    %1319 = vmatprep.subr.mxu0 0.0
    %1320 = vmatpush1.msra.mxu0 %v56
    %1321 = vmatprep.subr.mxu0 0.0
    %1322 = vmatpush1.msra.mxu0 %v186
    %1323 = vmatprep.subr.mxu0 0.0
    %1324 = vmatpush1.msra.mxu0 0.0
    %1325 = vmatprep.subr.mxu0 0.0
    %1326 = vmatpush1.msra.mxu0 0.0
    %1327 = vmatprep.subr.mxu0 0.0
    %1328 = vmatpush1.msra.mxu0 0.0
    %1329 = vmatprep.subr.mxu0 0.0
    %1330 = vmatpush1.msra.mxu0 0.0
    %1331 = vmatprep.subr.mxu0 0.0
    %1332 = vmatpush1.msra.mxu0 0.0
    %1333 = vmatprep.subr.mxu0 0.0
    %1334 = vmatpush1.msra.mxu0 0.0
    %1335 = vmatprep.subr.mxu0 0.0
    %1336 = vmatpush1.msra.mxu0 0.0
    %1337 = vmatprep.subr.mxu0 0.0
    %1338 = vmatpush1.msra.mxu0 0.0
    %1339 = vmatprep.subr.mxu0 0.0
    %1340 = vmatpush1.msra.mxu0 0.0
    %1341 = vmatprep.subr.mxu0 0.0
    %1342 = vmatpush1.msra.mxu0 0.0
    %1343 = vmatprep.subr.mxu0 0.0
    %1344 = vmatpush1.msra.mxu0 0.0
    %1345 = vmatprep.subr.mxu0 0.0
    %1346 = vmatpush1.msra.mxu0 0.0
    %1347 = vmatprep.subr.mxu0 0.0
    %1348 = vmatpush1.msra.mxu0 0.0
    %1349 = vmatprep.subr.mxu0 0.0
    %1350 = vmatpush1.msra.mxu0 0.0
    %1351 = vmatprep.subr.mxu0 0.0
    %1352 = vmatpush1.msra.mxu0 0.0
    %1353 = vmatprep.subr.mxu0 0.0
    %1354 = vmatpush1.msra.mxu0 0.0
    %1355 = vmatprep.subr.mxu0 0.0
    %1356 = vmatpush1.msra.mxu0 0.0
    %1357 = vmatprep.subr.mxu0 0.0
    %1358 = vmatpush1.msra.mxu0 0.0
    %1359 = vmatprep.subr.mxu0 0.0
    %1360 = vmatpush1.msra.mxu0 0.0
    %1361 = vmatprep.subr.mxu0 0.0
    %1362 = vmatpush1.msra.mxu0 0.0
    %1363 = vmatprep.subr.mxu0 0.0
    %1364 = vmatpush1.msra.mxu0 0.0
    %1365 = vmatprep.subr.mxu0 0.0
    %1366 = vmatpush1.msra.mxu0 0.0
    %1367 = vmatprep.subr.mxu0 0.0
    %1368 = vmatpush1.msra.mxu0 0.0
    %1369 = vmatprep.subr.mxu0 0.0
    %1370 = vmatpush1.msra.mxu0 0.0
    %1371 = vmatprep.subr.mxu0 0.0
    %1372 = vmatpush1.msra.mxu0 0.0
    %1373 = vmatprep.subr.mxu0 0.0
    %1374 = vmatpush1.msra.mxu0 0.0
    %1375 = vmatprep.subr.mxu0 0.0
    %1376 = vmatpush1.msra.mxu0 0.0
    %1377 = vmatprep.subr.mxu0 0.0
    %1378 = vmatpush1.msra.mxu0 0.0
    %1379 = vmatprep.subr.mxu0 0.0
    %1380 = vmatpush1.msra.mxu0 0.0
    %1381 = vmatprep.subr.mxu0 0.0
    %1382 = vmatpush1.msra.mxu0 0.0
    %1383 = vmatprep.mubr.f32.mxu0 0.0
    %1384 = vmatmul.mubr.f32.gmra.mrb[0].mxu0 %v1169
    %v1385 = vpop.f32.mrb[0].mxu0
    %v1386 = vadd.f32 0.0, %v1385
    %v1387 = vpop.f32.mrb[0].mxu0
    %1388 = vdwg.mxu0
    %v1390 = vrot.slane %v1318, 6
    %v1391 = vsel %vm102, %v1390, 0
    %1393 = vmatprep.subr.mxu0 0.0
    %1394 = vmatpush1.msra.mxu0 %v51
    %1395 = vmatprep.subr.mxu0 0.0
    %1396 = vmatpush1.msra.mxu0 %v262
    %1397 = vmatprep.subr.mxu0 0.0
    %1398 = vmatpush1.msra.mxu0 0.0
    %1399 = vmatprep.subr.mxu0 0.0
    %1400 = vmatpush1.msra.mxu0 0.0
    %1401 = vmatprep.subr.mxu0 0.0
    %1402 = vmatpush1.msra.mxu0 0.0
    %1403 = vmatprep.subr.mxu0 0.0
    %1404 = vmatpush1.msra.mxu0 0.0
    %1405 = vmatprep.subr.mxu0 0.0
    %1406 = vmatpush1.msra.mxu0 0.0
    %1407 = vmatprep.subr.mxu0 0.0
    %1408 = vmatpush1.msra.mxu0 0.0
    %1409 = vmatprep.subr.mxu0 0.0
    %1410 = vmatpush1.msra.mxu0 0.0
    %1411 = vmatprep.subr.mxu0 0.0
    %1412 = vmatpush1.msra.mxu0 0.0
    %1413 = vmatprep.subr.mxu0 0.0
    %1414 = vmatpush1.msra.mxu0 0.0
    %1415 = vmatprep.subr.mxu0 0.0
    %1416 = vmatpush1.msra.mxu0 0.0
    %1417 = vmatprep.subr.mxu0 0.0
    %1418 = vmatpush1.msra.mxu0 0.0
    %1419 = vmatprep.subr.mxu0 0.0
    %1420 = vmatpush1.msra.mxu0 0.0
    %1421 = vmatprep.subr.mxu0 0.0
    %1422 = vmatpush1.msra.mxu0 0.0
    %1423 = vmatprep.subr.mxu0 0.0
    %1424 = vmatpush1.msra.mxu0 0.0
    %1425 = vmatprep.subr.mxu0 0.0
    %1426 = vmatpush1.msra.mxu0 0.0
    %1427 = vmatprep.subr.mxu0 0.0
    %1428 = vmatpush1.msra.mxu0 0.0
    %1429 = vmatprep.subr.mxu0 0.0
    %1430 = vmatpush1.msra.mxu0 0.0
    %1431 = vmatprep.subr.mxu0 0.0
    %1432 = vmatpush1.msra.mxu0 0.0
    %1433 = vmatprep.subr.mxu0 0.0
    %1434 = vmatpush1.msra.mxu0 0.0
    %1435 = vmatprep.subr.mxu0 0.0
    %1436 = vmatpush1.msra.mxu0 0.0
    %1437 = vmatprep.subr.mxu0 0.0
    %1438 = vmatpush1.msra.mxu0 0.0
    %1439 = vmatprep.subr.mxu0 0.0
    %1440 = vmatpush1.msra.mxu0 0.0
    %1441 = vmatprep.subr.mxu0 0.0
    %1442 = vmatpush1.msra.mxu0 0.0
    %1443 = vmatprep.subr.mxu0 0.0
    %1444 = vmatpush1.msra.mxu0 0.0
    %1445 = vmatprep.subr.mxu0 0.0
    %1446 = vmatpush1.msra.mxu0 0.0
    %1447 = vmatprep.subr.mxu0 0.0
    %1448 = vmatpush1.msra.mxu0 0.0
    %1449 = vmatprep.subr.mxu0 0.0
    %1450 = vmatpush1.msra.mxu0 0.0
    %1451 = vmatprep.subr.mxu0 0.0
    %1452 = vmatpush1.msra.mxu0 0.0
    %1453 = vmatprep.subr.mxu0 0.0
    %1454 = vmatpush1.msra.mxu0 0.0
    %1455 = vmatprep.subr.mxu0 0.0
    %1456 = vmatpush1.msra.mxu0 0.0
    %1457 = vmatprep.mubr.f32.mxu0 0.0
    %1458 = vmatmul.mubr.f32.gmra.mrb[0].mxu0 %v1391
    %v1459 = vpop.f32.mrb[0].mxu0
    %v1460 = vadd.f32 %v1386, %v1459
    %v1461 = vpop.f32.mrb[0].mxu0
    %1462 = vdwg.mxu0
    %v1463 = vadd.f32 %v1460, %v338
    %v1464 = vtanh.pop %v1463
    %v1466 = vsel %vm102, %v1242, 0
    %1468 = vmatprep.subr.mxu0 0.0
    %1469 = vmatpush1.msra.mxu0 %v59
    %1470 = vmatprep.subr.mxu0 0.0
    %1471 = vmatpush1.msra.mxu0 %v346
    %1472 = vmatprep.subr.mxu0 0.0
    %1473 = vmatpush1.msra.mxu0 0.0
    %1474 = vmatprep.subr.mxu0 0.0
    %1475 = vmatpush1.msra.mxu0 0.0
    %1476 = vmatprep.subr.mxu0 0.0
    %1477 = vmatpush1.msra.mxu0 0.0
    %1478 = vmatprep.subr.mxu0 0.0
    %1479 = vmatpush1.msra.mxu0 0.0
    %1480 = vmatprep.subr.mxu0 0.0
    %1481 = vmatpush1.msra.mxu0 0.0
    %1482 = vmatprep.subr.mxu0 0.0
    %1483 = vmatpush1.msra.mxu0 0.0
    %1484 = vmatprep.subr.mxu0 0.0
    %1485 = vmatpush1.msra.mxu0 0.0
    %1486 = vmatprep.subr.mxu0 0.0
    %1487 = vmatpush1.msra.mxu0 0.0
    %1488 = vmatprep.subr.mxu0 0.0
    %1489 = vmatpush1.msra.mxu0 0.0
    %1490 = vmatprep.subr.mxu0 0.0
    %1491 = vmatpush1.msra.mxu0 0.0
    %1492 = vmatprep.subr.mxu0 0.0
    %1493 = vmatpush1.msra.mxu0 0.0
    %1494 = vmatprep.subr.mxu0 0.0
    %1495 = vmatpush1.msra.mxu0 0.0
    %1496 = vmatprep.subr.mxu0 0.0
    %1497 = vmatpush1.msra.mxu0 0.0
    %1498 = vmatprep.subr.mxu0 0.0
    %1499 = vmatpush1.msra.mxu0 0.0
    %1500 = vmatprep.subr.mxu0 0.0
    %1501 = vmatpush1.msra.mxu0 0.0
    %1502 = vmatprep.subr.mxu0 0.0
    %1503 = vmatpush1.msra.mxu0 0.0
    %1504 = vmatprep.subr.mxu0 0.0
    %1505 = vmatpush1.msra.mxu0 0.0
    %1506 = vmatprep.subr.mxu0 0.0
    %1507 = vmatpush1.msra.mxu0 0.0
    %1508 = vmatprep.subr.mxu0 0.0
    %1509 = vmatpush1.msra.mxu0 0.0
    %1510 = vmatprep.subr.mxu0 0.0
    %1511 = vmatpush1.msra.mxu0 0.0
    %1512 = vmatprep.subr.mxu0 0.0
    %1513 = vmatpush1.msra.mxu0 0.0
    %1514 = vmatprep.subr.mxu0 0.0
    %1515 = vmatpush1.msra.mxu0 0.0
    %1516 = vmatprep.subr.mxu0 0.0
    %1517 = vmatpush1.msra.mxu0 0.0
    %1518 = vmatprep.subr.mxu0 0.0
    %1519 = vmatpush1.msra.mxu0 0.0
    %1520 = vmatprep.subr.mxu0 0.0
    %1521 = vmatpush1.msra.mxu0 0.0
    %1522 = vmatprep.subr.mxu0 0.0
    %1523 = vmatpush1.msra.mxu0 0.0
    %1524 = vmatprep.subr.mxu0 0.0
    %1525 = vmatpush1.msra.mxu0 0.0
    %1526 = vmatprep.subr.mxu0 0.0
    %1527 = vmatpush1.msra.mxu0 0.0
    %1528 = vmatprep.subr.mxu0 0.0
    %1529 = vmatpush1.msra.mxu0 0.0
    %1530 = vmatprep.subr.mxu0 0.0
    %1531 = vmatpush1.msra.mxu0 0.0
    %1532 = vmatprep.mubr.f32.mxu0 0.0
    %1533 = vmatmul.mubr.f32.gmra.mrb[0].mxu0 %v1466
    %v1534 = vpop.f32.mrb[0].mxu0
    %v1535 = vadd.f32 0.0, %v1534
    %v1536 = vpop.f32.mrb[0].mxu0
    %1537 = vdwg.mxu0
    %v1539 = vsel %vm102, %v1464, 0
    %1541 = vmatprep.subr.mxu0 0.0
    %1542 = vmatpush1.msra.mxu0 %v54
    %1543 = vmatprep.subr.mxu0 0.0
    %1544 = vmatpush1.msra.mxu0 %v422
    %1545 = vmatprep.subr.mxu0 0.0
    %1546 = vmatpush1.msra.mxu0 0.0
    %1547 = vmatprep.subr.mxu0 0.0
    %1548 = vmatpush1.msra.mxu0 0.0
    %1549 = vmatprep.subr.mxu0 0.0
    %1550 = vmatpush1.msra.mxu0 0.0
    %1551 = vmatprep.subr.mxu0 0.0
    %1552 = vmatpush1.msra.mxu0 0.0
    %1553 = vmatprep.subr.mxu0 0.0
    %1554 = vmatpush1.msra.mxu0 0.0
    %1555 = vmatprep.subr.mxu0 0.0
    %1556 = vmatpush1.msra.mxu0 0.0
    %1557 = vmatprep.subr.mxu0 0.0
    %1558 = vmatpush1.msra.mxu0 0.0
    %1559 = vmatprep.subr.mxu0 0.0
    %1560 = vmatpush1.msra.mxu0 0.0
    %1561 = vmatprep.subr.mxu0 0.0
    %1562 = vmatpush1.msra.mxu0 0.0
    %1563 = vmatprep.subr.mxu0 0.0
    %1564 = vmatpush1.msra.mxu0 0.0
    %1565 = vmatprep.subr.mxu0 0.0
    %1566 = vmatpush1.msra.mxu0 0.0
    %1567 = vmatprep.subr.mxu0 0.0
    %1568 = vmatpush1.msra.mxu0 0.0
    %1569 = vmatprep.subr.mxu0 0.0
    %1570 = vmatpush1.msra.mxu0 0.0
    %1571 = vmatprep.subr.mxu0 0.0
    %1572 = vmatpush1.msra.mxu0 0.0
    %1573 = vmatprep.subr.mxu0 0.0
    %1574 = vmatpush1.msra.mxu0 0.0
    %1575 = vmatprep.subr.mxu0 0.0
    %1576 = vmatpush1.msra.mxu0 0.0
    %1577 = vmatprep.subr.mxu0 0.0
    %1578 = vmatpush1.msra.mxu0 0.0
    %1579 = vmatprep.subr.mxu0 0.0
    %1580 = vmatpush1.msra.mxu0 0.0
    %1581 = vmatprep.subr.mxu0 0.0
    %1582 = vmatpush1.msra.mxu0 0.0
    %1583 = vmatprep.subr.mxu0 0.0
    %1584 = vmatpush1.msra.mxu0 0.0
    %1585 = vmatprep.subr.mxu0 0.0
    %1586 = vmatpush1.msra.mxu0 0.0
    %1587 = vmatprep.subr.mxu0 0.0
    %1588 = vmatpush1.msra.mxu0 0.0
    %1589 = vmatprep.subr.mxu0 0.0
    %1590 = vmatpush1.msra.mxu0 0.0
    %1591 = vmatprep.subr.mxu0 0.0
    %1592 = vmatpush1.msra.mxu0 0.0
    %1593 = vmatprep.subr.mxu0 0.0
    %1594 = vmatpush1.msra.mxu0 0.0
    %1595 = vmatprep.subr.mxu0 0.0
    %1596 = vmatpush1.msra.mxu0 0.0
    %1597 = vmatprep.subr.mxu0 0.0
    %1598 = vmatpush1.msra.mxu0 0.0
    %1599 = vmatprep.subr.mxu0 0.0
    %1600 = vmatpush1.msra.mxu0 0.0
    %1601 = vmatprep.subr.mxu0 0.0
    %1602 = vmatpush1.msra.mxu0 0.0
    %1603 = vmatprep.subr.mxu0 0.0
    %1604 = vmatpush1.msra.mxu0 0.0
    %1605 = vmatprep.mubr.f32.mxu0 0.0
    %1606 = vmatmul.mubr.f32.gmra.mrb[0].mxu0 %v1539
    %v1607 = vpop.f32.mrb[0].mxu0
    %v1608 = vadd.f32 %v1535, %v1607
    %v1609 = vpop.f32.mrb[0].mxu0
    %1610 = vdwg.mxu0
    %v1611 = vadd.f32 %v1608, %v498
    %v1612 = vtanh.pop %v1611
    %1613 = vst.msk [vmem:[#allocation3 + $0x6] sm:$0x3] %vm502, %v1612
    %1614 = vmatprep.subr.mxu0 0.0
    %1615 = vmatpush1.msra.mxu0 %v49
    %1616 = vmatprep.subr.mxu0 0.0
    %1617 = vmatpush1.msra.mxu0 %v108
    %1618 = vmatprep.subr.mxu0 0.0
    %1619 = vmatpush1.msra.mxu0 0.0
    %1620 = vmatprep.subr.mxu0 0.0
    %1621 = vmatpush1.msra.mxu0 0.0
    %1622 = vmatprep.subr.mxu0 0.0
    %1623 = vmatpush1.msra.mxu0 0.0
    %1624 = vmatprep.subr.mxu0 0.0
    %1625 = vmatpush1.msra.mxu0 0.0
    %1626 = vmatprep.subr.mxu0 0.0
    %1627 = vmatpush1.msra.mxu0 0.0
    %1628 = vmatprep.subr.mxu0 0.0
    %1629 = vmatpush1.msra.mxu0 0.0
    %1630 = vmatprep.subr.mxu0 0.0
    %1631 = vmatpush1.msra.mxu0 0.0
    %1632 = vmatprep.subr.mxu0 0.0
    %1633 = vmatpush1.msra.mxu0 0.0
    %1634 = vmatprep.subr.mxu0 0.0
    %1635 = vmatpush1.msra.mxu0 0.0
    %1636 = vmatprep.subr.mxu0 0.0
    %1637 = vmatpush1.msra.mxu0 0.0
    %1638 = vmatprep.subr.mxu0 0.0
    %1639 = vmatpush1.msra.mxu0 0.0
    %1640 = vmatprep.subr.mxu0 0.0
    %1641 = vmatpush1.msra.mxu0 0.0
    %1642 = vmatprep.subr.mxu0 0.0
    %1643 = vmatpush1.msra.mxu0 0.0
    %1644 = vmatprep.subr.mxu0 0.0
    %1645 = vmatpush1.msra.mxu0 0.0
    %1646 = vmatprep.subr.mxu0 0.0
    %1647 = vmatpush1.msra.mxu0 0.0
    %1648 = vmatprep.subr.mxu0 0.0
    %1649 = vmatpush1.msra.mxu0 0.0
    %1650 = vmatprep.subr.mxu0 0.0
    %1651 = vmatpush1.msra.mxu0 0.0
    %1652 = vmatprep.subr.mxu0 0.0
    %1653 = vmatpush1.msra.mxu0 0.0
    %1654 = vmatprep.subr.mxu0 0.0
    %1655 = vmatpush1.msra.mxu0 0.0
    %1656 = vmatprep.subr.mxu0 0.0
    %1657 = vmatpush1.msra.mxu0 0.0
    %1658 = vmatprep.subr.mxu0 0.0
    %1659 = vmatpush1.msra.mxu0 0.0
    %1660 = vmatprep.subr.mxu0 0.0
    %1661 = vmatpush1.msra.mxu0 0.0
    %1662 = vmatprep.subr.mxu0 0.0
    %1663 = vmatpush1.msra.mxu0 0.0
    %1664 = vmatprep.subr.mxu0 0.0
    %1665 = vmatpush1.msra.mxu0 0.0
    %1666 = vmatprep.subr.mxu0 0.0
    %1667 = vmatpush1.msra.mxu0 0.0
    %1668 = vmatprep.subr.mxu0 0.0
    %1669 = vmatpush1.msra.mxu0 0.0
    %1670 = vmatprep.subr.mxu0 0.0
    %1671 = vmatpush1.msra.mxu0 0.0
    %1672 = vmatprep.subr.mxu0 0.0
    %1673 = vmatpush1.msra.mxu0 0.0
    %1674 = vmatprep.subr.mxu0 0.0
    %1675 = vmatpush1.msra.mxu0 0.0
    %1676 = vmatprep.subr.mxu0 0.0
    %1677 = vmatpush1.msra.mxu0 0.0
    %1678 = vmatprep.mubr.f32.mxu0 0.0
    %1679 = vmatmul.mubr.f32.gmra.mrb[0].mxu0 %v1391
    %v1680 = vpop.f32.mrb[0].mxu0
    %v1681 = vadd.f32 0.0, %v1680
    %v1682 = vpop.f32.mrb[0].mxu0
    %1683 = vdwg.mxu0
    %v1684 = vadd.f32 %v96, %v1681
    %v1685 = vtanh.pop %v1684
    %1686 = vmatprep.subr.mxu0 0.0
    %1687 = vmatpush1.msra.mxu0 %v56
    %1688 = vmatprep.subr.mxu0 0.0
    %1689 = vmatpush1.msra.mxu0 %v186
    %1690 = vmatprep.subr.mxu0 0.0
    %1691 = vmatpush1.msra.mxu0 0.0
    %1692 = vmatprep.subr.mxu0 0.0
    %1693 = vmatpush1.msra.mxu0 0.0
    %1694 = vmatprep.subr.mxu0 0.0
    %1695 = vmatpush1.msra.mxu0 0.0
    %1696 = vmatprep.subr.mxu0 0.0
    %1697 = vmatpush1.msra.mxu0 0.0
    %1698 = vmatprep.subr.mxu0 0.0
    %1699 = vmatpush1.msra.mxu0 0.0
    %1700 = vmatprep.subr.mxu0 0.0
    %1701 = vmatpush1.msra.mxu0 0.0
    %1702 = vmatprep.subr.mxu0 0.0
    %1703 = vmatpush1.msra.mxu0 0.0
    %1704 = vmatprep.subr.mxu0 0.0
    %1705 = vmatpush1.msra.mxu0 0.0
    %1706 = vmatprep.subr.mxu0 0.0
    %1707 = vmatpush1.msra.mxu0 0.0
    %1708 = vmatprep.subr.mxu0 0.0
    %1709 = vmatpush1.msra.mxu0 0.0
    %1710 = vmatprep.subr.mxu0 0.0
    %1711 = vmatpush1.msra.mxu0 0.0
    %1712 = vmatprep.subr.mxu0 0.0
    %1713 = vmatpush1.msra.mxu0 0.0
    %1714 = vmatprep.subr.mxu0 0.0
    %1715 = vmatpush1.msra.mxu0 0.0
    %1716 = vmatprep.subr.mxu0 0.0
    %1717 = vmatpush1.msra.mxu0 0.0
    %1718 = vmatprep.subr.mxu0 0.0
    %1719 = vmatpush1.msra.mxu0 0.0
    %1720 = vmatprep.subr.mxu0 0.0
    %1721 = vmatpush1.msra.mxu0 0.0
    %1722 = vmatprep.subr.mxu0 0.0
    %1723 = vmatpush1.msra.mxu0 0.0
    %1724 = vmatprep.subr.mxu0 0.0
    %1725 = vmatpush1.msra.mxu0 0.0
    %1726 = vmatprep.subr.mxu0 0.0
    %1727 = vmatpush1.msra.mxu0 0.0
    %1728 = vmatprep.subr.mxu0 0.0
    %1729 = vmatpush1.msra.mxu0 0.0
    %1730 = vmatprep.subr.mxu0 0.0
    %1731 = vmatpush1.msra.mxu0 0.0
    %1732 = vmatprep.subr.mxu0 0.0
    %1733 = vmatpush1.msra.mxu0 0.0
    %1734 = vmatprep.subr.mxu0 0.0
    %1735 = vmatpush1.msra.mxu0 0.0
    %1736 = vmatprep.subr.mxu0 0.0
    %1737 = vmatpush1.msra.mxu0 0.0
    %1738 = vmatprep.subr.mxu0 0.0
    %1739 = vmatpush1.msra.mxu0 0.0
    %1740 = vmatprep.subr.mxu0 0.0
    %1741 = vmatpush1.msra.mxu0 0.0
    %1742 = vmatprep.subr.mxu0 0.0
    %1743 = vmatpush1.msra.mxu0 0.0
    %1744 = vmatprep.subr.mxu0 0.0
    %1745 = vmatpush1.msra.mxu0 0.0
    %1746 = vmatprep.subr.mxu0 0.0
    %1747 = vmatpush1.msra.mxu0 0.0
    %1748 = vmatprep.subr.mxu0 0.0
    %1749 = vmatpush1.msra.mxu0 0.0
    %1750 = vmatprep.mubr.f32.mxu0 0.0
    %1751 = vmatmul.mubr.f32.gmra.mrb[0].mxu0 %v1539
    %v1752 = vpop.f32.mrb[0].mxu0
    %v1753 = vadd.f32 0.0, %v1752
    %v1754 = vpop.f32.mrb[0].mxu0
    %1755 = vdwg.mxu0
    %v1757 = vsel %vm102, %v1685, 0
    %1759 = vmatprep.subr.mxu0 0.0
    %1760 = vmatpush1.msra.mxu0 %v51
    %1761 = vmatprep.subr.mxu0 0.0
    %1762 = vmatpush1.msra.mxu0 %v262
    %1763 = vmatprep.subr.mxu0 0.0
    %1764 = vmatpush1.msra.mxu0 0.0
    %1765 = vmatprep.subr.mxu0 0.0
    %1766 = vmatpush1.msra.mxu0 0.0
    %1767 = vmatprep.subr.mxu0 0.0
    %1768 = vmatpush1.msra.mxu0 0.0
    %1769 = vmatprep.subr.mxu0 0.0
    %1770 = vmatpush1.msra.mxu0 0.0
    %1771 = vmatprep.subr.mxu0 0.0
    %1772 = vmatpush1.msra.mxu0 0.0
    %1773 = vmatprep.subr.mxu0 0.0
    %1774 = vmatpush1.msra.mxu0 0.0
    %1775 = vmatprep.subr.mxu0 0.0
    %1776 = vmatpush1.msra.mxu0 0.0
    %1777 = vmatprep.subr.mxu0 0.0
    %1778 = vmatpush1.msra.mxu0 0.0
    %1779 = vmatprep.subr.mxu0 0.0
    %1780 = vmatpush1.msra.mxu0 0.0
    %1781 = vmatprep.subr.mxu0 0.0
    %1782 = vmatpush1.msra.mxu0 0.0
    %1783 = vmatprep.subr.mxu0 0.0
    %1784 = vmatpush1.msra.mxu0 0.0
    %1785 = vmatprep.subr.mxu0 0.0
    %1786 = vmatpush1.msra.mxu0 0.0
    %1787 = vmatprep.subr.mxu0 0.0
    %1788 = vmatpush1.msra.mxu0 0.0
    %1789 = vmatprep.subr.mxu0 0.0
    %1790 = vmatpush1.msra.mxu0 0.0
    %1791 = vmatprep.subr.mxu0 0.0
    %1792 = vmatpush1.msra.mxu0 0.0
    %1793 = vmatprep.subr.mxu0 0.0
    %1794 = vmatpush1.msra.mxu0 0.0
    %1795 = vmatprep.subr.mxu0 0.0
    %1796 = vmatpush1.msra.mxu0 0.0
    %1797 = vmatprep.subr.mxu0 0.0
    %1798 = vmatpush1.msra.mxu0 0.0
    %1799 = vmatprep.subr.mxu0 0.0
    %1800 = vmatpush1.msra.mxu0 0.0
    %1801 = vmatprep.subr.mxu0 0.0
    %1802 = vmatpush1.msra.mxu0 0.0
    %1803 = vmatprep.subr.mxu0 0.0
    %1804 = vmatpush1.msra.mxu0 0.0
    %1805 = vmatprep.subr.mxu0 0.0
    %1806 = vmatpush1.msra.mxu0 0.0
    %1807 = vmatprep.subr.mxu0 0.0
    %1808 = vmatpush1.msra.mxu0 0.0
    %1809 = vmatprep.subr.mxu0 0.0
    %1810 = vmatpush1.msra.mxu0 0.0
    %1811 = vmatprep.subr.mxu0 0.0
    %1812 = vmatpush1.msra.mxu0 0.0
    %1813 = vmatprep.subr.mxu0 0.0
    %1814 = vmatpush1.msra.mxu0 0.0
    %1815 = vmatprep.subr.mxu0 0.0
    %1816 = vmatpush1.msra.mxu0 0.0
    %1817 = vmatprep.subr.mxu0 0.0
    %1818 = vmatpush1.msra.mxu0 0.0
    %1819 = vmatprep.subr.mxu0 0.0
    %1820 = vmatpush1.msra.mxu0 0.0
    %1821 = vmatprep.subr.mxu0 0.0
    %1822 = vmatpush1.msra.mxu0 0.0
    %1823 = vmatprep.mubr.f32.mxu0 0.0
    %1824 = vmatmul.mubr.f32.gmra.mrb[0].mxu0 %v1757
    %v1825 = vpop.f32.mrb[0].mxu0
    %v1826 = vadd.f32 %v1753, %v1825
    %v1827 = vpop.f32.mrb[0].mxu0
    %1828 = vdwg.mxu0
    %v1829 = vadd.f32 %v1826, %v338
    %v1830 = vtanh.pop %v1829
    %v1832 = vsel %vm102, %v1612, 0
    %1834 = vmatprep.subr.mxu0 0.0
    %1835 = vmatpush1.msra.mxu0 %v59
    %1836 = vmatprep.subr.mxu0 0.0
    %1837 = vmatpush1.msra.mxu0 %v346
    %1838 = vmatprep.subr.mxu0 0.0
    %1839 = vmatpush1.msra.mxu0 0.0
    %1840 = vmatprep.subr.mxu0 0.0
    %1841 = vmatpush1.msra.mxu0 0.0
    %1842 = vmatprep.subr.mxu0 0.0
    %1843 = vmatpush1.msra.mxu0 0.0
    %1844 = vmatprep.subr.mxu0 0.0
    %1845 = vmatpush1.msra.mxu0 0.0
    %1846 = vmatprep.subr.mxu0 0.0
    %1847 = vmatpush1.msra.mxu0 0.0
    %1848 = vmatprep.subr.mxu0 0.0
    %1849 = vmatpush1.msra.mxu0 0.0
    %1850 = vmatprep.subr.mxu0 0.0
    %1851 = vmatpush1.msra.mxu0 0.0
    %1852 = vmatprep.subr.mxu0 0.0
    %1853 = vmatpush1.msra.mxu0 0.0
    %1854 = vmatprep.subr.mxu0 0.0
    %1855 = vmatpush1.msra.mxu0 0.0
    %1856 = vmatprep.subr.mxu0 0.0
    %1857 = vmatpush1.msra.mxu0 0.0
    %1858 = vmatprep.subr.mxu0 0.0
    %1859 = vmatpush1.msra.mxu0 0.0
    %1860 = vmatprep.subr.mxu0 0.0
    %1861 = vmatpush1.msra.mxu0 0.0
    %1862 = vmatprep.subr.mxu0 0.0
    %1863 = vmatpush1.msra.mxu0 0.0
    %1864 = vmatprep.subr.mxu0 0.0
    %1865 = vmatpush1.msra.mxu0 0.0
    %1866 = vmatprep.subr.mxu0 0.0
    %1867 = vmatpush1.msra.mxu0 0.0
    %1868 = vmatprep.subr.mxu0 0.0
    %1869 = vmatpush1.msra.mxu0 0.0
    %1870 = vmatprep.subr.mxu0 0.0
    %1871 = vmatpush1.msra.mxu0 0.0
    %1872 = vmatprep.subr.mxu0 0.0
    %1873 = vmatpush1.msra.mxu0 0.0
    %1874 = vmatprep.subr.mxu0 0.0
    %1875 = vmatpush1.msra.mxu0 0.0
    %1876 = vmatprep.subr.mxu0 0.0
    %1877 = vmatpush1.msra.mxu0 0.0
    %1878 = vmatprep.subr.mxu0 0.0
    %1879 = vmatpush1.msra.mxu0 0.0
    %1880 = vmatprep.subr.mxu0 0.0
    %1881 = vmatpush1.msra.mxu0 0.0
    %1882 = vmatprep.subr.mxu0 0.0
    %1883 = vmatpush1.msra.mxu0 0.0
    %1884 = vmatprep.subr.mxu0 0.0
    %1885 = vmatpush1.msra.mxu0 0.0
    %1886 = vmatprep.subr.mxu0 0.0
    %1887 = vmatpush1.msra.mxu0 0.0
    %1888 = vmatprep.subr.mxu0 0.0
    %1889 = vmatpush1.msra.mxu0 0.0
    %1890 = vmatprep.subr.mxu0 0.0
    %1891 = vmatpush1.msra.mxu0 0.0
    %1892 = vmatprep.subr.mxu0 0.0
    %1893 = vmatpush1.msra.mxu0 0.0
    %1894 = vmatprep.subr.mxu0 0.0
    %1895 = vmatpush1.msra.mxu0 0.0
    %1896 = vmatprep.subr.mxu0 0.0
    %1897 = vmatpush1.msra.mxu0 0.0
    %1898 = vmatprep.mubr.f32.mxu0 0.0
    %1899 = vmatmul.mubr.f32.gmra.mrb[0].mxu0 %v1832
    %v1900 = vpop.f32.mrb[0].mxu0
    %v1901 = vadd.f32 0.0, %v1900
    %v1902 = vpop.f32.mrb[0].mxu0
    %1903 = vdwg.mxu0
    %v1905 = vsel %vm102, %v1830, 0
    %1907 = vmatprep.subr.mxu0 0.0
    %1908 = vmatpush1.msra.mxu0 %v54
    %1909 = vmatprep.subr.mxu0 0.0
    %1910 = vmatpush1.msra.mxu0 %v422
    %1911 = vmatprep.subr.mxu0 0.0
    %1912 = vmatpush1.msra.mxu0 0.0
    %1913 = vmatprep.subr.mxu0 0.0
    %1914 = vmatpush1.msra.mxu0 0.0
    %1915 = vmatprep.subr.mxu0 0.0
    %1916 = vmatpush1.msra.mxu0 0.0
    %1917 = vmatprep.subr.mxu0 0.0
    %1918 = vmatpush1.msra.mxu0 0.0
    %1919 = vmatprep.subr.mxu0 0.0
    %1920 = vmatpush1.msra.mxu0 0.0
    %1921 = vmatprep.subr.mxu0 0.0
    %1922 = vmatpush1.msra.mxu0 0.0
    %1923 = vmatprep.subr.mxu0 0.0
    %1924 = vmatpush1.msra.mxu0 0.0
    %1925 = vmatprep.subr.mxu0 0.0
    %1926 = vmatpush1.msra.mxu0 0.0
    %1927 = vmatprep.subr.mxu0 0.0
    %1928 = vmatpush1.msra.mxu0 0.0
    %1929 = vmatprep.subr.mxu0 0.0
    %1930 = vmatpush1.msra.mxu0 0.0
    %1931 = vmatprep.subr.mxu0 0.0
    %1932 = vmatpush1.msra.mxu0 0.0
    %1933 = vmatprep.subr.mxu0 0.0
    %1934 = vmatpush1.msra.mxu0 0.0
    %1935 = vmatprep.subr.mxu0 0.0
    %1936 = vmatpush1.msra.mxu0 0.0
    %1937 = vmatprep.subr.mxu0 0.0
    %1938 = vmatpush1.msra.mxu0 0.0
    %1939 = vmatprep.subr.mxu0 0.0
    %1940 = vmatpush1.msra.mxu0 0.0
    %1941 = vmatprep.subr.mxu0 0.0
    %1942 = vmatpush1.msra.mxu0 0.0
    %1943 = vmatprep.subr.mxu0 0.0
    %1944 = vmatpush1.msra.mxu0 0.0
    %1945 = vmatprep.subr.mxu0 0.0
    %1946 = vmatpush1.msra.mxu0 0.0
    %1947 = vmatprep.subr.mxu0 0.0
    %1948 = vmatpush1.msra.mxu0 0.0
    %1949 = vmatprep.subr.mxu0 0.0
    %1950 = vmatpush1.msra.mxu0 0.0
    %1951 = vmatprep.subr.mxu0 0.0
    %1952 = vmatpush1.msra.mxu0 0.0
    %1953 = vmatprep.subr.mxu0 0.0
    %1954 = vmatpush1.msra.mxu0 0.0
    %1955 = vmatprep.subr.mxu0 0.0
    %1956 = vmatpush1.msra.mxu0 0.0
    %1957 = vmatprep.subr.mxu0 0.0
    %1958 = vmatpush1.msra.mxu0 0.0
    %1959 = vmatprep.subr.mxu0 0.0
    %1960 = vmatpush1.msra.mxu0 0.0
    %1961 = vmatprep.subr.mxu0 0.0
    %1962 = vmatpush1.msra.mxu0 0.0
    %1963 = vmatprep.subr.mxu0 0.0
    %1964 = vmatpush1.msra.mxu0 0.0
    %1965 = vmatprep.subr.mxu0 0.0
    %1966 = vmatpush1.msra.mxu0 0.0
    %1967 = vmatprep.subr.mxu0 0.0
    %1968 = vmatpush1.msra.mxu0 0.0
    %1969 = vmatprep.subr.mxu0 0.0
    %1970 = vmatpush1.msra.mxu0 0.0
    %1971 = vmatprep.mubr.f32.mxu0 0.0
    %1972 = vmatmul.mubr.f32.gmra.mrb[0].mxu0 %v1905
    %v1973 = vpop.f32.mrb[0].mxu0
    %v1974 = vadd.f32 %v1901, %v1973
    %v1975 = vpop.f32.mrb[0].mxu0
    %1976 = vdwg.mxu0
    %v1977 = vadd.f32 %v1974, %v498
    %v1978 = vtanh.pop %v1977
    %1979 = vst.msk [vmem:[#allocation3 + $0x8] sm:$0x3] %vm502, %v1978
    %1980 = vmatprep.subr.mxu0 0.0
    %1981 = vmatpush1.msra.mxu0 %v49
    %1982 = vmatprep.subr.mxu0 0.0
    %1983 = vmatpush1.msra.mxu0 %v108
    %1984 = vmatprep.subr.mxu0 0.0
    %1985 = vmatpush1.msra.mxu0 0.0
    %1986 = vmatprep.subr.mxu0 0.0
    %1987 = vmatpush1.msra.mxu0 0.0
    %1988 = vmatprep.subr.mxu0 0.0
    %1989 = vmatpush1.msra.mxu0 0.0
    %1990 = vmatprep.subr.mxu0 0.0
    %1991 = vmatpush1.msra.mxu0 0.0
    %1992 = vmatprep.subr.mxu0 0.0
    %1993 = vmatpush1.msra.mxu0 0.0
    %1994 = vmatprep.subr.mxu0 0.0
    %1995 = vmatpush1.msra.mxu0 0.0
    %1996 = vmatprep.subr.mxu0 0.0
    %1997 = vmatpush1.msra.mxu0 0.0
    %1998 = vmatprep.subr.mxu0 0.0
    %1999 = vmatpush1.msra.mxu0 0.0
    %2000 = vmatprep.subr.mxu0 0.0
    %2001 = vmatpush1.msra.mxu0 0.0
    %2002 = vmatprep.subr.mxu0 0.0
    %2003 = vmatpush1.msra.mxu0 0.0
    %2004 = vmatprep.subr.mxu0 0.0
    %2005 = vmatpush1.msra.mxu0 0.0
    %2006 = vmatprep.subr.mxu0 0.0
    %2007 = vmatpush1.msra.mxu0 0.0
    %2008 = vmatprep.subr.mxu0 0.0
    %2009 = vmatpush1.msra.mxu0 0.0
    %2010 = vmatprep.subr.mxu0 0.0
    %2011 = vmatpush1.msra.mxu0 0.0
    %2012 = vmatprep.subr.mxu0 0.0
    %2013 = vmatpush1.msra.mxu0 0.0
    %2014 = vmatprep.subr.mxu0 0.0
    %2015 = vmatpush1.msra.mxu0 0.0
    %2016 = vmatprep.subr.mxu0 0.0
    %2017 = vmatpush1.msra.mxu0 0.0
    %2018 = vmatprep.subr.mxu0 0.0
    %2019 = vmatpush1.msra.mxu0 0.0
    %2020 = vmatprep.subr.mxu0 0.0
    %2021 = vmatpush1.msra.mxu0 0.0
    %2022 = vmatprep.subr.mxu0 0.0
    %2023 = vmatpush1.msra.mxu0 0.0
    %2024 = vmatprep.subr.mxu0 0.0
    %2025 = vmatpush1.msra.mxu0 0.0
    %2026 = vmatprep.subr.mxu0 0.0
    %2027 = vmatpush1.msra.mxu0 0.0
    %2028 = vmatprep.subr.mxu0 0.0
    %2029 = vmatpush1.msra.mxu0 0.0
    %2030 = vmatprep.subr.mxu0 0.0
    %2031 = vmatpush1.msra.mxu0 0.0
    %2032 = vmatprep.subr.mxu0 0.0
    %2033 = vmatpush1.msra.mxu0 0.0
    %2034 = vmatprep.subr.mxu0 0.0
    %2035 = vmatpush1.msra.mxu0 0.0
    %2036 = vmatprep.subr.mxu0 0.0
    %2037 = vmatpush1.msra.mxu0 0.0
    %2038 = vmatprep.subr.mxu0 0.0
    %2039 = vmatpush1.msra.mxu0 0.0
    %2040 = vmatprep.subr.mxu0 0.0
    %2041 = vmatpush1.msra.mxu0 0.0
    %2042 = vmatprep.subr.mxu0 0.0
    %2043 = vmatpush1.msra.mxu0 0.0
    %2044 = vmatprep.mubr.f32.mxu0 0.0
    %2045 = vmatmul.mubr.f32.gmra.mrb[0].mxu0 %v1757
    %v2046 = vpop.f32.mrb[0].mxu0
    %v2047 = vadd.f32 0.0, %v2046
    %v2048 = vpop.f32.mrb[0].mxu0
    %2049 = vdwg.mxu0
    %v2051 = vrot.slane %v2047, 6
    %v2053 = vadd.f32 %v96, %v2051
    %v2054 = vtanh.pop %v2053
    %2055 = vmatprep.subr.mxu0 0.0
    %2056 = vmatpush1.msra.mxu0 %v56
    %2057 = vmatprep.subr.mxu0 0.0
    %2058 = vmatpush1.msra.mxu0 %v186
    %2059 = vmatprep.subr.mxu0 0.0
    %2060 = vmatpush1.msra.mxu0 0.0
    %2061 = vmatprep.subr.mxu0 0.0
    %2062 = vmatpush1.msra.mxu0 0.0
    %2063 = vmatprep.subr.mxu0 0.0
    %2064 = vmatpush1.msra.mxu0 0.0
    %2065 = vmatprep.subr.mxu0 0.0
    %2066 = vmatpush1.msra.mxu0 0.0
    %2067 = vmatprep.subr.mxu0 0.0
    %2068 = vmatpush1.msra.mxu0 0.0
    %2069 = vmatprep.subr.mxu0 0.0
    %2070 = vmatpush1.msra.mxu0 0.0
    %2071 = vmatprep.subr.mxu0 0.0
    %2072 = vmatpush1.msra.mxu0 0.0
    %2073 = vmatprep.subr.mxu0 0.0
    %2074 = vmatpush1.msra.mxu0 0.0
    %2075 = vmatprep.subr.mxu0 0.0
    %2076 = vmatpush1.msra.mxu0 0.0
    %2077 = vmatprep.subr.mxu0 0.0
    %2078 = vmatpush1.msra.mxu0 0.0
    %2079 = vmatprep.subr.mxu0 0.0
    %2080 = vmatpush1.msra.mxu0 0.0
    %2081 = vmatprep.subr.mxu0 0.0
    %2082 = vmatpush1.msra.mxu0 0.0
    %2083 = vmatprep.subr.mxu0 0.0
    %2084 = vmatpush1.msra.mxu0 0.0
    %2085 = vmatprep.subr.mxu0 0.0
    %2086 = vmatpush1.msra.mxu0 0.0
    %2087 = vmatprep.subr.mxu0 0.0
    %2088 = vmatpush1.msra.mxu0 0.0
    %2089 = vmatprep.subr.mxu0 0.0
    %2090 = vmatpush1.msra.mxu0 0.0
    %2091 = vmatprep.subr.mxu0 0.0
    %2092 = vmatpush1.msra.mxu0 0.0
    %2093 = vmatprep.subr.mxu0 0.0
    %2094 = vmatpush1.msra.mxu0 0.0
    %2095 = vmatprep.subr.mxu0 0.0
    %2096 = vmatpush1.msra.mxu0 0.0
    %2097 = vmatprep.subr.mxu0 0.0
    %2098 = vmatpush1.msra.mxu0 0.0
    %2099 = vmatprep.subr.mxu0 0.0
    %2100 = vmatpush1.msra.mxu0 0.0
    %2101 = vmatprep.subr.mxu0 0.0
    %2102 = vmatpush1.msra.mxu0 0.0
    %2103 = vmatprep.subr.mxu0 0.0
    %2104 = vmatpush1.msra.mxu0 0.0
    %2105 = vmatprep.subr.mxu0 0.0
    %2106 = vmatpush1.msra.mxu0 0.0
    %2107 = vmatprep.subr.mxu0 0.0
    %2108 = vmatpush1.msra.mxu0 0.0
    %2109 = vmatprep.subr.mxu0 0.0
    %2110 = vmatpush1.msra.mxu0 0.0
    %2111 = vmatprep.subr.mxu0 0.0
    %2112 = vmatpush1.msra.mxu0 0.0
    %2113 = vmatprep.subr.mxu0 0.0
    %2114 = vmatpush1.msra.mxu0 0.0
    %2115 = vmatprep.subr.mxu0 0.0
    %2116 = vmatpush1.msra.mxu0 0.0
    %2117 = vmatprep.subr.mxu0 0.0
    %2118 = vmatpush1.msra.mxu0 0.0
    %2119 = vmatprep.mubr.f32.mxu0 0.0
    %2120 = vmatmul.mubr.f32.gmra.mrb[0].mxu0 %v1905
    %v2121 = vpop.f32.mrb[0].mxu0
    %v2122 = vadd.f32 0.0, %v2121
    %v2123 = vpop.f32.mrb[0].mxu0
    %2124 = vdwg.mxu0
    %v2126 = vrot.slane %v2054, 2
    %v2127 = vsel %vm102, %v2126, 0
    %2129 = vmatprep.subr.mxu0 0.0
    %2130 = vmatpush1.msra.mxu0 %v51
    %2131 = vmatprep.subr.mxu0 0.0
    %2132 = vmatpush1.msra.mxu0 %v262
    %2133 = vmatprep.subr.mxu0 0.0
    %2134 = vmatpush1.msra.mxu0 0.0
    %2135 = vmatprep.subr.mxu0 0.0
    %2136 = vmatpush1.msra.mxu0 0.0
    %2137 = vmatprep.subr.mxu0 0.0
    %2138 = vmatpush1.msra.mxu0 0.0
    %2139 = vmatprep.subr.mxu0 0.0
    %2140 = vmatpush1.msra.mxu0 0.0
    %2141 = vmatprep.subr.mxu0 0.0
    %2142 = vmatpush1.msra.mxu0 0.0
    %2143 = vmatprep.subr.mxu0 0.0
    %2144 = vmatpush1.msra.mxu0 0.0
    %2145 = vmatprep.subr.mxu0 0.0
    %2146 = vmatpush1.msra.mxu0 0.0
    %2147 = vmatprep.subr.mxu0 0.0
    %2148 = vmatpush1.msra.mxu0 0.0
    %2149 = vmatprep.subr.mxu0 0.0
    %2150 = vmatpush1.msra.mxu0 0.0
    %2151 = vmatprep.subr.mxu0 0.0
    %2152 = vmatpush1.msra.mxu0 0.0
    %2153 = vmatprep.subr.mxu0 0.0
    %2154 = vmatpush1.msra.mxu0 0.0
    %2155 = vmatprep.subr.mxu0 0.0
    %2156 = vmatpush1.msra.mxu0 0.0
    %2157 = vmatprep.subr.mxu0 0.0
    %2158 = vmatpush1.msra.mxu0 0.0
    %2159 = vmatprep.subr.mxu0 0.0
    %2160 = vmatpush1.msra.mxu0 0.0
    %2161 = vmatprep.subr.mxu0 0.0
    %2162 = vmatpush1.msra.mxu0 0.0
    %2163 = vmatprep.subr.mxu0 0.0
    %2164 = vmatpush1.msra.mxu0 0.0
    %2165 = vmatprep.subr.mxu0 0.0
    %2166 = vmatpush1.msra.mxu0 0.0
    %2167 = vmatprep.subr.mxu0 0.0
    %2168 = vmatpush1.msra.mxu0 0.0
    %2169 = vmatprep.subr.mxu0 0.0
    %2170 = vmatpush1.msra.mxu0 0.0
    %2171 = vmatprep.subr.mxu0 0.0
    %2172 = vmatpush1.msra.mxu0 0.0
    %2173 = vmatprep.subr.mxu0 0.0
    %2174 = vmatpush1.msra.mxu0 0.0
    %2175 = vmatprep.subr.mxu0 0.0
    %2176 = vmatpush1.msra.mxu0 0.0
    %2177 = vmatprep.subr.mxu0 0.0
    %2178 = vmatpush1.msra.mxu0 0.0
    %2179 = vmatprep.subr.mxu0 0.0
    %2180 = vmatpush1.msra.mxu0 0.0
    %2181 = vmatprep.subr.mxu0 0.0
    %2182 = vmatpush1.msra.mxu0 0.0
    %2183 = vmatprep.subr.mxu0 0.0
    %2184 = vmatpush1.msra.mxu0 0.0
    %2185 = vmatprep.subr.mxu0 0.0
    %2186 = vmatpush1.msra.mxu0 0.0
    %2187 = vmatprep.subr.mxu0 0.0
    %2188 = vmatpush1.msra.mxu0 0.0
    %2189 = vmatprep.subr.mxu0 0.0
    %2190 = vmatpush1.msra.mxu0 0.0
    %2191 = vmatprep.subr.mxu0 0.0
    %2192 = vmatpush1.msra.mxu0 0.0
    %2193 = vmatprep.mubr.f32.mxu0 0.0
    %2194 = vmatmul.mubr.f32.gmra.mrb[0].mxu0 %v2127
    %v2195 = vpop.f32.mrb[0].mxu0
    %v2196 = vadd.f32 %v2122, %v2195
    %v2197 = vpop.f32.mrb[0].mxu0
    %2198 = vdwg.mxu0
    %v2199 = vadd.f32 %v2196, %v338
    %v2200 = vtanh.pop %v2199
    %v2202 = vsel %vm102, %v1978, 0
    %2204 = vmatprep.subr.mxu0 0.0
    %2205 = vmatpush1.msra.mxu0 %v59
    %2206 = vmatprep.subr.mxu0 0.0
    %2207 = vmatpush1.msra.mxu0 %v346
    %2208 = vmatprep.subr.mxu0 0.0
    %2209 = vmatpush1.msra.mxu0 0.0
    %2210 = vmatprep.subr.mxu0 0.0
    %2211 = vmatpush1.msra.mxu0 0.0
    %2212 = vmatprep.subr.mxu0 0.0
    %2213 = vmatpush1.msra.mxu0 0.0
    %2214 = vmatprep.subr.mxu0 0.0
    %2215 = vmatpush1.msra.mxu0 0.0
    %2216 = vmatprep.subr.mxu0 0.0
    %2217 = vmatpush1.msra.mxu0 0.0
    %2218 = vmatprep.subr.mxu0 0.0
    %2219 = vmatpush1.msra.mxu0 0.0
    %2220 = vmatprep.subr.mxu0 0.0
    %2221 = vmatpush1.msra.mxu0 0.0
    %2222 = vmatprep.subr.mxu0 0.0
    %2223 = vmatpush1.msra.mxu0 0.0
    %2224 = vmatprep.subr.mxu0 0.0
    %2225 = vmatpush1.msra.mxu0 0.0
    %2226 = vmatprep.subr.mxu0 0.0
    %2227 = vmatpush1.msra.mxu0 0.0
    %2228 = vmatprep.subr.mxu0 0.0
    %2229 = vmatpush1.msra.mxu0 0.0
    %2230 = vmatprep.subr.mxu0 0.0
    %2231 = vmatpush1.msra.mxu0 0.0
    %2232 = vmatprep.subr.mxu0 0.0
    %2233 = vmatpush1.msra.mxu0 0.0
    %2234 = vmatprep.subr.mxu0 0.0
    %2235 = vmatpush1.msra.mxu0 0.0
    %2236 = vmatprep.subr.mxu0 0.0
    %2237 = vmatpush1.msra.mxu0 0.0
    %2238 = vmatprep.subr.mxu0 0.0
    %2239 = vmatpush1.msra.mxu0 0.0
    %2240 = vmatprep.subr.mxu0 0.0
    %2241 = vmatpush1.msra.mxu0 0.0
    %2242 = vmatprep.subr.mxu0 0.0
    %2243 = vmatpush1.msra.mxu0 0.0
    %2244 = vmatprep.subr.mxu0 0.0
    %2245 = vmatpush1.msra.mxu0 0.0
    %2246 = vmatprep.subr.mxu0 0.0
    %2247 = vmatpush1.msra.mxu0 0.0
    %2248 = vmatprep.subr.mxu0 0.0
    %2249 = vmatpush1.msra.mxu0 0.0
    %2250 = vmatprep.subr.mxu0 0.0
    %2251 = vmatpush1.msra.mxu0 0.0
    %2252 = vmatprep.subr.mxu0 0.0
    %2253 = vmatpush1.msra.mxu0 0.0
    %2254 = vmatprep.subr.mxu0 0.0
    %2255 = vmatpush1.msra.mxu0 0.0
    %2256 = vmatprep.subr.mxu0 0.0
    %2257 = vmatpush1.msra.mxu0 0.0
    %2258 = vmatprep.subr.mxu0 0.0
    %2259 = vmatpush1.msra.mxu0 0.0
    %2260 = vmatprep.subr.mxu0 0.0
    %2261 = vmatpush1.msra.mxu0 0.0
    %2262 = vmatprep.subr.mxu0 0.0
    %2263 = vmatpush1.msra.mxu0 0.0
    %2264 = vmatprep.subr.mxu0 0.0
    %2265 = vmatpush1.msra.mxu0 0.0
    %2266 = vmatprep.subr.mxu0 0.0
    %2267 = vmatpush1.msra.mxu0 0.0
    %2268 = vmatprep.mubr.f32.mxu0 0.0
    %2269 = vmatmul.mubr.f32.gmra.mrb[0].mxu0 %v2202
    %v2270 = vpop.f32.mrb[0].mxu0
    %v2271 = vadd.f32 0.0, %v2270
    %v2272 = vpop.f32.mrb[0].mxu0
    %2273 = vdwg.mxu0
    %v2275 = vsel %vm102, %v2200, 0
    %2277 = vmatprep.subr.mxu0 0.0
    %2278 = vmatpush1.msra.mxu0 %v54
    %2279 = vmatprep.subr.mxu0 0.0
    %2280 = vmatpush1.msra.mxu0 %v422
    %2281 = vmatprep.subr.mxu0 0.0
    %2282 = vmatpush1.msra.mxu0 0.0
    %2283 = vmatprep.subr.mxu0 0.0
    %2284 = vmatpush1.msra.mxu0 0.0
    %2285 = vmatprep.subr.mxu0 0.0
    %2286 = vmatpush1.msra.mxu0 0.0
    %2287 = vmatprep.subr.mxu0 0.0
    %2288 = vmatpush1.msra.mxu0 0.0
    %2289 = vmatprep.subr.mxu0 0.0
    %2290 = vmatpush1.msra.mxu0 0.0
    %2291 = vmatprep.subr.mxu0 0.0
    %2292 = vmatpush1.msra.mxu0 0.0
    %2293 = vmatprep.subr.mxu0 0.0
    %2294 = vmatpush1.msra.mxu0 0.0
    %2295 = vmatprep.subr.mxu0 0.0
    %2296 = vmatpush1.msra.mxu0 0.0
    %2297 = vmatprep.subr.mxu0 0.0
    %2298 = vmatpush1.msra.mxu0 0.0
    %2299 = vmatprep.subr.mxu0 0.0
    %2300 = vmatpush1.msra.mxu0 0.0
    %2301 = vmatprep.subr.mxu0 0.0
    %2302 = vmatpush1.msra.mxu0 0.0
    %2303 = vmatprep.subr.mxu0 0.0
    %2304 = vmatpush1.msra.mxu0 0.0
    %2305 = vmatprep.subr.mxu0 0.0
    %2306 = vmatpush1.msra.mxu0 0.0
    %2307 = vmatprep.subr.mxu0 0.0
    %2308 = vmatpush1.msra.mxu0 0.0
    %2309 = vmatprep.subr.mxu0 0.0
    %2310 = vmatpush1.msra.mxu0 0.0
    %2311 = vmatprep.subr.mxu0 0.0
    %2312 = vmatpush1.msra.mxu0 0.0
    %2313 = vmatprep.subr.mxu0 0.0
    %2314 = vmatpush1.msra.mxu0 0.0
    %2315 = vmatprep.subr.mxu0 0.0
    %2316 = vmatpush1.msra.mxu0 0.0
    %2317 = vmatprep.subr.mxu0 0.0
    %2318 = vmatpush1.msra.mxu0 0.0
    %2319 = vmatprep.subr.mxu0 0.0
    %2320 = vmatpush1.msra.mxu0 0.0
    %2321 = vmatprep.subr.mxu0 0.0
    %2322 = vmatpush1.msra.mxu0 0.0
    %2323 = vmatprep.subr.mxu0 0.0
    %2324 = vmatpush1.msra.mxu0 0.0
    %2325 = vmatprep.subr.mxu0 0.0
    %2326 = vmatpush1.msra.mxu0 0.0
    %2327 = vmatprep.subr.mxu0 0.0
    %2328 = vmatpush1.msra.mxu0 0.0
    %2329 = vmatprep.subr.mxu0 0.0
    %2330 = vmatpush1.msra.mxu0 0.0
    %2331 = vmatprep.subr.mxu0 0.0
    %2332 = vmatpush1.msra.mxu0 0.0
    %2333 = vmatprep.subr.mxu0 0.0
    %2334 = vmatpush1.msra.mxu0 0.0
    %2335 = vmatprep.subr.mxu0 0.0
    %2336 = vmatpush1.msra.mxu0 0.0
    %2337 = vmatprep.subr.mxu0 0.0
    %2338 = vmatpush1.msra.mxu0 0.0
    %2339 = vmatprep.subr.mxu0 0.0
    %2340 = vmatpush1.msra.mxu0 0.0
    %2341 = vmatprep.mubr.f32.mxu0 0.0
    %2342 = vmatmul.mubr.f32.gmra.mrb[0].mxu0 %v2275
    %v2343 = vpop.f32.mrb[0].mxu0
    %v2344 = vadd.f32 %v2271, %v2343
    %v2345 = vpop.f32.mrb[0].mxu0
    %2346 = vdwg.mxu0
    %v2347 = vadd.f32 %v2344, %v498
    %v2348 = vtanh.pop %v2347
    %2349 = vst.msk [vmem:[#allocation3 + $0xa] sm:$0x3] %vm502, %v2348
    %2350 = vmatprep.subr.mxu0 0.0
    %2351 = vmatpush1.msra.mxu0 %v49
    %2352 = vmatprep.subr.mxu0 0.0
    %2353 = vmatpush1.msra.mxu0 %v108
    %2354 = vmatprep.subr.mxu0 0.0
    %2355 = vmatpush1.msra.mxu0 0.0
    %2356 = vmatprep.subr.mxu0 0.0
    %2357 = vmatpush1.msra.mxu0 0.0
    %2358 = vmatprep.subr.mxu0 0.0
    %2359 = vmatpush1.msra.mxu0 0.0
    %2360 = vmatprep.subr.mxu0 0.0
    %2361 = vmatpush1.msra.mxu0 0.0
    %2362 = vmatprep.subr.mxu0 0.0
    %2363 = vmatpush1.msra.mxu0 0.0
    %2364 = vmatprep.subr.mxu0 0.0
    %2365 = vmatpush1.msra.mxu0 0.0
    %2366 = vmatprep.subr.mxu0 0.0
    %2367 = vmatpush1.msra.mxu0 0.0
    %2368 = vmatprep.subr.mxu0 0.0
    %2369 = vmatpush1.msra.mxu0 0.0
    %2370 = vmatprep.subr.mxu0 0.0
    %2371 = vmatpush1.msra.mxu0 0.0
    %2372 = vmatprep.subr.mxu0 0.0
    %2373 = vmatpush1.msra.mxu0 0.0
    %2374 = vmatprep.subr.mxu0 0.0
    %2375 = vmatpush1.msra.mxu0 0.0
    %2376 = vmatprep.subr.mxu0 0.0
    %2377 = vmatpush1.msra.mxu0 0.0
    %2378 = vmatprep.subr.mxu0 0.0
    %2379 = vmatpush1.msra.mxu0 0.0
    %2380 = vmatprep.subr.mxu0 0.0
    %2381 = vmatpush1.msra.mxu0 0.0
    %2382 = vmatprep.subr.mxu0 0.0
    %2383 = vmatpush1.msra.mxu0 0.0
    %2384 = vmatprep.subr.mxu0 0.0
    %2385 = vmatpush1.msra.mxu0 0.0
    %2386 = vmatprep.subr.mxu0 0.0
    %2387 = vmatpush1.msra.mxu0 0.0
    %2388 = vmatprep.subr.mxu0 0.0
    %2389 = vmatpush1.msra.mxu0 0.0
    %2390 = vmatprep.subr.mxu0 0.0
    %2391 = vmatpush1.msra.mxu0 0.0
    %2392 = vmatprep.subr.mxu0 0.0
    %2393 = vmatpush1.msra.mxu0 0.0
    %2394 = vmatprep.subr.mxu0 0.0
    %2395 = vmatpush1.msra.mxu0 0.0
    %2396 = vmatprep.subr.mxu0 0.0
    %2397 = vmatpush1.msra.mxu0 0.0
    %2398 = vmatprep.subr.mxu0 0.0
    %2399 = vmatpush1.msra.mxu0 0.0
    %2400 = vmatprep.subr.mxu0 0.0
    %2401 = vmatpush1.msra.mxu0 0.0
    %2402 = vmatprep.subr.mxu0 0.0
    %2403 = vmatpush1.msra.mxu0 0.0
    %2404 = vmatprep.subr.mxu0 0.0
    %2405 = vmatpush1.msra.mxu0 0.0
    %2406 = vmatprep.subr.mxu0 0.0
    %2407 = vmatpush1.msra.mxu0 0.0
    %2408 = vmatprep.subr.mxu0 0.0
    %2409 = vmatpush1.msra.mxu0 0.0
    %2410 = vmatprep.subr.mxu0 0.0
    %2411 = vmatpush1.msra.mxu0 0.0
    %2412 = vmatprep.subr.mxu0 0.0
    %2413 = vmatpush1.msra.mxu0 0.0
    %2414 = vmatprep.mubr.f32.mxu0 0.0
    %2415 = vmatmul.mubr.f32.gmra.mrb[0].mxu0 %v2127
    %v2416 = vpop.f32.mrb[0].mxu0
    %v2417 = vadd.f32 0.0, %v2416
    %v2418 = vpop.f32.mrb[0].mxu0
    %2419 = vdwg.mxu0
    %v2421 = vrot.slane %v2417, 4
    %v2423 = vadd.f32 %v96, %v2421
    %v2424 = vtanh.pop %v2423
    %2425 = vmatprep.subr.mxu0 0.0
    %2426 = vmatpush1.msra.mxu0 %v56
    %2427 = vmatprep.subr.mxu0 0.0
    %2428 = vmatpush1.msra.mxu0 %v186
    %2429 = vmatprep.subr.mxu0 0.0
    %2430 = vmatpush1.msra.mxu0 0.0
    %2431 = vmatprep.subr.mxu0 0.0
    %2432 = vmatpush1.msra.mxu0 0.0
    %2433 = vmatprep.subr.mxu0 0.0
    %2434 = vmatpush1.msra.mxu0 0.0
    %2435 = vmatprep.subr.mxu0 0.0
    %2436 = vmatpush1.msra.mxu0 0.0
    %2437 = vmatprep.subr.mxu0 0.0
    %2438 = vmatpush1.msra.mxu0 0.0
    %2439 = vmatprep.subr.mxu0 0.0
    %2440 = vmatpush1.msra.mxu0 0.0
    %2441 = vmatprep.subr.mxu0 0.0
    %2442 = vmatpush1.msra.mxu0 0.0
    %2443 = vmatprep.subr.mxu0 0.0
    %2444 = vmatpush1.msra.mxu0 0.0
    %2445 = vmatprep.subr.mxu0 0.0
    %2446 = vmatpush1.msra.mxu0 0.0
    %2447 = vmatprep.subr.mxu0 0.0
    %2448 = vmatpush1.msra.mxu0 0.0
    %2449 = vmatprep.subr.mxu0 0.0
    %2450 = vmatpush1.msra.mxu0 0.0
    %2451 = vmatprep.subr.mxu0 0.0
    %2452 = vmatpush1.msra.mxu0 0.0
    %2453 = vmatprep.subr.mxu0 0.0
    %2454 = vmatpush1.msra.mxu0 0.0
    %2455 = vmatprep.subr.mxu0 0.0
    %2456 = vmatpush1.msra.mxu0 0.0
    %2457 = vmatprep.subr.mxu0 0.0
    %2458 = vmatpush1.msra.mxu0 0.0
    %2459 = vmatprep.subr.mxu0 0.0
    %2460 = vmatpush1.msra.mxu0 0.0
    %2461 = vmatprep.subr.mxu0 0.0
    %2462 = vmatpush1.msra.mxu0 0.0
    %2463 = vmatprep.subr.mxu0 0.0
    %2464 = vmatpush1.msra.mxu0 0.0
    %2465 = vmatprep.subr.mxu0 0.0
    %2466 = vmatpush1.msra.mxu0 0.0
    %2467 = vmatprep.subr.mxu0 0.0
    %2468 = vmatpush1.msra.mxu0 0.0
    %2469 = vmatprep.subr.mxu0 0.0
    %2470 = vmatpush1.msra.mxu0 0.0
    %2471 = vmatprep.subr.mxu0 0.0
    %2472 = vmatpush1.msra.mxu0 0.0
    %2473 = vmatprep.subr.mxu0 0.0
    %2474 = vmatpush1.msra.mxu0 0.0
    %2475 = vmatprep.subr.mxu0 0.0
    %2476 = vmatpush1.msra.mxu0 0.0
    %2477 = vmatprep.subr.mxu0 0.0
    %2478 = vmatpush1.msra.mxu0 0.0
    %2479 = vmatprep.subr.mxu0 0.0
    %2480 = vmatpush1.msra.mxu0 0.0
    %2481 = vmatprep.subr.mxu0 0.0
    %2482 = vmatpush1.msra.mxu0 0.0
    %2483 = vmatprep.subr.mxu0 0.0
    %2484 = vmatpush1.msra.mxu0 0.0
    %2485 = vmatprep.subr.mxu0 0.0
    %2486 = vmatpush1.msra.mxu0 0.0
    %2487 = vmatprep.subr.mxu0 0.0
    %2488 = vmatpush1.msra.mxu0 0.0
    %2489 = vmatprep.mubr.f32.mxu0 0.0
    %2490 = vmatmul.mubr.f32.gmra.mrb[0].mxu0 %v2275
    %v2491 = vpop.f32.mrb[0].mxu0
    %v2492 = vadd.f32 0.0, %v2491
    %v2493 = vpop.f32.mrb[0].mxu0
    %2494 = vdwg.mxu0
    %v2496 = vrot.slane %v2424, 4
    %v2497 = vsel %vm102, %v2496, 0
    %2499 = vmatprep.subr.mxu0 0.0
    %2500 = vmatpush1.msra.mxu0 %v51
    %2501 = vmatprep.subr.mxu0 0.0
    %2502 = vmatpush1.msra.mxu0 %v262
    %2503 = vmatprep.subr.mxu0 0.0
    %2504 = vmatpush1.msra.mxu0 0.0
    %2505 = vmatprep.subr.mxu0 0.0
    %2506 = vmatpush1.msra.mxu0 0.0
    %2507 = vmatprep.subr.mxu0 0.0
    %2508 = vmatpush1.msra.mxu0 0.0
    %2509 = vmatprep.subr.mxu0 0.0
    %2510 = vmatpush1.msra.mxu0 0.0
    %2511 = vmatprep.subr.mxu0 0.0
    %2512 = vmatpush1.msra.mxu0 0.0
    %2513 = vmatprep.subr.mxu0 0.0
    %2514 = vmatpush1.msra.mxu0 0.0
    %2515 = vmatprep.subr.mxu0 0.0
    %2516 = vmatpush1.msra.mxu0 0.0
    %2517 = vmatprep.subr.mxu0 0.0
    %2518 = vmatpush1.msra.mxu0 0.0
    %2519 = vmatprep.subr.mxu0 0.0
    %2520 = vmatpush1.msra.mxu0 0.0
    %2521 = vmatprep.subr.mxu0 0.0
    %2522 = vmatpush1.msra.mxu0 0.0
    %2523 = vmatprep.subr.mxu0 0.0
    %2524 = vmatpush1.msra.mxu0 0.0
    %2525 = vmatprep.subr.mxu0 0.0
    %2526 = vmatpush1.msra.mxu0 0.0
    %2527 = vmatprep.subr.mxu0 0.0
    %2528 = vmatpush1.msra.mxu0 0.0
    %2529 = vmatprep.subr.mxu0 0.0
    %2530 = vmatpush1.msra.mxu0 0.0
    %2531 = vmatprep.subr.mxu0 0.0
    %2532 = vmatpush1.msra.mxu0 0.0
    %2533 = vmatprep.subr.mxu0 0.0
    %2534 = vmatpush1.msra.mxu0 0.0
    %2535 = vmatprep.subr.mxu0 0.0
    %2536 = vmatpush1.msra.mxu0 0.0
    %2537 = vmatprep.subr.mxu0 0.0
    %2538 = vmatpush1.msra.mxu0 0.0
    %2539 = vmatprep.subr.mxu0 0.0
    %2540 = vmatpush1.msra.mxu0 0.0
    %2541 = vmatprep.subr.mxu0 0.0
    %2542 = vmatpush1.msra.mxu0 0.0
    %2543 = vmatprep.subr.mxu0 0.0
    %2544 = vmatpush1.msra.mxu0 0.0
    %2545 = vmatprep.subr.mxu0 0.0
    %2546 = vmatpush1.msra.mxu0 0.0
    %2547 = vmatprep.subr.mxu0 0.0
    %2548 = vmatpush1.msra.mxu0 0.0
    %2549 = vmatprep.subr.mxu0 0.0
    %2550 = vmatpush1.msra.mxu0 0.0
    %2551 = vmatprep.subr.mxu0 0.0
    %2552 = vmatpush1.msra.mxu0 0.0
    %2553 = vmatprep.subr.mxu0 0.0
    %2554 = vmatpush1.msra.mxu0 0.0
    %2555 = vmatprep.subr.mxu0 0.0
    %2556 = vmatpush1.msra.mxu0 0.0
    %2557 = vmatprep.subr.mxu0 0.0
    %2558 = vmatpush1.msra.mxu0 0.0
    %2559 = vmatprep.subr.mxu0 0.0
    %2560 = vmatpush1.msra.mxu0 0.0
    %2561 = vmatprep.subr.mxu0 0.0
    %2562 = vmatpush1.msra.mxu0 0.0
    %2563 = vmatprep.mubr.f32.mxu0 0.0
    %2564 = vmatmul.mubr.f32.gmra.mrb[0].mxu0 %v2497
    %v2565 = vpop.f32.mrb[0].mxu0
    %v2566 = vadd.f32 %v2492, %v2565
    %v2567 = vpop.f32.mrb[0].mxu0
    %2568 = vdwg.mxu0
    %v2569 = vadd.f32 %v2566, %v338
    %v2570 = vtanh.pop %v2569
    %v2572 = vsel %vm102, %v2348, 0
    %2574 = vmatprep.subr.mxu0 0.0
    %2575 = vmatpush1.msra.mxu0 %v59
    %2576 = vmatprep.subr.mxu0 0.0
    %2577 = vmatpush1.msra.mxu0 %v346
    %2578 = vmatprep.subr.mxu0 0.0
    %2579 = vmatpush1.msra.mxu0 0.0
    %2580 = vmatprep.subr.mxu0 0.0
    %2581 = vmatpush1.msra.mxu0 0.0
    %2582 = vmatprep.subr.mxu0 0.0
    %2583 = vmatpush1.msra.mxu0 0.0
    %2584 = vmatprep.subr.mxu0 0.0
    %2585 = vmatpush1.msra.mxu0 0.0
    %2586 = vmatprep.subr.mxu0 0.0
    %2587 = vmatpush1.msra.mxu0 0.0
    %2588 = vmatprep.subr.mxu0 0.0
    %2589 = vmatpush1.msra.mxu0 0.0
    %2590 = vmatprep.subr.mxu0 0.0
    %2591 = vmatpush1.msra.mxu0 0.0
    %2592 = vmatprep.subr.mxu0 0.0
    %2593 = vmatpush1.msra.mxu0 0.0
    %2594 = vmatprep.subr.mxu0 0.0
    %2595 = vmatpush1.msra.mxu0 0.0
    %2596 = vmatprep.subr.mxu0 0.0
    %2597 = vmatpush1.msra.mxu0 0.0
    %2598 = vmatprep.subr.mxu0 0.0
    %2599 = vmatpush1.msra.mxu0 0.0
    %2600 = vmatprep.subr.mxu0 0.0
    %2601 = vmatpush1.msra.mxu0 0.0
    %2602 = vmatprep.subr.mxu0 0.0
    %2603 = vmatpush1.msra.mxu0 0.0
    %2604 = vmatprep.subr.mxu0 0.0
    %2605 = vmatpush1.msra.mxu0 0.0
    %2606 = vmatprep.subr.mxu0 0.0
    %2607 = vmatpush1.msra.mxu0 0.0
    %2608 = vmatprep.subr.mxu0 0.0
    %2609 = vmatpush1.msra.mxu0 0.0
    %2610 = vmatprep.subr.mxu0 0.0
    %2611 = vmatpush1.msra.mxu0 0.0
    %2612 = vmatprep.subr.mxu0 0.0
    %2613 = vmatpush1.msra.mxu0 0.0
    %2614 = vmatprep.subr.mxu0 0.0
    %2615 = vmatpush1.msra.mxu0 0.0
    %2616 = vmatprep.subr.mxu0 0.0
    %2617 = vmatpush1.msra.mxu0 0.0
    %2618 = vmatprep.subr.mxu0 0.0
    %2619 = vmatpush1.msra.mxu0 0.0
    %2620 = vmatprep.subr.mxu0 0.0
    %2621 = vmatpush1.msra.mxu0 0.0
    %2622 = vmatprep.subr.mxu0 0.0
    %2623 = vmatpush1.msra.mxu0 0.0
    %2624 = vmatprep.subr.mxu0 0.0
    %2625 = vmatpush1.msra.mxu0 0.0
    %2626 = vmatprep.subr.mxu0 0.0
    %2627 = vmatpush1.msra.mxu0 0.0
    %2628 = vmatprep.subr.mxu0 0.0
    %2629 = vmatpush1.msra.mxu0 0.0
    %2630 = vmatprep.subr.mxu0 0.0
    %2631 = vmatpush1.msra.mxu0 0.0
    %2632 = vmatprep.subr.mxu0 0.0
    %2633 = vmatpush1.msra.mxu0 0.0
    %2634 = vmatprep.subr.mxu0 0.0
    %2635 = vmatpush1.msra.mxu0 0.0
    %2636 = vmatprep.subr.mxu0 0.0
    %2637 = vmatpush1.msra.mxu0 0.0
    %2638 = vmatprep.mubr.f32.mxu0 0.0
    %2639 = vmatmul.mubr.f32.gmra.mrb[0].mxu0 %v2572
    %v2640 = vpop.f32.mrb[0].mxu0
    %v2641 = vadd.f32 0.0, %v2640
    %v2642 = vpop.f32.mrb[0].mxu0
    %2643 = vdwg.mxu0
    %v2645 = vsel %vm102, %v2570, 0
    %2647 = vmatprep.subr.mxu0 0.0
    %2648 = vmatpush1.msra.mxu0 %v54
    %2649 = vmatprep.subr.mxu0 0.0
    %2650 = vmatpush1.msra.mxu0 %v422
    %2651 = vmatprep.subr.mxu0 0.0
    %2652 = vmatpush1.msra.mxu0 0.0
    %2653 = vmatprep.subr.mxu0 0.0
    %2654 = vmatpush1.msra.mxu0 0.0
    %2655 = vmatprep.subr.mxu0 0.0
    %2656 = vmatpush1.msra.mxu0 0.0
    %2657 = vmatprep.subr.mxu0 0.0
    %2658 = vmatpush1.msra.mxu0 0.0
    %2659 = vmatprep.subr.mxu0 0.0
    %2660 = vmatpush1.msra.mxu0 0.0
    %2661 = vmatprep.subr.mxu0 0.0
    %2662 = vmatpush1.msra.mxu0 0.0
    %2663 = vmatprep.subr.mxu0 0.0
    %2664 = vmatpush1.msra.mxu0 0.0
    %2665 = vmatprep.subr.mxu0 0.0
    %2666 = vmatpush1.msra.mxu0 0.0
    %2667 = vmatprep.subr.mxu0 0.0
    %2668 = vmatpush1.msra.mxu0 0.0
    %2669 = vmatprep.subr.mxu0 0.0
    %2670 = vmatpush1.msra.mxu0 0.0
    %2671 = vmatprep.subr.mxu0 0.0
    %2672 = vmatpush1.msra.mxu0 0.0
    %2673 = vmatprep.subr.mxu0 0.0
    %2674 = vmatpush1.msra.mxu0 0.0
    %2675 = vmatprep.subr.mxu0 0.0
    %2676 = vmatpush1.msra.mxu0 0.0
    %2677 = vmatprep.subr.mxu0 0.0
    %2678 = vmatpush1.msra.mxu0 0.0
    %2679 = vmatprep.subr.mxu0 0.0
    %2680 = vmatpush1.msra.mxu0 0.0
    %2681 = vmatprep.subr.mxu0 0.0
    %2682 = vmatpush1.msra.mxu0 0.0
    %2683 = vmatprep.subr.mxu0 0.0
    %2684 = vmatpush1.msra.mxu0 0.0
    %2685 = vmatprep.subr.mxu0 0.0
    %2686 = vmatpush1.msra.mxu0 0.0
    %2687 = vmatprep.subr.mxu0 0.0
    %2688 = vmatpush1.msra.mxu0 0.0
    %2689 = vmatprep.subr.mxu0 0.0
    %2690 = vmatpush1.msra.mxu0 0.0
    %2691 = vmatprep.subr.mxu0 0.0
    %2692 = vmatpush1.msra.mxu0 0.0
    %2693 = vmatprep.subr.mxu0 0.0
    %2694 = vmatpush1.msra.mxu0 0.0
    %2695 = vmatprep.subr.mxu0 0.0
    %2696 = vmatpush1.msra.mxu0 0.0
    %2697 = vmatprep.subr.mxu0 0.0
    %2698 = vmatpush1.msra.mxu0 0.0
    %2699 = vmatprep.subr.mxu0 0.0
    %2700 = vmatpush1.msra.mxu0 0.0
    %2701 = vmatprep.subr.mxu0 0.0
    %2702 = vmatpush1.msra.mxu0 0.0
    %2703 = vmatprep.subr.mxu0 0.0
    %2704 = vmatpush1.msra.mxu0 0.0
    %2705 = vmatprep.subr.mxu0 0.0
    %2706 = vmatpush1.msra.mxu0 0.0
    %2707 = vmatprep.subr.mxu0 0.0
    %2708 = vmatpush1.msra.mxu0 0.0
    %2709 = vmatprep.subr.mxu0 0.0
    %2710 = vmatpush1.msra.mxu0 0.0
    %2711 = vmatprep.mubr.f32.mxu0 0.0
    %2712 = vmatmul.mubr.f32.gmra.mrb[0].mxu0 %v2645
    %v2713 = vpop.f32.mrb[0].mxu0
    %v2714 = vadd.f32 %v2641, %v2713
    %v2715 = vpop.f32.mrb[0].mxu0
    %2716 = vdwg.mxu0
    %v2717 = vadd.f32 %v2714, %v498
    %v2718 = vtanh.pop %v2717
    %2719 = vst.msk [vmem:[#allocation3 + $0xc] sm:$0x3] %vm502, %v2718
    %2720 = vmatprep.subr.mxu0 0.0
    %2721 = vmatpush1.msra.mxu0 %v49
    %2722 = vmatprep.subr.mxu0 0.0
    %2723 = vmatpush1.msra.mxu0 %v108
    %2724 = vmatprep.subr.mxu0 0.0
    %2725 = vmatpush1.msra.mxu0 0.0
    %2726 = vmatprep.subr.mxu0 0.0
    %2727 = vmatpush1.msra.mxu0 0.0
    %2728 = vmatprep.subr.mxu0 0.0
    %2729 = vmatpush1.msra.mxu0 0.0
    %2730 = vmatprep.subr.mxu0 0.0
    %2731 = vmatpush1.msra.mxu0 0.0
    %2732 = vmatprep.subr.mxu0 0.0
    %2733 = vmatpush1.msra.mxu0 0.0
    %2734 = vmatprep.subr.mxu0 0.0
    %2735 = vmatpush1.msra.mxu0 0.0
    %2736 = vmatprep.subr.mxu0 0.0
    %2737 = vmatpush1.msra.mxu0 0.0
    %2738 = vmatprep.subr.mxu0 0.0
    %2739 = vmatpush1.msra.mxu0 0.0
    %2740 = vmatprep.subr.mxu0 0.0
    %2741 = vmatpush1.msra.mxu0 0.0
    %2742 = vmatprep.subr.mxu0 0.0
    %2743 = vmatpush1.msra.mxu0 0.0
    %2744 = vmatprep.subr.mxu0 0.0
    %2745 = vmatpush1.msra.mxu0 0.0
    %2746 = vmatprep.subr.mxu0 0.0
    %2747 = vmatpush1.msra.mxu0 0.0
    %2748 = vmatprep.subr.mxu0 0.0
    %2749 = vmatpush1.msra.mxu0 0.0
    %2750 = vmatprep.subr.mxu0 0.0
    %2751 = vmatpush1.msra.mxu0 0.0
    %2752 = vmatprep.subr.mxu0 0.0
    %2753 = vmatpush1.msra.mxu0 0.0
    %2754 = vmatprep.subr.mxu0 0.0
    %2755 = vmatpush1.msra.mxu0 0.0
    %2756 = vmatprep.subr.mxu0 0.0
    %2757 = vmatpush1.msra.mxu0 0.0
    %2758 = vmatprep.subr.mxu0 0.0
    %2759 = vmatpush1.msra.mxu0 0.0
    %2760 = vmatprep.subr.mxu0 0.0
    %2761 = vmatpush1.msra.mxu0 0.0
    %2762 = vmatprep.subr.mxu0 0.0
    %2763 = vmatpush1.msra.mxu0 0.0
    %2764 = vmatprep.subr.mxu0 0.0
    %2765 = vmatpush1.msra.mxu0 0.0
    %2766 = vmatprep.subr.mxu0 0.0
    %2767 = vmatpush1.msra.mxu0 0.0
    %2768 = vmatprep.subr.mxu0 0.0
    %2769 = vmatpush1.msra.mxu0 0.0
    %2770 = vmatprep.subr.mxu0 0.0
    %2771 = vmatpush1.msra.mxu0 0.0
    %2772 = vmatprep.subr.mxu0 0.0
    %2773 = vmatpush1.msra.mxu0 0.0
    %2774 = vmatprep.subr.mxu0 0.0
    %2775 = vmatpush1.msra.mxu0 0.0
    %2776 = vmatprep.subr.mxu0 0.0
    %2777 = vmatpush1.msra.mxu0 0.0
    %2778 = vmatprep.subr.mxu0 0.0
    %2779 = vmatpush1.msra.mxu0 0.0
    %2780 = vmatprep.subr.mxu0 0.0
    %2781 = vmatpush1.msra.mxu0 0.0
    %2782 = vmatprep.subr.mxu0 0.0
    %2783 = vmatpush1.msra.mxu0 0.0
    %2784 = vmatprep.mubr.f32.mxu0 0.0
    %2785 = vmatmul.mubr.f32.gmra.mrb[0].mxu0 %v2497
    %v2786 = vpop.f32.mrb[0].mxu0
    %v2787 = vadd.f32 0.0, %v2786
    %v2788 = vpop.f32.mrb[0].mxu0
    %2789 = vdwg.mxu0
    %v2791 = vrot.slane %v2787, 2
    %v2793 = vadd.f32 %v96, %v2791
    %v2794 = vtanh.pop %v2793
    %2795 = vmatprep.subr.mxu0 0.0
    %2796 = vmatpush1.msra.mxu0 %v56
    %2797 = vmatprep.subr.mxu0 0.0
    %2798 = vmatpush1.msra.mxu0 %v186
    %2799 = vmatprep.subr.mxu0 0.0
    %2800 = vmatpush1.msra.mxu0 0.0
    %2801 = vmatprep.subr.mxu0 0.0
    %2802 = vmatpush1.msra.mxu0 0.0
    %2803 = vmatprep.subr.mxu0 0.0
    %2804 = vmatpush1.msra.mxu0 0.0
    %2805 = vmatprep.subr.mxu0 0.0
    %2806 = vmatpush1.msra.mxu0 0.0
    %2807 = vmatprep.subr.mxu0 0.0
    %2808 = vmatpush1.msra.mxu0 0.0
    %2809 = vmatprep.subr.mxu0 0.0
    %2810 = vmatpush1.msra.mxu0 0.0
    %2811 = vmatprep.subr.mxu0 0.0
    %2812 = vmatpush1.msra.mxu0 0.0
    %2813 = vmatprep.subr.mxu0 0.0
    %2814 = vmatpush1.msra.mxu0 0.0
    %2815 = vmatprep.subr.mxu0 0.0
    %2816 = vmatpush1.msra.mxu0 0.0
    %2817 = vmatprep.subr.mxu0 0.0
    %2818 = vmatpush1.msra.mxu0 0.0
    %2819 = vmatprep.subr.mxu0 0.0
    %2820 = vmatpush1.msra.mxu0 0.0
    %2821 = vmatprep.subr.mxu0 0.0
    %2822 = vmatpush1.msra.mxu0 0.0
    %2823 = vmatprep.subr.mxu0 0.0
    %2824 = vmatpush1.msra.mxu0 0.0
    %2825 = vmatprep.subr.mxu0 0.0
    %2826 = vmatpush1.msra.mxu0 0.0
    %2827 = vmatprep.subr.mxu0 0.0
    %2828 = vmatpush1.msra.mxu0 0.0
    %2829 = vmatprep.subr.mxu0 0.0
    %2830 = vmatpush1.msra.mxu0 0.0
    %2831 = vmatprep.subr.mxu0 0.0
    %2832 = vmatpush1.msra.mxu0 0.0
    %2833 = vmatprep.subr.mxu0 0.0
    %2834 = vmatpush1.msra.mxu0 0.0
    %2835 = vmatprep.subr.mxu0 0.0
    %2836 = vmatpush1.msra.mxu0 0.0
    %2837 = vmatprep.subr.mxu0 0.0
    %2838 = vmatpush1.msra.mxu0 0.0
    %2839 = vmatprep.subr.mxu0 0.0
    %2840 = vmatpush1.msra.mxu0 0.0
    %2841 = vmatprep.subr.mxu0 0.0
    %2842 = vmatpush1.msra.mxu0 0.0
    %2843 = vmatprep.subr.mxu0 0.0
    %2844 = vmatpush1.msra.mxu0 0.0
    %2845 = vmatprep.subr.mxu0 0.0
    %2846 = vmatpush1.msra.mxu0 0.0
    %2847 = vmatprep.subr.mxu0 0.0
    %2848 = vmatpush1.msra.mxu0 0.0
    %2849 = vmatprep.subr.mxu0 0.0
    %2850 = vmatpush1.msra.mxu0 0.0
    %2851 = vmatprep.subr.mxu0 0.0
    %2852 = vmatpush1.msra.mxu0 0.0
    %2853 = vmatprep.subr.mxu0 0.0
    %2854 = vmatpush1.msra.mxu0 0.0
    %2855 = vmatprep.subr.mxu0 0.0
    %2856 = vmatpush1.msra.mxu0 0.0
    %2857 = vmatprep.subr.mxu0 0.0
    %2858 = vmatpush1.msra.mxu0 0.0
    %2859 = vmatprep.mubr.f32.mxu0 0.0
    %2860 = vmatmul.mubr.f32.gmra.mrb[0].mxu0 %v2645
    %v2861 = vpop.f32.mrb[0].mxu0
    %v2862 = vadd.f32 0.0, %v2861
    %v2863 = vpop.f32.mrb[0].mxu0
    %2864 = vdwg.mxu0
    %v2866 = vrot.slane %v2794, 6
    %v2867 = vsel %vm102, %v2866, 0
    %2869 = vmatprep.subr.mxu0 0.0
    %2870 = vmatpush1.msra.mxu0 %v51
    %2871 = vmatprep.subr.mxu0 0.0
    %2872 = vmatpush1.msra.mxu0 %v262
    %2873 = vmatprep.subr.mxu0 0.0
    %2874 = vmatpush1.msra.mxu0 0.0
    %2875 = vmatprep.subr.mxu0 0.0
    %2876 = vmatpush1.msra.mxu0 0.0
    %2877 = vmatprep.subr.mxu0 0.0
    %2878 = vmatpush1.msra.mxu0 0.0
    %2879 = vmatprep.subr.mxu0 0.0
    %2880 = vmatpush1.msra.mxu0 0.0
    %2881 = vmatprep.subr.mxu0 0.0
    %2882 = vmatpush1.msra.mxu0 0.0
    %2883 = vmatprep.subr.mxu0 0.0
    %2884 = vmatpush1.msra.mxu0 0.0
    %2885 = vmatprep.subr.mxu0 0.0
    %2886 = vmatpush1.msra.mxu0 0.0
    %2887 = vmatprep.subr.mxu0 0.0
    %2888 = vmatpush1.msra.mxu0 0.0
    %2889 = vmatprep.subr.mxu0 0.0
    %2890 = vmatpush1.msra.mxu0 0.0
    %2891 = vmatprep.subr.mxu0 0.0
    %2892 = vmatpush1.msra.mxu0 0.0
    %2893 = vmatprep.subr.mxu0 0.0
    %2894 = vmatpush1.msra.mxu0 0.0
    %2895 = vmatprep.subr.mxu0 0.0
    %2896 = vmatpush1.msra.mxu0 0.0
    %2897 = vmatprep.subr.mxu0 0.0
    %2898 = vmatpush1.msra.mxu0 0.0
    %2899 = vmatprep.subr.mxu0 0.0
    %2900 = vmatpush1.msra.mxu0 0.0
    %2901 = vmatprep.subr.mxu0 0.0
    %2902 = vmatpush1.msra.mxu0 0.0
    %2903 = vmatprep.subr.mxu0 0.0
    %2904 = vmatpush1.msra.mxu0 0.0
    %2905 = vmatprep.subr.mxu0 0.0
    %2906 = vmatpush1.msra.mxu0 0.0
    %2907 = vmatprep.subr.mxu0 0.0
    %2908 = vmatpush1.msra.mxu0 0.0
    %2909 = vmatprep.subr.mxu0 0.0
    %2910 = vmatpush1.msra.mxu0 0.0
    %2911 = vmatprep.subr.mxu0 0.0
    %2912 = vmatpush1.msra.mxu0 0.0
    %2913 = vmatprep.subr.mxu0 0.0
    %2914 = vmatpush1.msra.mxu0 0.0
    %2915 = vmatprep.subr.mxu0 0.0
    %2916 = vmatpush1.msra.mxu0 0.0
    %2917 = vmatprep.subr.mxu0 0.0
    %2918 = vmatpush1.msra.mxu0 0.0
    %2919 = vmatprep.subr.mxu0 0.0
    %2920 = vmatpush1.msra.mxu0 0.0
    %2921 = vmatprep.subr.mxu0 0.0
    %2922 = vmatpush1.msra.mxu0 0.0
    %2923 = vmatprep.subr.mxu0 0.0
    %2924 = vmatpush1.msra.mxu0 0.0
    %2925 = vmatprep.subr.mxu0 0.0
    %2926 = vmatpush1.msra.mxu0 0.0
    %2927 = vmatprep.subr.mxu0 0.0
    %2928 = vmatpush1.msra.mxu0 0.0
    %2929 = vmatprep.subr.mxu0 0.0
    %2930 = vmatpush1.msra.mxu0 0.0
    %2931 = vmatprep.subr.mxu0 0.0
    %2932 = vmatpush1.msra.mxu0 0.0
    %2933 = vmatprep.mubr.f32.mxu0 0.0
    %2934 = vmatmul.mubr.f32.gmra.mrb[0].mxu0 %v2867
    %v2935 = vpop.f32.mrb[0].mxu0
    %v2936 = vadd.f32 %v2862, %v2935
    %v2937 = vpop.f32.mrb[0].mxu0
    %2938 = vdwg.mxu0
    %v2939 = vadd.f32 %v2936, %v338
    %v2940 = vtanh.pop %v2939
    %v2942 = vsel %vm102, %v2718, 0
    %2944 = vmatprep.subr.mxu0 0.0
    %2945 = vmatpush1.msra.mxu0 %v59
    %2946 = vmatprep.subr.mxu0 0.0
    %2947 = vmatpush1.msra.mxu0 %v346
    %2948 = vmatprep.subr.mxu0 0.0
    %2949 = vmatpush1.msra.mxu0 0.0
    %2950 = vmatprep.subr.mxu0 0.0
    %2951 = vmatpush1.msra.mxu0 0.0
    %2952 = vmatprep.subr.mxu0 0.0
    %2953 = vmatpush1.msra.mxu0 0.0
    %2954 = vmatprep.subr.mxu0 0.0
    %2955 = vmatpush1.msra.mxu0 0.0
    %2956 = vmatprep.subr.mxu0 0.0
    %2957 = vmatpush1.msra.mxu0 0.0
    %2958 = vmatprep.subr.mxu0 0.0
    %2959 = vmatpush1.msra.mxu0 0.0
    %2960 = vmatprep.subr.mxu0 0.0
    %2961 = vmatpush1.msra.mxu0 0.0
    %2962 = vmatprep.subr.mxu0 0.0
    %2963 = vmatpush1.msra.mxu0 0.0
    %2964 = vmatprep.subr.mxu0 0.0
    %2965 = vmatpush1.msra.mxu0 0.0
    %2966 = vmatprep.subr.mxu0 0.0
    %2967 = vmatpush1.msra.mxu0 0.0
    %2968 = vmatprep.subr.mxu0 0.0
    %2969 = vmatpush1.msra.mxu0 0.0
    %2970 = vmatprep.subr.mxu0 0.0
    %2971 = vmatpush1.msra.mxu0 0.0
    %2972 = vmatprep.subr.mxu0 0.0
    %2973 = vmatpush1.msra.mxu0 0.0
    %2974 = vmatprep.subr.mxu0 0.0
    %2975 = vmatpush1.msra.mxu0 0.0
    %2976 = vmatprep.subr.mxu0 0.0
    %2977 = vmatpush1.msra.mxu0 0.0
    %2978 = vmatprep.subr.mxu0 0.0
    %2979 = vmatpush1.msra.mxu0 0.0
    %2980 = vmatprep.subr.mxu0 0.0
    %2981 = vmatpush1.msra.mxu0 0.0
    %2982 = vmatprep.subr.mxu0 0.0
    %2983 = vmatpush1.msra.mxu0 0.0
    %2984 = vmatprep.subr.mxu0 0.0
    %2985 = vmatpush1.msra.mxu0 0.0
    %2986 = vmatprep.subr.mxu0 0.0
    %2987 = vmatpush1.msra.mxu0 0.0
    %2988 = vmatprep.subr.mxu0 0.0
    %2989 = vmatpush1.msra.mxu0 0.0
    %2990 = vmatprep.subr.mxu0 0.0
    %2991 = vmatpush1.msra.mxu0 0.0
    %2992 = vmatprep.subr.mxu0 0.0
    %2993 = vmatpush1.msra.mxu0 0.0
    %2994 = vmatprep.subr.mxu0 0.0
    %2995 = vmatpush1.msra.mxu0 0.0
    %2996 = vmatprep.subr.mxu0 0.0
    %2997 = vmatpush1.msra.mxu0 0.0
    %2998 = vmatprep.subr.mxu0 0.0
    %2999 = vmatpush1.msra.mxu0 0.0
    %3000 = vmatprep.subr.mxu0 0.0
    %3001 = vmatpush1.msra.mxu0 0.0
    %3002 = vmatprep.subr.mxu0 0.0
    %3003 = vmatpush1.msra.mxu0 0.0
    %3004 = vmatprep.subr.mxu0 0.0
    %3005 = vmatpush1.msra.mxu0 0.0
    %3006 = vmatprep.subr.mxu0 0.0
    %3007 = vmatpush1.msra.mxu0 0.0
    %3008 = vmatprep.mubr.f32.mxu0 0.0
    %3009 = vmatmul.mubr.f32.gmra.mrb[0].mxu0 %v2942
    %v3010 = vpop.f32.mrb[0].mxu0
    %v3011 = vadd.f32 0.0, %v3010
    %v3012 = vpop.f32.mrb[0].mxu0
    %3013 = vdwg.mxu0
    %v3015 = vsel %vm102, %v2940, 0
    %3017 = vmatprep.subr.mxu0 0.0
    %3018 = vmatpush1.msra.mxu0 %v54
    %3019 = vmatprep.subr.mxu0 0.0
    %3020 = vmatpush1.msra.mxu0 %v422
    %3021 = vmatprep.subr.mxu0 0.0
    %3022 = vmatpush1.msra.mxu0 0.0
    %3023 = vmatprep.subr.mxu0 0.0
    %3024 = vmatpush1.msra.mxu0 0.0
    %3025 = vmatprep.subr.mxu0 0.0
    %3026 = vmatpush1.msra.mxu0 0.0
    %3027 = vmatprep.subr.mxu0 0.0
    %3028 = vmatpush1.msra.mxu0 0.0
    %3029 = vmatprep.subr.mxu0 0.0
    %3030 = vmatpush1.msra.mxu0 0.0
    %3031 = vmatprep.subr.mxu0 0.0
    %3032 = vmatpush1.msra.mxu0 0.0
    %3033 = vmatprep.subr.mxu0 0.0
    %3034 = vmatpush1.msra.mxu0 0.0
    %3035 = vmatprep.subr.mxu0 0.0
    %3036 = vmatpush1.msra.mxu0 0.0
    %3037 = vmatprep.subr.mxu0 0.0
    %3038 = vmatpush1.msra.mxu0 0.0
    %3039 = vmatprep.subr.mxu0 0.0
    %3040 = vmatpush1.msra.mxu0 0.0
    %3041 = vmatprep.subr.mxu0 0.0
    %3042 = vmatpush1.msra.mxu0 0.0
    %3043 = vmatprep.subr.mxu0 0.0
    %3044 = vmatpush1.msra.mxu0 0.0
    %3045 = vmatprep.subr.mxu0 0.0
    %3046 = vmatpush1.msra.mxu0 0.0
    %3047 = vmatprep.subr.mxu0 0.0
    %3048 = vmatpush1.msra.mxu0 0.0
    %3049 = vmatprep.subr.mxu0 0.0
    %3050 = vmatpush1.msra.mxu0 0.0
    %3051 = vmatprep.subr.mxu0 0.0
    %3052 = vmatpush1.msra.mxu0 0.0
    %3053 = vmatprep.subr.mxu0 0.0
    %3054 = vmatpush1.msra.mxu0 0.0
    %3055 = vmatprep.subr.mxu0 0.0
    %3056 = vmatpush1.msra.mxu0 0.0
    %3057 = vmatprep.subr.mxu0 0.0
    %3058 = vmatpush1.msra.mxu0 0.0
    %3059 = vmatprep.subr.mxu0 0.0
    %3060 = vmatpush1.msra.mxu0 0.0
    %3061 = vmatprep.subr.mxu0 0.0
    %3062 = vmatpush1.msra.mxu0 0.0
    %3063 = vmatprep.subr.mxu0 0.0
    %3064 = vmatpush1.msra.mxu0 0.0
    %3065 = vmatprep.subr.mxu0 0.0
    %3066 = vmatpush1.msra.mxu0 0.0
    %3067 = vmatprep.subr.mxu0 0.0
    %3068 = vmatpush1.msra.mxu0 0.0
    %3069 = vmatprep.subr.mxu0 0.0
    %3070 = vmatpush1.msra.mxu0 0.0
    %3071 = vmatprep.subr.mxu0 0.0
    %3072 = vmatpush1.msra.mxu0 0.0
    %3073 = vmatprep.subr.mxu0 0.0
    %3074 = vmatpush1.msra.mxu0 0.0
    %3075 = vmatprep.subr.mxu0 0.0
    %3076 = vmatpush1.msra.mxu0 0.0
    %3077 = vmatprep.subr.mxu0 0.0
    %3078 = vmatpush1.msra.mxu0 0.0
    %3079 = vmatprep.subr.mxu0 0.0
    %3080 = vmatpush1.msra.mxu0 0.0
    %3081 = vmatprep.mubr.f32.mxu0 0.0
    %3082 = vmatmul.mubr.f32.gmra.mrb[0].mxu0 %v3015
    %v3083 = vpop.f32.mrb[0].mxu0
    %v3084 = vadd.f32 %v3011, %v3083
    %v3085 = vpop.f32.mrb[0].mxu0
    %3086 = vdwg.mxu0
    %v3087 = vadd.f32 %v3084, %v498
    %v3088 = vtanh.pop %v3087
    %3089 = vst.msk [vmem:[#allocation3 + $0xe] sm:$0x3] %vm502, %v3088
    %vm3090 = vcmask 121862
    %3091 = vst.msk [vmem:[#allocation2 - $0x6] sm:$0xc0] %vm3090, %v2794
    %3092 = vst.msk [vmem:[%s98] sm:$0x3] %vm502, %v2940
    %3093 = vst.msk [vmem:[%s100] sm:$0x3] %vm502, %v3088
    // Predicated region
    $region42: #{rnn_forward.1} parent=1 // pred_check
      %p3094 = pneg %p37
    $region43: #{rnn_forward.1} parent=1 // pred_check_branch
      %3096 = sbr.rel (%p3094) target = $region45
    $region44: #{rnn_forward.1} parent=1 // pred_region
      %v3097 = vld [vmem:[#allocation2] sm:$0x3]
      %v3098 = vld [vmem:[#allocation2 + $0x2] sm:$0x3]
      %v3099 = vld [vmem:[#allocation2 + $0x4] sm:$0x3]
      %3100 = vst.msk [vmem:[#allocation5] sm:$0x3] %vm502, %v3097
      %3101 = vst.msk [vmem:[#allocation5 + $0x2] sm:$0x3] %vm502, %v3098
      %3102 = vst.msk [vmem:[#allocation5 + $0x4] sm:$0x3] %vm502, %v3099
    $region45: #{rnn_forward.1} parent=1 // pred_fallthru
      _
    %v3103 = vld [vmem:[#allocation3] sm:$0xff]
    %v3104 = vld [vmem:[#allocation3 + $0x8] sm:$0xff]
    %v3106 = vlaneseq
    %v3107 = vshrl.u32 %v3106, 7
    %v3108 = vsub.s32 0, %v3107
    %v3109 = vrot.slane %v68, %v3108
    %v3112 = vsel %vm102, %v3103, 0
    %v3115 = vsel %vm102, %v3104, 0
    %v3118 = vsel %vm106, %v67, 0
    %3120 = vmatprep.subr.mxu0 0.0
    %3121 = vmatpush1.msra.mxu0 %v66
    %3122 = vmatprep.subr.mxu0 0.0
    %3123 = vmatpush1.msra.mxu0 %v3118
    %3124 = vmatprep.subr.mxu0 0.0
    %3125 = vmatpush1.msra.mxu0 0.0
    %3126 = vmatprep.subr.mxu0 0.0
    %3127 = vmatpush1.msra.mxu0 0.0
    %3128 = vmatprep.subr.mxu0 0.0
    %3129 = vmatpush1.msra.mxu0 0.0
    %3130 = vmatprep.subr.mxu0 0.0
    %3131 = vmatpush1.msra.mxu0 0.0
    %3132 = vmatprep.subr.mxu0 0.0
    %3133 = vmatpush1.msra.mxu0 0.0
    %3134 = vmatprep.subr.mxu0 0.0
    %3135 = vmatpush1.msra.mxu0 0.0
    %3136 = vmatprep.subr.mxu0 0.0
    %3137 = vmatpush1.msra.mxu0 0.0
    %3138 = vmatprep.subr.mxu0 0.0
    %3139 = vmatpush1.msra.mxu0 0.0
    %3140 = vmatprep.subr.mxu0 0.0
    %3141 = vmatpush1.msra.mxu0 0.0
    %3142 = vmatprep.subr.mxu0 0.0
    %3143 = vmatpush1.msra.mxu0 0.0
    %3144 = vmatprep.subr.mxu0 0.0
    %3145 = vmatpush1.msra.mxu0 0.0
    %3146 = vmatprep.subr.mxu0 0.0
    %3147 = vmatpush1.msra.mxu0 0.0
    %3148 = vmatprep.subr.mxu0 0.0
    %3149 = vmatpush1.msra.mxu0 0.0
    %3150 = vmatprep.subr.mxu0 0.0
    %3151 = vmatpush1.msra.mxu0 0.0
    %3152 = vmatprep.subr.mxu0 0.0
    %3153 = vmatpush1.msra.mxu0 0.0
    %3154 = vmatprep.subr.mxu0 0.0
    %3155 = vmatpush1.msra.mxu0 0.0
    %3156 = vmatprep.subr.mxu0 0.0
    %3157 = vmatpush1.msra.mxu0 0.0
    %3158 = vmatprep.subr.mxu0 0.0
    %3159 = vmatpush1.msra.mxu0 0.0
    %3160 = vmatprep.subr.mxu0 0.0
    %3161 = vmatpush1.msra.mxu0 0.0
    %3162 = vmatprep.subr.mxu0 0.0
    %3163 = vmatpush1.msra.mxu0 0.0
    %3164 = vmatprep.subr.mxu0 0.0
    %3165 = vmatpush1.msra.mxu0 0.0
    %3166 = vmatprep.subr.mxu0 0.0
    %3167 = vmatpush1.msra.mxu0 0.0
    %3168 = vmatprep.subr.mxu0 0.0
    %3169 = vmatpush1.msra.mxu0 0.0
    %3170 = vmatprep.subr.mxu0 0.0
    %3171 = vmatpush1.msra.mxu0 0.0
    %3172 = vmatprep.subr.mxu0 0.0
    %3173 = vmatpush1.msra.mxu0 0.0
    %3174 = vmatprep.subr.mxu0 0.0
    %3175 = vmatpush1.msra.mxu0 0.0
    %3176 = vmatprep.subr.mxu0 0.0
    %3177 = vmatpush1.msra.mxu0 0.0
    %3178 = vmatprep.subr.mxu0 0.0
    %3179 = vmatpush1.msra.mxu0 0.0
    %3180 = vmatprep.subr.mxu0 0.0
    %3181 = vmatpush1.msra.mxu0 0.0
    %3182 = vmatprep.subr.mxu0 0.0
    %3183 = vmatpush1.msra.mxu0 0.0
    %3184 = vmatprep.mubr.f32.mxu0 0.0
    %3185 = vmatmul.mubr.f32.gmra.mrb[0].mxu0 %v3112
    %v3186 = vpop.f32.mrb[0].mxu0
    %v3187 = vadd.f32 %v3109, %v3186
    %v3188 = vpop.f32.mrb[0].mxu0
    %3189 = vmatprep.mubr.f32.mxu0 0.0
    %3190 = vmatmul.mubr.f32.gmra.mrb[0].mxu0 %v3115
    %v3191 = vpop.f32.mrb[0].mxu0
    %v3192 = vadd.f32 %v3109, %v3191
    %v3193 = vpop.f32.mrb[0].mxu0
    %3194 = vdwg.mxu0
    %vm3195 = vcmask 7168
    %3196 = vst.msk [vmem:[%s9] sm:$0xff] %vm3195, %v3187
    %3197 = vst.msk [vmem:[%s9 + $0x8] sm:$0xff] %vm3195, %v3192
    // Predicated region
    $region46: #{rnn_forward.1} parent=1 // pred_check
      _
    $region47: #{rnn_forward.1} parent=1 // pred_check_branch
      %3199 = sbr.rel (0) target = $region49
    $region48: #{rnn_forward.1} parent=1 // pred_region
      _
    $region49: #{rnn_forward.1} parent=1 // pred_fallthru
      _
    // Predicated region
    $region50: #{rnn_forward.1} parent=1 // pred_check
      _
    $region51: #{rnn_forward.1} parent=1 // pred_check_branch
      %3201 = sbr.rel (0) target = $region53
    $region52: #{rnn_forward.1} parent=1 // pred_region
      %s3203 = ssub.s32 96, 96
      %3204 = vsyncadd [#allocation6], %s3203
      %s3205 = sshll.u32 [#allocation5], 4
      %s3206 = int_to_ptr.vmem [resolvable:$true] %s3205
      %3211 = dma.vmem_to_hbm [thread:$0]  %s3206, 96, %s10, [#allocation6], 32, 32, 2
    $region53: #{rnn_forward.1} parent=1 // pred_fallthru
      _
    // Predicated region
    $region54: #{rnn_forward.1} parent=1 // pred_check
      _
    $region55: #{rnn_forward.1} parent=1 // pred_check_branch
      %3213 = sbr.rel (0) target = $region57
    $region56: #{rnn_forward.1} parent=1 // pred_region
      _
    $region57: #{rnn_forward.1} parent=1 // pred_fallthru
      _
    // Predicated region
    $region58: #{rnn_forward.1} parent=1 // pred_check
      _
    $region59: #{rnn_forward.1} parent=1 // pred_check_branch
      %3215 = sbr.rel (0) target = $region61
    $region60: #{rnn_forward.1} parent=1 // pred_region
      %3216 = dma.done [#allocation6], 96
    $region61: #{rnn_forward.1} parent=1 // pred_fallthru
      _
    %3217 = vsyncpa [#allocation6], 1

</llo_original>
